<compile_context>
chip_gen: v5e
topology: v5e:2x2
jax: 0.10.0
libtpu: 0.0.40
codegen_flags: <defaults>
</compile_context>

<pallas_src>
import math
import jax
import jax.numpy as jnp
from jax.experimental import pallas as pl
from jax.experimental.pallas import tpu as pltpu

# ----------------------------- config ---------------------------------------
IMG_SIZE = 16
PATCH_SIZE = 8
IN_CHANS = 3
EMBED_DIM = 128                       # multiple of head_dim=64 and 128 lanes
DEPTH = 2
HEAD_DIM = 64
NUM_HEADS = EMBED_DIM // HEAD_DIM     # 2
MLP_RATIO = 4
HIDDEN_DIM = 128                      # MLP3Layer hidden
NUM_CLASSES = 200
BATCH = 2

NUM_PATCHES = (IMG_SIZE // PATCH_SIZE) ** 2   # 4
SEQ = 1 + NUM_PATCHES                         # 5
CPP = IN_CHANS * PATCH_SIZE * PATCH_SIZE      # 192
CPP_PAD = 256                                 # lane-dense patch dim
EPS = 1e-5

MAX_ROTATION = 360.0
MAX_SHEAR_ANGLE = 15.0
MAX_STD_GAUSSIAN_NOISE = 0.5
MAX_TRANSLATION_AFFINE = 0.1

# packed head-output layout: head(200), transform_type(4), sev_noise(1),
# sev_rotation(1), sev_affine(1), rotation(1), noise(1), affine(4)
HEAD_OUT_DIMS = (NUM_CLASSES, 4, 1, 1, 1, 1, 1, 4)
_offs, _acc = [], 0
for _d in HEAD_OUT_DIMS:
    _offs.append(_acc)
    _acc += _d
HEAD_OFFSETS = tuple(_offs)
HEAD_TOTAL = _acc                     # 213
HEAD_PAD = 256                        # lane-dense packed output width
NUM_MLP_HEADS = len(HEAD_OUT_DIMS)    # 8


def _vmem_specs(n):
    return [pl.BlockSpec(memory_space=pltpu.MemorySpace.VMEM) for _ in range(n)]


# ----------------------------- fused kernel ----------------------------------
def _layernorm(x, gamma):
    mu = jnp.mean(x, axis=-1, keepdims=True)
    xc = x - mu
    var = jnp.mean(xc * xc, axis=-1, keepdims=True)
    return xc * jax.lax.rsqrt(var + EPS) * gamma


def fused_forward_kernel(p_ref, base_ref, mask_ref, pw_ref,
                         wq_ref, wk_ref, wv_ref, wo_ref,
                         g1_ref, g2_ref, w1_ref, w2_ref, gn_ref,
                         hw1_ref, hb1_ref, hw2_ref, hb2_ref, hw3_ref, hb3_ref,
                         o_ref):
    f32 = jnp.float32
    bs = p_ref.shape[0]
    b = bs // SEQ
    scale = 1.0 / math.sqrt(HEAD_DIM)

    # --- patch embed + cls token + positional embedding ---
    # base already contains: row b*SEQ = cls_token + pos[0];
    #                        rows b*SEQ+1+j = pos[1+j] + patch_bias.
    # cls rows of p_ref are zero, so the matmul contributes nothing there.
    x = jnp.dot(p_ref[...], pw_ref[...], preferred_element_type=f32) + base_ref[...]
    mask = mask_ref[...]                                   # (BS, BS) block mask

    # --- transformer trunk (pre-norm, bias-free) ---
    for l in range(DEPTH):
        h = _layernorm(x, g1_ref[l])
        attn = jnp.zeros_like(x)
        for hh in range(NUM_HEADS):
            q = jnp.dot(h, wq_ref[l, hh], preferred_element_type=f32)   # (BS, 64)
            k = jnp.dot(h, wk_ref[l, hh], preferred_element_type=f32)
            v = jnp.dot(h, wv_ref[l, hh], preferred_element_type=f32)
            s = jax.lax.dot_general(q, k, (((1,), (1,)), ((), ())),
                                    preferred_element_type=f32)
            s = s * scale + mask
            s = s - jnp.max(s, axis=-1, keepdims=True)
            p = jnp.exp(s)
            p = p / jnp.sum(p, axis=-1, keepdims=True)
            o = jnp.dot(p, v, preferred_element_type=f32)               # (BS, 64)
            attn = attn + jnp.dot(o, wo_ref[l, hh], preferred_element_type=f32)
        x = x + attn

        h2 = _layernorm(x, g2_ref[l])
        m = jnp.dot(h2, w1_ref[l], preferred_element_type=f32)          # (BS, 4D)
        m = jax.nn.gelu(m)
        m = jnp.dot(m, w2_ref[l], preferred_element_type=f32)           # (BS, D)
        x = x + m

    # --- final LayerNorm on cls tokens (rows b*SEQ) ---
    cls = jnp.concatenate([x[i * SEQ:i * SEQ + 1, :] for i in range(b)], axis=0)
    cls = _layernorm(cls, gn_ref[...])                                  # (B, D)

    # --- 8 fused MLP3 heads, outputs packed into one (B, 256) slab ---
    out = jnp.zeros((b, HEAD_PAD), f32) + hb3_ref[...]
    for i in range(NUM_MLP_HEADS):
        t = jnp.dot(cls, hw1_ref[i], preferred_element_type=f32) + hb1_ref[i]
        t = jnp.maximum(t, 0.0)
        t = jnp.dot(t, hw2_ref[i], preferred_element_type=f32) + hb2_ref[i]
        t = jnp.maximum(t, 0.0)
        out = out + jnp.dot(t, hw3_ref[i], preferred_element_type=f32)
    o_ref[...] = out


def fused_forward(pseq, base, mask, params):
    bs = pseq.shape[0]
    b = bs // SEQ
    args = (pseq, base, mask, params["patch_w"],
            params["wq"], params["wk"], params["wv"], params["wo"],
            params["g1"], params["g2"], params["w1"], params["w2"],
            params["norm_g"],
            params["hw1"], params["hb1"], params["hw2"], params["hb2"],
            params["hw3"], params["hb3"])
    return pl.pallas_call(
        fused_forward_kernel,
        out_shape=jax.ShapeDtypeStruct((b, HEAD_PAD), jnp.float32),
        in_specs=_vmem_specs(len(args)),
        out_specs=pl.BlockSpec(memory_space=pltpu.MemorySpace.VMEM),
    )(*args)


# ----------------------------- parameters ------------------------------------
def init_params(key):
    params = {}
    ks = iter(jax.random.split(key, 256))
    std = 0.02

    # patch embed (linear patchify), zero-padded to lane-dense CPP_PAD rows
    pw = jax.random.normal(next(ks), (CPP, EMBED_DIM), jnp.float32) * std
    params["patch_w"] = jnp.zeros((CPP_PAD, EMBED_DIM), jnp.float32).at[:CPP].set(pw)
    params["patch_b"] = jnp.zeros((1, EMBED_DIM), jnp.float32)
    params["cls_token"] = jax.random.normal(next(ks), (1, 1, EMBED_DIM), jnp.float32) * std
    params["pos_embed"] = jax.random.normal(next(ks), (1, SEQ, EMBED_DIM), jnp.float32) * std

    # transformer trunk: stack per-block weights along a leading depth axis,
    # pre-split attention weights per head (avoids 64-lane slices in-kernel).
    wq_l, wk_l, wv_l, wo_l, w1_l, w2_l = [], [], [], [], [], []
    for _ in range(DEPTH):
        wqkv = jax.random.normal(next(ks), (EMBED_DIM, 3 * EMBED_DIM), jnp.float32) * std
        wq = wqkv[:, 0 * EMBED_DIM:1 * EMBED_DIM]
        wk = wqkv[:, 1 * EMBED_DIM:2 * EMBED_DIM]
        wv = wqkv[:, 2 * EMBED_DIM:3 * EMBED_DIM]
        wq_l.append(wq.reshape(EMBED_DIM, NUM_HEADS, HEAD_DIM).transpose(1, 0, 2))
        wk_l.append(wk.reshape(EMBED_DIM, NUM_HEADS, HEAD_DIM).transpose(1, 0, 2))
        wv_l.append(wv.reshape(EMBED_DIM, NUM_HEADS, HEAD_DIM).transpose(1, 0, 2))
        wo = jax.random.normal(next(ks), (EMBED_DIM, EMBED_DIM), jnp.float32) * std
        wo_l.append(wo.reshape(NUM_HEADS, HEAD_DIM, EMBED_DIM))
        w1_l.append(jax.random.normal(next(ks), (EMBED_DIM, MLP_RATIO * EMBED_DIM),
                                      jnp.float32) * std)
        w2_l.append(jax.random.normal(next(ks), (MLP_RATIO * EMBED_DIM, EMBED_DIM),
                                      jnp.float32) * std)
    params["wq"] = jnp.stack(wq_l)                    # (depth, nh, D, 64)
    params["wk"] = jnp.stack(wk_l)
    params["wv"] = jnp.stack(wv_l)
    params["wo"] = jnp.stack(wo_l)                    # (depth, nh, 64, D)
    params["g1"] = jnp.ones((DEPTH, 1, EMBED_DIM), jnp.float32)
    params["g2"] = jnp.ones((DEPTH, 1, EMBED_DIM), jnp.float32)
    params["w1"] = jnp.stack(w1_l)                    # (depth, D, 4D)
    params["w2"] = jnp.stack(w2_l)                    # (depth, 4D, D)
    params["norm_g"] = jnp.ones((1, EMBED_DIM), jnp.float32)

    # 8 MLP3 heads packed: third-layer outputs placed at disjoint column
    # offsets of a lane-dense (HIDDEN_DIM, HEAD_PAD) weight.
    hw1, hw2, hw3 = [], [], []
    hb3 = jnp.zeros((1, HEAD_PAD), jnp.float32)
    for out_dim, off in zip(HEAD_OUT_DIMS, HEAD_OFFSETS):
        w1 = jax.random.normal(next(ks), (EMBED_DIM, HIDDEN_DIM), jnp.float32) * std
        w2 = jax.random.normal(next(ks), (HIDDEN_DIM, HIDDEN_DIM), jnp.float32) * std
        w3 = jax.random.normal(next(ks), (HIDDEN_DIM, out_dim), jnp.float32) * std
        hw1.append(w1)
        hw2.append(w2)
        hw3.append(jnp.zeros((HIDDEN_DIM, HEAD_PAD), jnp.float32)
                   .at[:, off:off + out_dim].set(w3))
        # biases are zero-initialized (hb3 stays zero)
    params["hw1"] = jnp.stack(hw1)                                    # (8, D, H)
    params["hb1"] = jnp.zeros((NUM_MLP_HEADS, 1, HIDDEN_DIM), jnp.float32)
    params["hw2"] = jnp.stack(hw2)                                    # (8, H, H)
    params["hb2"] = jnp.zeros((NUM_MLP_HEADS, 1, HIDDEN_DIM), jnp.float32)
    params["hw3"] = jnp.stack(hw3)                                    # (8, H, 256)
    params["hb3"] = hb3                                               # (1, 256)
    return params


# ----------------------------- forward ---------------------------------------
def extract_patches(x):
    # x: (B, C, H, W) NCHW  ->  (B, num_patches, C*p*p), same ordering as
    # Conv2d(kernel=stride=p) followed by flatten(2).transpose(1, 2).
    b, c, hgt, wid = x.shape
    hp, wp = hgt // PATCH_SIZE, wid // PATCH_SIZE
    x = x.reshape(b, c, hp, PATCH_SIZE, wp, PATCH_SIZE)
    x = x.transpose(0, 2, 4, 1, 3, 5)                       # (B, Hp, Wp, C, p, p)
    return x.reshape(b, hp * wp, c * PATCH_SIZE * PATCH_SIZE)


def forward(params, x):
    b = x.shape[0]

    # --- glue prep (cheap, fused by XLA): pack tokens for the single kernel ---
    patches = extract_patches(x).astype(jnp.float32)        # (B, NP, CPP)
    pseq = jnp.concatenate(
        [jnp.zeros((b, 1, CPP), jnp.float32), patches], axis=1)   # cls slot = 0
    pseq = pseq.reshape(b * SEQ, CPP)
    pseq = jnp.pad(pseq, ((0, 0), (0, CPP_PAD - CPP)))             # (B*S, 256)

    # base rows: cls row = cls_token + pos[0]; patch rows = pos[1+j] + patch_b
    base_one = jnp.concatenate(
        [params["cls_token"][0] + params["pos_embed"][0, 0:1],
         params["pos_embed"][0, 1:] + params["patch_b"]], axis=0)   # (S, D)
    base = jnp.tile(base_one, (b, 1))                               # (B*S, D)

    # additive attention mask keeping attention within each batch element
    ids = jnp.arange(b * SEQ, dtype=jnp.int32) // SEQ
    mask = jnp.where(ids[:, None] == ids[None, :], 0.0, -1e30).astype(jnp.float32)

    # --- one fused Pallas kernel for the whole network ---
    packed = fused_forward(pseq, base, mask, params)                # (B, 256)

    # --- unpack head outputs + output nonlinearities (tiny elementwise glue) ---
    def sl(i):
        off = HEAD_OFFSETS[i]
        return packed[:, off:off + HEAD_OUT_DIMS[i]]

    logits = sl(0)
    affine = sl(7)
    aux = {
        "transform_type_logits": sl(1),
        "severity_noise": jax.nn.sigmoid(sl(2)),
        "severity_rotation": jax.nn.sigmoid(sl(3)),
        "severity_affine": jax.nn.sigmoid(sl(4)),
        "rotation_angle": jnp.tanh(sl(5)) * MAX_ROTATION,
        "noise_std": jax.nn.sigmoid(sl(6)) * MAX_STD_GAUSSIAN_NOISE,
        "translate_x": jnp.tanh(affine[:, 0:1]) * MAX_TRANSLATION_AFFINE,
        "translate_y": jnp.tanh(affine[:, 1:2]) * MAX_TRANSLATION_AFFINE,
        "shear_x": jnp.tanh(affine[:, 2:3]) * MAX_SHEAR_ANGLE,
        "shear_y": jnp.tanh(affine[:, 3:4]) * MAX_SHEAR_ANGLE,
    }
    return logits, aux


# ----------------------------- main -------------------------------------------
if __name__ == "__main__":
    key = jax.random.PRNGKey(0)
    pkey, xkey = jax.random.split(key)
    params = init_params(pkey)
    x = jax.random.normal(xkey, (BATCH, IN_CHANS, IMG_SIZE, IMG_SIZE), jnp.float32)

    logits, aux = jax.jit(forward)(params, x)
    jax.block_until_ready((logits, aux))

    assert logits.shape == (BATCH, NUM_CLASSES)
    assert aux["transform_type_logits"].shape == (BATCH, 4)
    assert aux["severity_noise"].shape == (BATCH, 1)
    assert aux["rotation_angle"].shape == (BATCH, 1)
    assert aux["translate_x"].shape == (BATCH, 1)
    assert aux["shear_y"].shape == (BATCH, 1)
    print("KERNEL_OK")
</pallas_src>

<mosaic_0001>
module attributes {stable_mosaic.version = 11 : i64} {
  func.func @fused_forward_kernel(%arg0: memref<10x256xf32, #tpu.memory_space<vmem>>, %arg1: memref<10x128xf32, #tpu.memory_space<vmem>>, %arg2: memref<10x10xf32, #tpu.memory_space<vmem>>, %arg3: memref<256x128xf32, #tpu.memory_space<vmem>>, %arg4: memref<2x2x128x64xf32, #tpu.memory_space<vmem>>, %arg5: memref<2x2x128x64xf32, #tpu.memory_space<vmem>>, %arg6: memref<2x2x128x64xf32, #tpu.memory_space<vmem>>, %arg7: memref<2x2x64x128xf32, #tpu.memory_space<vmem>>, %arg8: memref<2x1x128xf32, #tpu.memory_space<vmem>>, %arg9: memref<2x1x128xf32, #tpu.memory_space<vmem>>, %arg10: memref<2x128x512xf32, #tpu.memory_space<vmem>>, %arg11: memref<2x512x128xf32, #tpu.memory_space<vmem>>, %arg12: memref<1x128xf32, #tpu.memory_space<vmem>>, %arg13: memref<8x128x128xf32, #tpu.memory_space<vmem>>, %arg14: memref<8x1x128xf32, #tpu.memory_space<vmem>>, %arg15: memref<8x128x128xf32, #tpu.memory_space<vmem>>, %arg16: memref<8x1x128xf32, #tpu.memory_space<vmem>>, %arg17: memref<8x128x256xf32, #tpu.memory_space<vmem>>, %arg18: memref<1x256xf32, #tpu.memory_space<vmem>>, %arg19: memref<2x256xf32, #tpu.memory_space<vmem>>) attributes {dimension_semantics = [], scalar_prefetch = 0 : i64, scratch_operands = 0 : i64, tpu.core_type = #tpu.core_type<tc>} {
    %c0 = arith.constant 0 : index
    %c0_0 = arith.constant 0 : index
    %0 = vector.load %arg0[%c0, %c0_0] : memref<10x256xf32, #tpu.memory_space<vmem>>, vector<10x256xf32>
    %c0_1 = arith.constant 0 : index
    %c0_2 = arith.constant 0 : index
    %1 = vector.load %arg3[%c0_1, %c0_2] : memref<256x128xf32, #tpu.memory_space<vmem>>, vector<256x128xf32>
    %cst = arith.constant dense<0.000000e+00> : vector<10x128xf32>
    %2 = tpu.matmul %0, %1, %cst {dimension_numbers = #tpu.dot_dimension_numbers<[1], [0], [0], [1], [0, 0, 1, 1], [], []>} : vector<10x256xf32>, vector<256x128xf32>, vector<10x128xf32> -> vector<10x128xf32>
    %c0_3 = arith.constant 0 : index
    %c0_4 = arith.constant 0 : index
    %3 = vector.load %arg1[%c0_3, %c0_4] : memref<10x128xf32, #tpu.memory_space<vmem>>, vector<10x128xf32>
    %4 = arith.addf %2, %3 : vector<10x128xf32>
    %c0_5 = arith.constant 0 : index
    %c0_6 = arith.constant 0 : index
    %5 = vector.load %arg2[%c0_5, %c0_6] : memref<10x10xf32, #tpu.memory_space<vmem>>, vector<10x10xf32>
    %c0_7 = arith.constant 0 : index
    %c0_8 = arith.constant 0 : index
    %c0_9 = arith.constant 0 : index
    %6 = vector.load %arg8[%c0_7, %c0_8, %c0_9] : memref<2x1x128xf32, #tpu.memory_space<vmem>>, vector<1x1x128xf32>
    %7 = vector.shape_cast %6 : vector<1x1x128xf32> to vector<1x128xf32>
    %cst_10 = arith.constant dense<0.000000e+00> : vector<10xf32>
    %8 = vector.multi_reduction <add>, %4, %cst_10 [1] : vector<10x128xf32> to vector<10xf32>
    %9 = vector.shape_cast %8 : vector<10xf32> to vector<10x1xf32>
    %cst_11 = arith.constant 1.280000e+02 : f32
    %10 = vector.broadcast %cst_11 : f32 to vector<10x1xf32>
    %11 = arith.divf %9, %10 : vector<10x1xf32>
    %12 = vector.broadcast %11 : vector<10x1xf32> to vector<10x128xf32>
    %13 = arith.subf %4, %12 : vector<10x128xf32>
    %14 = arith.mulf %13, %13 : vector<10x128xf32>
    %cst_12 = arith.constant dense<0.000000e+00> : vector<10xf32>
    %15 = vector.multi_reduction <add>, %14, %cst_12 [1] : vector<10x128xf32> to vector<10xf32>
    %16 = vector.shape_cast %15 : vector<10xf32> to vector<10x1xf32>
    %cst_13 = arith.constant 1.280000e+02 : f32
    %17 = vector.broadcast %cst_13 : f32 to vector<10x1xf32>
    %18 = arith.divf %16, %17 : vector<10x1xf32>
    %cst_14 = arith.constant 9.99999974E-6 : f32
    %19 = vector.broadcast %cst_14 : f32 to vector<10x1xf32>
    %20 = arith.addf %18, %19 : vector<10x1xf32>
    %21 = math.rsqrt %20 : vector<10x1xf32>
    %22 = vector.broadcast %21 : vector<10x1xf32> to vector<10x128xf32>
    %23 = arith.mulf %13, %22 : vector<10x128xf32>
    %24 = vector.broadcast %7 : vector<1x128xf32> to vector<10x128xf32>
    %25 = arith.mulf %23, %24 : vector<10x128xf32>
    %cst_15 = arith.constant 0.000000e+00 : f32
    %26 = vector.broadcast %cst_15 : f32 to vector<10x128xf32>
    %c0_16 = arith.constant 0 : index
    %c0_17 = arith.constant 0 : index
    %c0_18 = arith.constant 0 : index
    %c0_19 = arith.constant 0 : index
    %27 = vector.load %arg4[%c0_16, %c0_17, %c0_18, %c0_19] : memref<2x2x128x64xf32, #tpu.memory_space<vmem>>, vector<1x1x128x64xf32>
    %28 = vector.shape_cast %27 : vector<1x1x128x64xf32> to vector<128x64xf32>
    %cst_20 = arith.constant dense<0.000000e+00> : vector<10x64xf32>
    %29 = tpu.matmul %25, %28, %cst_20 {dimension_numbers = #tpu.dot_dimension_numbers<[1], [0], [0], [1], [0, 0, 1, 1], [], []>} : vector<10x128xf32>, vector<128x64xf32>, vector<10x64xf32> -> vector<10x64xf32>
    %c0_21 = arith.constant 0 : index
    %c0_22 = arith.constant 0 : index
    %c0_23 = arith.constant 0 : index
    %c0_24 = arith.constant 0 : index
    %30 = vector.load %arg5[%c0_21, %c0_22, %c0_23, %c0_24] : memref<2x2x128x64xf32, #tpu.memory_space<vmem>>, vector<1x1x128x64xf32>
    %31 = vector.shape_cast %30 : vector<1x1x128x64xf32> to vector<128x64xf32>
    %cst_25 = arith.constant dense<0.000000e+00> : vector<10x64xf32>
    %32 = tpu.matmul %25, %31, %cst_25 {dimension_numbers = #tpu.dot_dimension_numbers<[1], [0], [0], [1], [0, 0, 1, 1], [], []>} : vector<10x128xf32>, vector<128x64xf32>, vector<10x64xf32> -> vector<10x64xf32>
    %c0_26 = arith.constant 0 : index
    %c0_27 = arith.constant 0 : index
    %c0_28 = arith.constant 0 : index
    %c0_29 = arith.constant 0 : index
    %33 = vector.load %arg6[%c0_26, %c0_27, %c0_28, %c0_29] : memref<2x2x128x64xf32, #tpu.memory_space<vmem>>, vector<1x1x128x64xf32>
    %34 = vector.shape_cast %33 : vector<1x1x128x64xf32> to vector<128x64xf32>
    %cst_30 = arith.constant dense<0.000000e+00> : vector<10x64xf32>
    %35 = tpu.matmul %25, %34, %cst_30 {dimension_numbers = #tpu.dot_dimension_numbers<[1], [0], [0], [1], [0, 0, 1, 1], [], []>} : vector<10x128xf32>, vector<128x64xf32>, vector<10x64xf32> -> vector<10x64xf32>
    %cst_31 = arith.constant dense<0.000000e+00> : vector<10x10xf32>
    %36 = tpu.matmul %29, %32, %cst_31 {dimension_numbers = #tpu.dot_dimension_numbers<[1], [1], [0], [0], [0, 0, 1, 0], [], []>} : vector<10x64xf32>, vector<10x64xf32>, vector<10x10xf32> -> vector<10x10xf32>
    %cst_32 = arith.constant 1.250000e-01 : f32
    %37 = vector.broadcast %cst_32 : f32 to vector<10x10xf32>
    %38 = arith.mulf %36, %37 : vector<10x10xf32>
    %39 = arith.addf %38, %5 : vector<10x10xf32>
    %cst_33 = arith.constant dense<0xFF800000> : vector<10xf32>
    %40 = vector.multi_reduction <maximumf>, %39, %cst_33 [1] : vector<10x10xf32> to vector<10xf32>
    %41 = vector.shape_cast %40 : vector<10xf32> to vector<10x1xf32>
    %42 = vector.broadcast %41 : vector<10x1xf32> to vector<10x10xf32>
    %43 = arith.subf %39, %42 : vector<10x10xf32>
    %44 = math.exp %43 : vector<10x10xf32>
    %cst_34 = arith.constant dense<0.000000e+00> : vector<10xf32>
    %45 = vector.multi_reduction <add>, %44, %cst_34 [1] : vector<10x10xf32> to vector<10xf32>
    %46 = vector.shape_cast %45 : vector<10xf32> to vector<10x1xf32>
    %47 = vector.broadcast %46 : vector<10x1xf32> to vector<10x10xf32>
    %48 = arith.divf %44, %47 : vector<10x10xf32>
    %cst_35 = arith.constant dense<0.000000e+00> : vector<10x64xf32>
    %49 = tpu.matmul %48, %35, %cst_35 {dimension_numbers = #tpu.dot_dimension_numbers<[1], [0], [0], [1], [0, 0, 1, 1], [], []>} : vector<10x10xf32>, vector<10x64xf32>, vector<10x64xf32> -> vector<10x64xf32>
    %c0_36 = arith.constant 0 : index
    %c0_37 = arith.constant 0 : index
    %c0_38 = arith.constant 0 : index
    %c0_39 = arith.constant 0 : index
    %50 = vector.load %arg7[%c0_36, %c0_37, %c0_38, %c0_39] : memref<2x2x64x128xf32, #tpu.memory_space<vmem>>, vector<1x1x64x128xf32>
    %51 = vector.shape_cast %50 : vector<1x1x64x128xf32> to vector<64x128xf32>
    %cst_40 = arith.constant dense<0.000000e+00> : vector<10x128xf32>
    %52 = tpu.matmul %49, %51, %cst_40 {dimension_numbers = #tpu.dot_dimension_numbers<[1], [0], [0], [1], [0, 0, 1, 1], [], []>} : vector<10x64xf32>, vector<64x128xf32>, vector<10x128xf32> -> vector<10x128xf32>
    %53 = arith.addf %26, %52 : vector<10x128xf32>
    %c0_41 = arith.constant 0 : index
    %c1 = arith.constant 1 : index
    %c0_42 = arith.constant 0 : index
    %c0_43 = arith.constant 0 : index
    %54 = vector.load %arg4[%c0_41, %c1, %c0_42, %c0_43] : memref<2x2x128x64xf32, #tpu.memory_space<vmem>>, vector<1x1x128x64xf32>
    %55 = vector.shape_cast %54 : vector<1x1x128x64xf32> to vector<128x64xf32>
    %cst_44 = arith.constant dense<0.000000e+00> : vector<10x64xf32>
    %56 = tpu.matmul %25, %55, %cst_44 {dimension_numbers = #tpu.dot_dimension_numbers<[1], [0], [0], [1], [0, 0, 1, 1], [], []>} : vector<10x128xf32>, vector<128x64xf32>, vector<10x64xf32> -> vector<10x64xf32>
    %c0_45 = arith.constant 0 : index
    %c1_46 = arith.constant 1 : index
    %c0_47 = arith.constant 0 : index
    %c0_48 = arith.constant 0 : index
    %57 = vector.load %arg5[%c0_45, %c1_46, %c0_47, %c0_48] : memref<2x2x128x64xf32, #tpu.memory_space<vmem>>, vector<1x1x128x64xf32>
    %58 = vector.shape_cast %57 : vector<1x1x128x64xf32> to vector<128x64xf32>
    %cst_49 = arith.constant dense<0.000000e+00> : vector<10x64xf32>
    %59 = tpu.matmul %25, %58, %cst_49 {dimension_numbers = #tpu.dot_dimension_numbers<[1], [0], [0], [1], [0, 0, 1, 1], [], []>} : vector<10x128xf32>, vector<128x64xf32>, vector<10x64xf32> -> vector<10x64xf32>
    %c0_50 = arith.constant 0 : index
    %c1_51 = arith.constant 1 : index
    %c0_52 = arith.constant 0 : index
    %c0_53 = arith.constant 0 : index
    %60 = vector.load %arg6[%c0_50, %c1_51, %c0_52, %c0_53] : memref<2x2x128x64xf32, #tpu.memory_space<vmem>>, vector<1x1x128x64xf32>
    %61 = vector.shape_cast %60 : vector<1x1x128x64xf32> to vector<128x64xf32>
    %cst_54 = arith.constant dense<0.000000e+00> : vector<10x64xf32>
    %62 = tpu.matmul %25, %61, %cst_54 {dimension_numbers = #tpu.dot_dimension_numbers<[1], [0], [0], [1], [0, 0, 1, 1], [], []>} : vector<10x128xf32>, vector<128x64xf32>, vector<10x64xf32> -> vector<10x64xf32>
    %cst_55 = arith.constant dense<0.000000e+00> : vector<10x10xf32>
    %63 = tpu.matmul %56, %59, %cst_55 {dimension_numbers = #tpu.dot_dimension_numbers<[1], [1], [0], [0], [0, 0, 1, 0], [], []>} : vector<10x64xf32>, vector<10x64xf32>, vector<10x10xf32> -> vector<10x10xf32>
    %cst_56 = arith.constant 1.250000e-01 : f32
    %64 = vector.broadcast %cst_56 : f32 to vector<10x10xf32>
    %65 = arith.mulf %63, %64 : vector<10x10xf32>
    %66 = arith.addf %65, %5 : vector<10x10xf32>
    %cst_57 = arith.constant dense<0xFF800000> : vector<10xf32>
    %67 = vector.multi_reduction <maximumf>, %66, %cst_57 [1] : vector<10x10xf32> to vector<10xf32>
    %68 = vector.shape_cast %67 : vector<10xf32> to vector<10x1xf32>
    %69 = vector.broadcast %68 : vector<10x1xf32> to vector<10x10xf32>
    %70 = arith.subf %66, %69 : vector<10x10xf32>
    %71 = math.exp %70 : vector<10x10xf32>
    %cst_58 = arith.constant dense<0.000000e+00> : vector<10xf32>
    %72 = vector.multi_reduction <add>, %71, %cst_58 [1] : vector<10x10xf32> to vector<10xf32>
    %73 = vector.shape_cast %72 : vector<10xf32> to vector<10x1xf32>
    %74 = vector.broadcast %73 : vector<10x1xf32> to vector<10x10xf32>
    %75 = arith.divf %71, %74 : vector<10x10xf32>
    %cst_59 = arith.constant dense<0.000000e+00> : vector<10x64xf32>
    %76 = tpu.matmul %75, %62, %cst_59 {dimension_numbers = #tpu.dot_dimension_numbers<[1], [0], [0], [1], [0, 0, 1, 1], [], []>} : vector<10x10xf32>, vector<10x64xf32>, vector<10x64xf32> -> vector<10x64xf32>
    %c0_60 = arith.constant 0 : index
    %c1_61 = arith.constant 1 : index
    %c0_62 = arith.constant 0 : index
    %c0_63 = arith.constant 0 : index
    %77 = vector.load %arg7[%c0_60, %c1_61, %c0_62, %c0_63] : memref<2x2x64x128xf32, #tpu.memory_space<vmem>>, vector<1x1x64x128xf32>
    %78 = vector.shape_cast %77 : vector<1x1x64x128xf32> to vector<64x128xf32>
    %cst_64 = arith.constant dense<0.000000e+00> : vector<10x128xf32>
    %79 = tpu.matmul %76, %78, %cst_64 {dimension_numbers = #tpu.dot_dimension_numbers<[1], [0], [0], [1], [0, 0, 1, 1], [], []>} : vector<10x64xf32>, vector<64x128xf32>, vector<10x128xf32> -> vector<10x128xf32>
    %80 = arith.addf %53, %79 : vector<10x128xf32>
    %81 = arith.addf %4, %80 : vector<10x128xf32>
    %c0_65 = arith.constant 0 : index
    %c0_66 = arith.constant 0 : index
    %c0_67 = arith.constant 0 : index
    %82 = vector.load %arg9[%c0_65, %c0_66, %c0_67] : memref<2x1x128xf32, #tpu.memory_space<vmem>>, vector<1x1x128xf32>
    %83 = vector.shape_cast %82 : vector<1x1x128xf32> to vector<1x128xf32>
    %cst_68 = arith.constant dense<0.000000e+00> : vector<10xf32>
    %84 = vector.multi_reduction <add>, %81, %cst_68 [1] : vector<10x128xf32> to vector<10xf32>
    %85 = vector.shape_cast %84 : vector<10xf32> to vector<10x1xf32>
    %cst_69 = arith.constant 1.280000e+02 : f32
    %86 = vector.broadcast %cst_69 : f32 to vector<10x1xf32>
    %87 = arith.divf %85, %86 : vector<10x1xf32>
    %88 = vector.broadcast %87 : vector<10x1xf32> to vector<10x128xf32>
    %89 = arith.subf %81, %88 : vector<10x128xf32>
    %90 = arith.mulf %89, %89 : vector<10x128xf32>
    %cst_70 = arith.constant dense<0.000000e+00> : vector<10xf32>
    %91 = vector.multi_reduction <add>, %90, %cst_70 [1] : vector<10x128xf32> to vector<10xf32>
    %92 = vector.shape_cast %91 : vector<10xf32> to vector<10x1xf32>
    %cst_71 = arith.constant 1.280000e+02 : f32
    %93 = vector.broadcast %cst_71 : f32 to vector<10x1xf32>
    %94 = arith.divf %92, %93 : vector<10x1xf32>
    %cst_72 = arith.constant 9.99999974E-6 : f32
    %95 = vector.broadcast %cst_72 : f32 to vector<10x1xf32>
    %96 = arith.addf %94, %95 : vector<10x1xf32>
    %97 = math.rsqrt %96 : vector<10x1xf32>
    %98 = vector.broadcast %97 : vector<10x1xf32> to vector<10x128xf32>
    %99 = arith.mulf %89, %98 : vector<10x128xf32>
    %100 = vector.broadcast %83 : vector<1x128xf32> to vector<10x128xf32>
    %101 = arith.mulf %99, %100 : vector<10x128xf32>
    %c0_73 = arith.constant 0 : index
    %c0_74 = arith.constant 0 : index
    %c0_75 = arith.constant 0 : index
    %102 = vector.load %arg10[%c0_73, %c0_74, %c0_75] : memref<2x128x512xf32, #tpu.memory_space<vmem>>, vector<1x128x512xf32>
    %103 = vector.shape_cast %102 : vector<1x128x512xf32> to vector<128x512xf32>
    %cst_76 = arith.constant dense<0.000000e+00> : vector<10x512xf32>
    %104 = tpu.matmul %101, %103, %cst_76 {dimension_numbers = #tpu.dot_dimension_numbers<[1], [0], [0], [1], [0, 0, 1, 1], [], []>} : vector<10x128xf32>, vector<128x512xf32>, vector<10x512xf32> -> vector<10x512xf32>
    %105 = arith.mulf %104, %104 : vector<10x512xf32>
    %106 = arith.mulf %104, %105 : vector<10x512xf32>
    %cst_77 = arith.constant 4.471500e-02 : f32
    %107 = vector.broadcast %cst_77 : f32 to vector<10x512xf32>
    %108 = arith.mulf %107, %106 : vector<10x512xf32>
    %109 = arith.addf %104, %108 : vector<10x512xf32>
    %cst_78 = arith.constant 0.797884583 : f32
    %110 = vector.broadcast %cst_78 : f32 to vector<10x512xf32>
    %111 = arith.mulf %110, %109 : vector<10x512xf32>
    %112 = math.tanh %111 : vector<10x512xf32>
    %cst_79 = arith.constant 1.000000e+00 : f32
    %113 = vector.broadcast %cst_79 : f32 to vector<10x512xf32>
    %114 = arith.addf %113, %112 : vector<10x512xf32>
    %cst_80 = arith.constant 5.000000e-01 : f32
    %115 = vector.broadcast %cst_80 : f32 to vector<10x512xf32>
    %116 = arith.mulf %115, %114 : vector<10x512xf32>
    %117 = arith.mulf %104, %116 : vector<10x512xf32>
    %c0_81 = arith.constant 0 : index
    %c0_82 = arith.constant 0 : index
    %c0_83 = arith.constant 0 : index
    %118 = vector.load %arg11[%c0_81, %c0_82, %c0_83] : memref<2x512x128xf32, #tpu.memory_space<vmem>>, vector<1x512x128xf32>
    %119 = vector.shape_cast %118 : vector<1x512x128xf32> to vector<512x128xf32>
    %cst_84 = arith.constant dense<0.000000e+00> : vector<10x128xf32>
    %120 = tpu.matmul %117, %119, %cst_84 {dimension_numbers = #tpu.dot_dimension_numbers<[1], [0], [0], [1], [0, 0, 1, 1], [], []>} : vector<10x512xf32>, vector<512x128xf32>, vector<10x128xf32> -> vector<10x128xf32>
    %121 = arith.addf %81, %120 : vector<10x128xf32>
    %c1_85 = arith.constant 1 : index
    %c0_86 = arith.constant 0 : index
    %c0_87 = arith.constant 0 : index
    %122 = vector.load %arg8[%c1_85, %c0_86, %c0_87] : memref<2x1x128xf32, #tpu.memory_space<vmem>>, vector<1x1x128xf32>
    %123 = vector.shape_cast %122 : vector<1x1x128xf32> to vector<1x128xf32>
    %cst_88 = arith.constant dense<0.000000e+00> : vector<10xf32>
    %124 = vector.multi_reduction <add>, %121, %cst_88 [1] : vector<10x128xf32> to vector<10xf32>
    %125 = vector.shape_cast %124 : vector<10xf32> to vector<10x1xf32>
    %cst_89 = arith.constant 1.280000e+02 : f32
    %126 = vector.broadcast %cst_89 : f32 to vector<10x1xf32>
    %127 = arith.divf %125, %126 : vector<10x1xf32>
    %128 = vector.broadcast %127 : vector<10x1xf32> to vector<10x128xf32>
    %129 = arith.subf %121, %128 : vector<10x128xf32>
    %130 = arith.mulf %129, %129 : vector<10x128xf32>
    %cst_90 = arith.constant dense<0.000000e+00> : vector<10xf32>
    %131 = vector.multi_reduction <add>, %130, %cst_90 [1] : vector<10x128xf32> to vector<10xf32>
    %132 = vector.shape_cast %131 : vector<10xf32> to vector<10x1xf32>
    %cst_91 = arith.constant 1.280000e+02 : f32
    %133 = vector.broadcast %cst_91 : f32 to vector<10x1xf32>
    %134 = arith.divf %132, %133 : vector<10x1xf32>
    %cst_92 = arith.constant 9.99999974E-6 : f32
    %135 = vector.broadcast %cst_92 : f32 to vector<10x1xf32>
    %136 = arith.addf %134, %135 : vector<10x1xf32>
    %137 = math.rsqrt %136 : vector<10x1xf32>
    %138 = vector.broadcast %137 : vector<10x1xf32> to vector<10x128xf32>
    %139 = arith.mulf %129, %138 : vector<10x128xf32>
    %140 = vector.broadcast %123 : vector<1x128xf32> to vector<10x128xf32>
    %141 = arith.mulf %139, %140 : vector<10x128xf32>
    %cst_93 = arith.constant 0.000000e+00 : f32
    %142 = vector.broadcast %cst_93 : f32 to vector<10x128xf32>
    %c1_94 = arith.constant 1 : index
    %c0_95 = arith.constant 0 : index
    %c0_96 = arith.constant 0 : index
    %c0_97 = arith.constant 0 : index
    %143 = vector.load %arg4[%c1_94, %c0_95, %c0_96, %c0_97] : memref<2x2x128x64xf32, #tpu.memory_space<vmem>>, vector<1x1x128x64xf32>
    %144 = vector.shape_cast %143 : vector<1x1x128x64xf32> to vector<128x64xf32>
    %cst_98 = arith.constant dense<0.000000e+00> : vector<10x64xf32>
    %145 = tpu.matmul %141, %144, %cst_98 {dimension_numbers = #tpu.dot_dimension_numbers<[1], [0], [0], [1], [0, 0, 1, 1], [], []>} : vector<10x128xf32>, vector<128x64xf32>, vector<10x64xf32> -> vector<10x64xf32>
    %c1_99 = arith.constant 1 : index
    %c0_100 = arith.constant 0 : index
    %c0_101 = arith.constant 0 : index
    %c0_102 = arith.constant 0 : index
    %146 = vector.load %arg5[%c1_99, %c0_100, %c0_101, %c0_102] : memref<2x2x128x64xf32, #tpu.memory_space<vmem>>, vector<1x1x128x64xf32>
    %147 = vector.shape_cast %146 : vector<1x1x128x64xf32> to vector<128x64xf32>
    %cst_103 = arith.constant dense<0.000000e+00> : vector<10x64xf32>
    %148 = tpu.matmul %141, %147, %cst_103 {dimension_numbers = #tpu.dot_dimension_numbers<[1], [0], [0], [1], [0, 0, 1, 1], [], []>} : vector<10x128xf32>, vector<128x64xf32>, vector<10x64xf32> -> vector<10x64xf32>
    %c1_104 = arith.constant 1 : index
    %c0_105 = arith.constant 0 : index
    %c0_106 = arith.constant 0 : index
    %c0_107 = arith.constant 0 : index
    %149 = vector.load %arg6[%c1_104, %c0_105, %c0_106, %c0_107] : memref<2x2x128x64xf32, #tpu.memory_space<vmem>>, vector<1x1x128x64xf32>
    %150 = vector.shape_cast %149 : vector<1x1x128x64xf32> to vector<128x64xf32>
    %cst_108 = arith.constant dense<0.000000e+00> : vector<10x64xf32>
    %151 = tpu.matmul %141, %150, %cst_108 {dimension_numbers = #tpu.dot_dimension_numbers<[1], [0], [0], [1], [0, 0, 1, 1], [], []>} : vector<10x128xf32>, vector<128x64xf32>, vector<10x64xf32> -> vector<10x64xf32>
    %cst_109 = arith.constant dense<0.000000e+00> : vector<10x10xf32>
    %152 = tpu.matmul %145, %148, %cst_109 {dimension_numbers = #tpu.dot_dimension_numbers<[1], [1], [0], [0], [0, 0, 1, 0], [], []>} : vector<10x64xf32>, vector<10x64xf32>, vector<10x10xf32> -> vector<10x10xf32>
    %cst_110 = arith.constant 1.250000e-01 : f32
    %153 = vector.broadcast %cst_110 : f32 to vector<10x10xf32>
    %154 = arith.mulf %152, %153 : vector<10x10xf32>
    %155 = arith.addf %154, %5 : vector<10x10xf32>
    %cst_111 = arith.constant dense<0xFF800000> : vector<10xf32>
    %156 = vector.multi_reduction <maximumf>, %155, %cst_111 [1] : vector<10x10xf32> to vector<10xf32>
    %157 = vector.shape_cast %156 : vector<10xf32> to vector<10x1xf32>
    %158 = vector.broadcast %157 : vector<10x1xf32> to vector<10x10xf32>
    %159 = arith.subf %155, %158 : vector<10x10xf32>
    %160 = math.exp %159 : vector<10x10xf32>
    %cst_112 = arith.constant dense<0.000000e+00> : vector<10xf32>
    %161 = vector.multi_reduction <add>, %160, %cst_112 [1] : vector<10x10xf32> to vector<10xf32>
    %162 = vector.shape_cast %161 : vector<10xf32> to vector<10x1xf32>
    %163 = vector.broadcast %162 : vector<10x1xf32> to vector<10x10xf32>
    %164 = arith.divf %160, %163 : vector<10x10xf32>
    %cst_113 = arith.constant dense<0.000000e+00> : vector<10x64xf32>
    %165 = tpu.matmul %164, %151, %cst_113 {dimension_numbers = #tpu.dot_dimension_numbers<[1], [0], [0], [1], [0, 0, 1, 1], [], []>} : vector<10x10xf32>, vector<10x64xf32>, vector<10x64xf32> -> vector<10x64xf32>
    %c1_114 = arith.constant 1 : index
    %c0_115 = arith.constant 0 : index
    %c0_116 = arith.constant 0 : index
    %c0_117 = arith.constant 0 : index
    %166 = vector.load %arg7[%c1_114, %c0_115, %c0_116, %c0_117] : memref<2x2x64x128xf32, #tpu.memory_space<vmem>>, vector<1x1x64x128xf32>
    %167 = vector.shape_cast %166 : vector<1x1x64x128xf32> to vector<64x128xf32>
    %cst_118 = arith.constant dense<0.000000e+00> : vector<10x128xf32>
    %168 = tpu.matmul %165, %167, %cst_118 {dimension_numbers = #tpu.dot_dimension_numbers<[1], [0], [0], [1], [0, 0, 1, 1], [], []>} : vector<10x64xf32>, vector<64x128xf32>, vector<10x128xf32> -> vector<10x128xf32>
    %169 = arith.addf %142, %168 : vector<10x128xf32>
    %c1_119 = arith.constant 1 : index
    %c1_120 = arith.constant 1 : index
    %c0_121 = arith.constant 0 : index
    %c0_122 = arith.constant 0 : index
    %170 = vector.load %arg4[%c1_119, %c1_120, %c0_121, %c0_122] : memref<2x2x128x64xf32, #tpu.memory_space<vmem>>, vector<1x1x128x64xf32>
    %171 = vector.shape_cast %170 : vector<1x1x128x64xf32> to vector<128x64xf32>
    %cst_123 = arith.constant dense<0.000000e+00> : vector<10x64xf32>
    %172 = tpu.matmul %141, %171, %cst_123 {dimension_numbers = #tpu.dot_dimension_numbers<[1], [0], [0], [1], [0, 0, 1, 1], [], []>} : vector<10x128xf32>, vector<128x64xf32>, vector<10x64xf32> -> vector<10x64xf32>
    %c1_124 = arith.constant 1 : index
    %c1_125 = arith.constant 1 : index
    %c0_126 = arith.constant 0 : index
    %c0_127 = arith.constant 0 : index
    %173 = vector.load %arg5[%c1_124, %c1_125, %c0_126, %c0_127] : memref<2x2x128x64xf32, #tpu.memory_space<vmem>>, vector<1x1x128x64xf32>
    %174 = vector.shape_cast %173 : vector<1x1x128x64xf32> to vector<128x64xf32>
    %cst_128 = arith.constant dense<0.000000e+00> : vector<10x64xf32>
    %175 = tpu.matmul %141, %174, %cst_128 {dimension_numbers = #tpu.dot_dimension_numbers<[1], [0], [0], [1], [0, 0, 1, 1], [], []>} : vector<10x128xf32>, vector<128x64xf32>, vector<10x64xf32> -> vector<10x64xf32>
    %c1_129 = arith.constant 1 : index
    %c1_130 = arith.constant 1 : index
    %c0_131 = arith.constant 0 : index
    %c0_132 = arith.constant 0 : index
    %176 = vector.load %arg6[%c1_129, %c1_130, %c0_131, %c0_132] : memref<2x2x128x64xf32, #tpu.memory_space<vmem>>, vector<1x1x128x64xf32>
    %177 = vector.shape_cast %176 : vector<1x1x128x64xf32> to vector<128x64xf32>
    %cst_133 = arith.constant dense<0.000000e+00> : vector<10x64xf32>
    %178 = tpu.matmul %141, %177, %cst_133 {dimension_numbers = #tpu.dot_dimension_numbers<[1], [0], [0], [1], [0, 0, 1, 1], [], []>} : vector<10x128xf32>, vector<128x64xf32>, vector<10x64xf32> -> vector<10x64xf32>
    %cst_134 = arith.constant dense<0.000000e+00> : vector<10x10xf32>
    %179 = tpu.matmul %172, %175, %cst_134 {dimension_numbers = #tpu.dot_dimension_numbers<[1], [1], [0], [0], [0, 0, 1, 0], [], []>} : vector<10x64xf32>, vector<10x64xf32>, vector<10x10xf32> -> vector<10x10xf32>
    %cst_135 = arith.constant 1.250000e-01 : f32
    %180 = vector.broadcast %cst_135 : f32 to vector<10x10xf32>
    %181 = arith.mulf %179, %180 : vector<10x10xf32>
    %182 = arith.addf %181, %5 : vector<10x10xf32>
    %cst_136 = arith.constant dense<0xFF800000> : vector<10xf32>
    %183 = vector.multi_reduction <maximumf>, %182, %cst_136 [1] : vector<10x10xf32> to vector<10xf32>
    %184 = vector.shape_cast %183 : vector<10xf32> to vector<10x1xf32>
    %185 = vector.broadcast %184 : vector<10x1xf32> to vector<10x10xf32>
    %186 = arith.subf %182, %185 : vector<10x10xf32>
    %187 = math.exp %186 : vector<10x10xf32>
    %cst_137 = arith.constant dense<0.000000e+00> : vector<10xf32>
    %188 = vector.multi_reduction <add>, %187, %cst_137 [1] : vector<10x10xf32> to vector<10xf32>
    %189 = vector.shape_cast %188 : vector<10xf32> to vector<10x1xf32>
    %190 = vector.broadcast %189 : vector<10x1xf32> to vector<10x10xf32>
    %191 = arith.divf %187, %190 : vector<10x10xf32>
    %cst_138 = arith.constant dense<0.000000e+00> : vector<10x64xf32>
    %192 = tpu.matmul %191, %178, %cst_138 {dimension_numbers = #tpu.dot_dimension_numbers<[1], [0], [0], [1], [0, 0, 1, 1], [], []>} : vector<10x10xf32>, vector<10x64xf32>, vector<10x64xf32> -> vector<10x64xf32>
    %c1_139 = arith.constant 1 : index
    %c1_140 = arith.constant 1 : index
    %c0_141 = arith.constant 0 : index
    %c0_142 = arith.constant 0 : index
    %193 = vector.load %arg7[%c1_139, %c1_140, %c0_141, %c0_142] : memref<2x2x64x128xf32, #tpu.memory_space<vmem>>, vector<1x1x64x128xf32>
    %194 = vector.shape_cast %193 : vector<1x1x64x128xf32> to vector<64x128xf32>
    %cst_143 = arith.constant dense<0.000000e+00> : vector<10x128xf32>
    %195 = tpu.matmul %192, %194, %cst_143 {dimension_numbers = #tpu.dot_dimension_numbers<[1], [0], [0], [1], [0, 0, 1, 1], [], []>} : vector<10x64xf32>, vector<64x128xf32>, vector<10x128xf32> -> vector<10x128xf32>
    %196 = arith.addf %169, %195 : vector<10x128xf32>
    %197 = arith.addf %121, %196 : vector<10x128xf32>
    %c1_144 = arith.constant 1 : index
    %c0_145 = arith.constant 0 : index
    %c0_146 = arith.constant 0 : index
    %198 = vector.load %arg9[%c1_144, %c0_145, %c0_146] : memref<2x1x128xf32, #tpu.memory_space<vmem>>, vector<1x1x128xf32>
    %199 = vector.shape_cast %198 : vector<1x1x128xf32> to vector<1x128xf32>
    %cst_147 = arith.constant dense<0.000000e+00> : vector<10xf32>
    %200 = vector.multi_reduction <add>, %197, %cst_147 [1] : vector<10x128xf32> to vector<10xf32>
    %201 = vector.shape_cast %200 : vector<10xf32> to vector<10x1xf32>
    %cst_148 = arith.constant 1.280000e+02 : f32
    %202 = vector.broadcast %cst_148 : f32 to vector<10x1xf32>
    %203 = arith.divf %201, %202 : vector<10x1xf32>
    %204 = vector.broadcast %203 : vector<10x1xf32> to vector<10x128xf32>
    %205 = arith.subf %197, %204 : vector<10x128xf32>
    %206 = arith.mulf %205, %205 : vector<10x128xf32>
    %cst_149 = arith.constant dense<0.000000e+00> : vector<10xf32>
    %207 = vector.multi_reduction <add>, %206, %cst_149 [1] : vector<10x128xf32> to vector<10xf32>
    %208 = vector.shape_cast %207 : vector<10xf32> to vector<10x1xf32>
    %cst_150 = arith.constant 1.280000e+02 : f32
    %209 = vector.broadcast %cst_150 : f32 to vector<10x1xf32>
    %210 = arith.divf %208, %209 : vector<10x1xf32>
    %cst_151 = arith.constant 9.99999974E-6 : f32
    %211 = vector.broadcast %cst_151 : f32 to vector<10x1xf32>
    %212 = arith.addf %210, %211 : vector<10x1xf32>
    %213 = math.rsqrt %212 : vector<10x1xf32>
    %214 = vector.broadcast %213 : vector<10x1xf32> to vector<10x128xf32>
    %215 = arith.mulf %205, %214 : vector<10x128xf32>
    %216 = vector.broadcast %199 : vector<1x128xf32> to vector<10x128xf32>
    %217 = arith.mulf %215, %216 : vector<10x128xf32>
    %c1_152 = arith.constant 1 : index
    %c0_153 = arith.constant 0 : index
    %c0_154 = arith.constant 0 : index
    %218 = vector.load %arg10[%c1_152, %c0_153, %c0_154] : memref<2x128x512xf32, #tpu.memory_space<vmem>>, vector<1x128x512xf32>
    %219 = vector.shape_cast %218 : vector<1x128x512xf32> to vector<128x512xf32>
    %cst_155 = arith.constant dense<0.000000e+00> : vector<10x512xf32>
    %220 = tpu.matmul %217, %219, %cst_155 {dimension_numbers = #tpu.dot_dimension_numbers<[1], [0], [0], [1], [0, 0, 1, 1], [], []>} : vector<10x128xf32>, vector<128x512xf32>, vector<10x512xf32> -> vector<10x512xf32>
    %221 = arith.mulf %220, %220 : vector<10x512xf32>
    %222 = arith.mulf %220, %221 : vector<10x512xf32>
    %cst_156 = arith.constant 4.471500e-02 : f32
    %223 = vector.broadcast %cst_156 : f32 to vector<10x512xf32>
    %224 = arith.mulf %223, %222 : vector<10x512xf32>
    %225 = arith.addf %220, %224 : vector<10x512xf32>
    %cst_157 = arith.constant 0.797884583 : f32
    %226 = vector.broadcast %cst_157 : f32 to vector<10x512xf32>
    %227 = arith.mulf %226, %225 : vector<10x512xf32>
    %228 = math.tanh %227 : vector<10x512xf32>
    %cst_158 = arith.constant 1.000000e+00 : f32
    %229 = vector.broadcast %cst_158 : f32 to vector<10x512xf32>
    %230 = arith.addf %229, %228 : vector<10x512xf32>
    %cst_159 = arith.constant 5.000000e-01 : f32
    %231 = vector.broadcast %cst_159 : f32 to vector<10x512xf32>
    %232 = arith.mulf %231, %230 : vector<10x512xf32>
    %233 = arith.mulf %220, %232 : vector<10x512xf32>
    %c1_160 = arith.constant 1 : index
    %c0_161 = arith.constant 0 : index
    %c0_162 = arith.constant 0 : index
    %234 = vector.load %arg11[%c1_160, %c0_161, %c0_162] : memref<2x512x128xf32, #tpu.memory_space<vmem>>, vector<1x512x128xf32>
    %235 = vector.shape_cast %234 : vector<1x512x128xf32> to vector<512x128xf32>
    %cst_163 = arith.constant dense<0.000000e+00> : vector<10x128xf32>
    %236 = tpu.matmul %233, %235, %cst_163 {dimension_numbers = #tpu.dot_dimension_numbers<[1], [0], [0], [1], [0, 0, 1, 1], [], []>} : vector<10x512xf32>, vector<512x128xf32>, vector<10x128xf32> -> vector<10x128xf32>
    %237 = arith.addf %197, %236 : vector<10x128xf32>
    %238 = vector.extract_strided_slice %237 {offsets = [0, 0], sizes = [1, 128], strides = [1, 1]} : vector<10x128xf32> to vector<1x128xf32>
    %239 = vector.extract_strided_slice %237 {offsets = [5, 0], sizes = [1, 128], strides = [1, 1]} : vector<10x128xf32> to vector<1x128xf32>
    %240 = tpu.concatenate %238, %239 in 0 : vector<1x128xf32>, vector<1x128xf32> -> vector<2x128xf32>
    %c0_164 = arith.constant 0 : index
    %c0_165 = arith.constant 0 : index
    %241 = vector.load %arg12[%c0_164, %c0_165] : memref<1x128xf32, #tpu.memory_space<vmem>>, vector<1x128xf32>
    %cst_166 = arith.constant dense<0.000000e+00> : vector<2xf32>
    %242 = vector.multi_reduction <add>, %240, %cst_166 [1] : vector<2x128xf32> to vector<2xf32>
    %243 = vector.shape_cast %242 : vector<2xf32> to vector<2x1xf32>
    %cst_167 = arith.constant 1.280000e+02 : f32
    %244 = vector.broadcast %cst_167 : f32 to vector<2x1xf32>
    %245 = arith.divf %243, %244 : vector<2x1xf32>
    %246 = vector.broadcast %245 : vector<2x1xf32> to vector<2x128xf32>
    %247 = arith.subf %240, %246 : vector<2x128xf32>
    %248 = arith.mulf %247, %247 : vector<2x128xf32>
    %cst_168 = arith.constant dense<0.000000e+00> : vector<2xf32>
    %249 = vector.multi_reduction <add>, %248, %cst_168 [1] : vector<2x128xf32> to vector<2xf32>
    %250 = vector.shape_cast %249 : vector<2xf32> to vector<2x1xf32>
    %cst_169 = arith.constant 1.280000e+02 : f32
    %251 = vector.broadcast %cst_169 : f32 to vector<2x1xf32>
    %252 = arith.divf %250, %251 : vector<2x1xf32>
    %cst_170 = arith.constant 9.99999974E-6 : f32
    %253 = vector.broadcast %cst_170 : f32 to vector<2x1xf32>
    %254 = arith.addf %252, %253 : vector<2x1xf32>
    %255 = math.rsqrt %254 : vector<2x1xf32>
    %256 = vector.broadcast %255 : vector<2x1xf32> to vector<2x128xf32>
    %257 = arith.mulf %247, %256 : vector<2x128xf32>
    %258 = vector.broadcast %241 : vector<1x128xf32> to vector<2x128xf32>
    %259 = arith.mulf %257, %258 : vector<2x128xf32>
    %cst_171 = arith.constant 0.000000e+00 : f32
    %260 = vector.broadcast %cst_171 : f32 to vector<2x256xf32>
    %c0_172 = arith.constant 0 : index
    %c0_173 = arith.constant 0 : index
    %261 = vector.load %arg18[%c0_172, %c0_173] : memref<1x256xf32, #tpu.memory_space<vmem>>, vector<1x256xf32>
    %262 = vector.broadcast %261 : vector<1x256xf32> to vector<2x256xf32>
    %263 = arith.addf %260, %262 : vector<2x256xf32>
    %c0_174 = arith.constant 0 : index
    %c0_175 = arith.constant 0 : index
    %c0_176 = arith.constant 0 : index
    %264 = vector.load %arg13[%c0_174, %c0_175, %c0_176] : memref<8x128x128xf32, #tpu.memory_space<vmem>>, vector<1x128x128xf32>
    %265 = vector.shape_cast %264 : vector<1x128x128xf32> to vector<128x128xf32>
    %cst_177 = arith.constant dense<0.000000e+00> : vector<2x128xf32>
    %266 = tpu.matmul %259, %265, %cst_177 {dimension_numbers = #tpu.dot_dimension_numbers<[1], [0], [0], [1], [0, 0, 1, 1], [], []>} : vector<2x128xf32>, vector<128x128xf32>, vector<2x128xf32> -> vector<2x128xf32>
    %c0_178 = arith.constant 0 : index
    %c0_179 = arith.constant 0 : index
    %c0_180 = arith.constant 0 : index
    %267 = vector.load %arg14[%c0_178, %c0_179, %c0_180] : memref<8x1x128xf32, #tpu.memory_space<vmem>>, vector<1x1x128xf32>
    %268 = vector.shape_cast %267 : vector<1x1x128xf32> to vector<1x128xf32>
    %269 = vector.broadcast %268 : vector<1x128xf32> to vector<2x128xf32>
    %270 = arith.addf %266, %269 : vector<2x128xf32>
    %cst_181 = arith.constant 0.000000e+00 : f32
    %271 = vector.broadcast %cst_181 : f32 to vector<2x128xf32>
    %272 = arith.maximumf %270, %271 : vector<2x128xf32>
    %c0_182 = arith.constant 0 : index
    %c0_183 = arith.constant 0 : index
    %c0_184 = arith.constant 0 : index
    %273 = vector.load %arg15[%c0_182, %c0_183, %c0_184] : memref<8x128x128xf32, #tpu.memory_space<vmem>>, vector<1x128x128xf32>
    %274 = vector.shape_cast %273 : vector<1x128x128xf32> to vector<128x128xf32>
    %cst_185 = arith.constant dense<0.000000e+00> : vector<2x128xf32>
    %275 = tpu.matmul %272, %274, %cst_185 {dimension_numbers = #tpu.dot_dimension_numbers<[1], [0], [0], [1], [0, 0, 1, 1], [], []>} : vector<2x128xf32>, vector<128x128xf32>, vector<2x128xf32> -> vector<2x128xf32>
    %c0_186 = arith.constant 0 : index
    %c0_187 = arith.constant 0 : index
    %c0_188 = arith.constant 0 : index
    %276 = vector.load %arg16[%c0_186, %c0_187, %c0_188] : memref<8x1x128xf32, #tpu.memory_space<vmem>>, vector<1x1x128xf32>
    %277 = vector.shape_cast %276 : vector<1x1x128xf32> to vector<1x128xf32>
    %278 = vector.broadcast %277 : vector<1x128xf32> to vector<2x128xf32>
    %279 = arith.addf %275, %278 : vector<2x128xf32>
    %cst_189 = arith.constant 0.000000e+00 : f32
    %280 = vector.broadcast %cst_189 : f32 to vector<2x128xf32>
    %281 = arith.maximumf %279, %280 : vector<2x128xf32>
    %c0_190 = arith.constant 0 : index
    %c0_191 = arith.constant 0 : index
    %c0_192 = arith.constant 0 : index
    %282 = vector.load %arg17[%c0_190, %c0_191, %c0_192] : memref<8x128x256xf32, #tpu.memory_space<vmem>>, vector<1x128x256xf32>
    %283 = vector.shape_cast %282 : vector<1x128x256xf32> to vector<128x256xf32>
    %cst_193 = arith.constant dense<0.000000e+00> : vector<2x256xf32>
    %284 = tpu.matmul %281, %283, %cst_193 {dimension_numbers = #tpu.dot_dimension_numbers<[1], [0], [0], [1], [0, 0, 1, 1], [], []>} : vector<2x128xf32>, vector<128x256xf32>, vector<2x256xf32> -> vector<2x256xf32>
    %285 = arith.addf %263, %284 : vector<2x256xf32>
    %c1_194 = arith.constant 1 : index
    %c0_195 = arith.constant 0 : index
    %c0_196 = arith.constant 0 : index
    %286 = vector.load %arg13[%c1_194, %c0_195, %c0_196] : memref<8x128x128xf32, #tpu.memory_space<vmem>>, vector<1x128x128xf32>
    %287 = vector.shape_cast %286 : vector<1x128x128xf32> to vector<128x128xf32>
    %cst_197 = arith.constant dense<0.000000e+00> : vector<2x128xf32>
    %288 = tpu.matmul %259, %287, %cst_197 {dimension_numbers = #tpu.dot_dimension_numbers<[1], [0], [0], [1], [0, 0, 1, 1], [], []>} : vector<2x128xf32>, vector<128x128xf32>, vector<2x128xf32> -> vector<2x128xf32>
    %c1_198 = arith.constant 1 : index
    %c0_199 = arith.constant 0 : index
    %c0_200 = arith.constant 0 : index
    %289 = vector.load %arg14[%c1_198, %c0_199, %c0_200] : memref<8x1x128xf32, #tpu.memory_space<vmem>>, vector<1x1x128xf32>
    %290 = vector.shape_cast %289 : vector<1x1x128xf32> to vector<1x128xf32>
    %291 = vector.broadcast %290 : vector<1x128xf32> to vector<2x128xf32>
    %292 = arith.addf %288, %291 : vector<2x128xf32>
    %cst_201 = arith.constant 0.000000e+00 : f32
    %293 = vector.broadcast %cst_201 : f32 to vector<2x128xf32>
    %294 = arith.maximumf %292, %293 : vector<2x128xf32>
    %c1_202 = arith.constant 1 : index
    %c0_203 = arith.constant 0 : index
    %c0_204 = arith.constant 0 : index
    %295 = vector.load %arg15[%c1_202, %c0_203, %c0_204] : memref<8x128x128xf32, #tpu.memory_space<vmem>>, vector<1x128x128xf32>
    %296 = vector.shape_cast %295 : vector<1x128x128xf32> to vector<128x128xf32>
    %cst_205 = arith.constant dense<0.000000e+00> : vector<2x128xf32>
    %297 = tpu.matmul %294, %296, %cst_205 {dimension_numbers = #tpu.dot_dimension_numbers<[1], [0], [0], [1], [0, 0, 1, 1], [], []>} : vector<2x128xf32>, vector<128x128xf32>, vector<2x128xf32> -> vector<2x128xf32>
    %c1_206 = arith.constant 1 : index
    %c0_207 = arith.constant 0 : index
    %c0_208 = arith.constant 0 : index
    %298 = vector.load %arg16[%c1_206, %c0_207, %c0_208] : memref<8x1x128xf32, #tpu.memory_space<vmem>>, vector<1x1x128xf32>
    %299 = vector.shape_cast %298 : vector<1x1x128xf32> to vector<1x128xf32>
    %300 = vector.broadcast %299 : vector<1x128xf32> to vector<2x128xf32>
    %301 = arith.addf %297, %300 : vector<2x128xf32>
    %cst_209 = arith.constant 0.000000e+00 : f32
    %302 = vector.broadcast %cst_209 : f32 to vector<2x128xf32>
    %303 = arith.maximumf %301, %302 : vector<2x128xf32>
    %c1_210 = arith.constant 1 : index
    %c0_211 = arith.constant 0 : index
    %c0_212 = arith.constant 0 : index
    %304 = vector.load %arg17[%c1_210, %c0_211, %c0_212] : memref<8x128x256xf32, #tpu.memory_space<vmem>>, vector<1x128x256xf32>
    %305 = vector.shape_cast %304 : vector<1x128x256xf32> to vector<128x256xf32>
    %cst_213 = arith.constant dense<0.000000e+00> : vector<2x256xf32>
    %306 = tpu.matmul %303, %305, %cst_213 {dimension_numbers = #tpu.dot_dimension_numbers<[1], [0], [0], [1], [0, 0, 1, 1], [], []>} : vector<2x128xf32>, vector<128x256xf32>, vector<2x256xf32> -> vector<2x256xf32>
    %307 = arith.addf %285, %306 : vector<2x256xf32>
    %c2 = arith.constant 2 : index
    %c0_214 = arith.constant 0 : index
    %c0_215 = arith.constant 0 : index
    %308 = vector.load %arg13[%c2, %c0_214, %c0_215] : memref<8x128x128xf32, #tpu.memory_space<vmem>>, vector<1x128x128xf32>
    %309 = vector.shape_cast %308 : vector<1x128x128xf32> to vector<128x128xf32>
    %cst_216 = arith.constant dense<0.000000e+00> : vector<2x128xf32>
    %310 = tpu.matmul %259, %309, %cst_216 {dimension_numbers = #tpu.dot_dimension_numbers<[1], [0], [0], [1], [0, 0, 1, 1], [], []>} : vector<2x128xf32>, vector<128x128xf32>, vector<2x128xf32> -> vector<2x128xf32>
    %c2_217 = arith.constant 2 : index
    %c0_218 = arith.constant 0 : index
    %c0_219 = arith.constant 0 : index
    %311 = vector.load %arg14[%c2_217, %c0_218, %c0_219] : memref<8x1x128xf32, #tpu.memory_space<vmem>>, vector<1x1x128xf32>
    %312 = vector.shape_cast %311 : vector<1x1x128xf32> to vector<1x128xf32>
    %313 = vector.broadcast %312 : vector<1x128xf32> to vector<2x128xf32>
    %314 = arith.addf %310, %313 : vector<2x128xf32>
    %cst_220 = arith.constant 0.000000e+00 : f32
    %315 = vector.broadcast %cst_220 : f32 to vector<2x128xf32>
    %316 = arith.maximumf %314, %315 : vector<2x128xf32>
    %c2_221 = arith.constant 2 : index
    %c0_222 = arith.constant 0 : index
    %c0_223 = arith.constant 0 : index
    %317 = vector.load %arg15[%c2_221, %c0_222, %c0_223] : memref<8x128x128xf32, #tpu.memory_space<vmem>>, vector<1x128x128xf32>
    %318 = vector.shape_cast %317 : vector<1x128x128xf32> to vector<128x128xf32>
    %cst_224 = arith.constant dense<0.000000e+00> : vector<2x128xf32>
    %319 = tpu.matmul %316, %318, %cst_224 {dimension_numbers = #tpu.dot_dimension_numbers<[1], [0], [0], [1], [0, 0, 1, 1], [], []>} : vector<2x128xf32>, vector<128x128xf32>, vector<2x128xf32> -> vector<2x128xf32>
    %c2_225 = arith.constant 2 : index
    %c0_226 = arith.constant 0 : index
    %c0_227 = arith.constant 0 : index
    %320 = vector.load %arg16[%c2_225, %c0_226, %c0_227] : memref<8x1x128xf32, #tpu.memory_space<vmem>>, vector<1x1x128xf32>
    %321 = vector.shape_cast %320 : vector<1x1x128xf32> to vector<1x128xf32>
    %322 = vector.broadcast %321 : vector<1x128xf32> to vector<2x128xf32>
    %323 = arith.addf %319, %322 : vector<2x128xf32>
    %cst_228 = arith.constant 0.000000e+00 : f32
    %324 = vector.broadcast %cst_228 : f32 to vector<2x128xf32>
    %325 = arith.maximumf %323, %324 : vector<2x128xf32>
    %c2_229 = arith.constant 2 : index
    %c0_230 = arith.constant 0 : index
    %c0_231 = arith.constant 0 : index
    %326 = vector.load %arg17[%c2_229, %c0_230, %c0_231] : memref<8x128x256xf32, #tpu.memory_space<vmem>>, vector<1x128x256xf32>
    %327 = vector.shape_cast %326 : vector<1x128x256xf32> to vector<128x256xf32>
    %cst_232 = arith.constant dense<0.000000e+00> : vector<2x256xf32>
    %328 = tpu.matmul %325, %327, %cst_232 {dimension_numbers = #tpu.dot_dimension_numbers<[1], [0], [0], [1], [0, 0, 1, 1], [], []>} : vector<2x128xf32>, vector<128x256xf32>, vector<2x256xf32> -> vector<2x256xf32>
    %329 = arith.addf %307, %328 : vector<2x256xf32>
    %c3 = arith.constant 3 : index
    %c0_233 = arith.constant 0 : index
    %c0_234 = arith.constant 0 : index
    %330 = vector.load %arg13[%c3, %c0_233, %c0_234] : memref<8x128x128xf32, #tpu.memory_space<vmem>>, vector<1x128x128xf32>
    %331 = vector.shape_cast %330 : vector<1x128x128xf32> to vector<128x128xf32>
    %cst_235 = arith.constant dense<0.000000e+00> : vector<2x128xf32>
    %332 = tpu.matmul %259, %331, %cst_235 {dimension_numbers = #tpu.dot_dimension_numbers<[1], [0], [0], [1], [0, 0, 1, 1], [], []>} : vector<2x128xf32>, vector<128x128xf32>, vector<2x128xf32> -> vector<2x128xf32>
    %c3_236 = arith.constant 3 : index
    %c0_237 = arith.constant 0 : index
    %c0_238 = arith.constant 0 : index
    %333 = vector.load %arg14[%c3_236, %c0_237, %c0_238] : memref<8x1x128xf32, #tpu.memory_space<vmem>>, vector<1x1x128xf32>
    %334 = vector.shape_cast %333 : vector<1x1x128xf32> to vector<1x128xf32>
    %335 = vector.broadcast %334 : vector<1x128xf32> to vector<2x128xf32>
    %336 = arith.addf %332, %335 : vector<2x128xf32>
    %cst_239 = arith.constant 0.000000e+00 : f32
    %337 = vector.broadcast %cst_239 : f32 to vector<2x128xf32>
    %338 = arith.maximumf %336, %337 : vector<2x128xf32>
    %c3_240 = arith.constant 3 : index
    %c0_241 = arith.constant 0 : index
    %c0_242 = arith.constant 0 : index
    %339 = vector.load %arg15[%c3_240, %c0_241, %c0_242] : memref<8x128x128xf32, #tpu.memory_space<vmem>>, vector<1x128x128xf32>
    %340 = vector.shape_cast %339 : vector<1x128x128xf32> to vector<128x128xf32>
    %cst_243 = arith.constant dense<0.000000e+00> : vector<2x128xf32>
    %341 = tpu.matmul %338, %340, %cst_243 {dimension_numbers = #tpu.dot_dimension_numbers<[1], [0], [0], [1], [0, 0, 1, 1], [], []>} : vector<2x128xf32>, vector<128x128xf32>, vector<2x128xf32> -> vector<2x128xf32>
    %c3_244 = arith.constant 3 : index
    %c0_245 = arith.constant 0 : index
    %c0_246 = arith.constant 0 : index
    %342 = vector.load %arg16[%c3_244, %c0_245, %c0_246] : memref<8x1x128xf32, #tpu.memory_space<vmem>>, vector<1x1x128xf32>
    %343 = vector.shape_cast %342 : vector<1x1x128xf32> to vector<1x128xf32>
    %344 = vector.broadcast %343 : vector<1x128xf32> to vector<2x128xf32>
    %345 = arith.addf %341, %344 : vector<2x128xf32>
    %cst_247 = arith.constant 0.000000e+00 : f32
    %346 = vector.broadcast %cst_247 : f32 to vector<2x128xf32>
    %347 = arith.maximumf %345, %346 : vector<2x128xf32>
    %c3_248 = arith.constant 3 : index
    %c0_249 = arith.constant 0 : index
    %c0_250 = arith.constant 0 : index
    %348 = vector.load %arg17[%c3_248, %c0_249, %c0_250] : memref<8x128x256xf32, #tpu.memory_space<vmem>>, vector<1x128x256xf32>
    %349 = vector.shape_cast %348 : vector<1x128x256xf32> to vector<128x256xf32>
    %cst_251 = arith.constant dense<0.000000e+00> : vector<2x256xf32>
    %350 = tpu.matmul %347, %349, %cst_251 {dimension_numbers = #tpu.dot_dimension_numbers<[1], [0], [0], [1], [0, 0, 1, 1], [], []>} : vector<2x128xf32>, vector<128x256xf32>, vector<2x256xf32> -> vector<2x256xf32>
    %351 = arith.addf %329, %350 : vector<2x256xf32>
    %c4 = arith.constant 4 : index
    %c0_252 = arith.constant 0 : index
    %c0_253 = arith.constant 0 : index
    %352 = vector.load %arg13[%c4, %c0_252, %c0_253] : memref<8x128x128xf32, #tpu.memory_space<vmem>>, vector<1x128x128xf32>
    %353 = vector.shape_cast %352 : vector<1x128x128xf32> to vector<128x128xf32>
    %cst_254 = arith.constant dense<0.000000e+00> : vector<2x128xf32>
    %354 = tpu.matmul %259, %353, %cst_254 {dimension_numbers = #tpu.dot_dimension_numbers<[1], [0], [0], [1], [0, 0, 1, 1], [], []>} : vector<2x128xf32>, vector<128x128xf32>, vector<2x128xf32> -> vector<2x128xf32>
    %c4_255 = arith.constant 4 : index
    %c0_256 = arith.constant 0 : index
    %c0_257 = arith.constant 0 : index
    %355 = vector.load %arg14[%c4_255, %c0_256, %c0_257] : memref<8x1x128xf32, #tpu.memory_space<vmem>>, vector<1x1x128xf32>
    %356 = vector.shape_cast %355 : vector<1x1x128xf32> to vector<1x128xf32>
    %357 = vector.broadcast %356 : vector<1x128xf32> to vector<2x128xf32>
    %358 = arith.addf %354, %357 : vector<2x128xf32>
    %cst_258 = arith.constant 0.000000e+00 : f32
    %359 = vector.broadcast %cst_258 : f32 to vector<2x128xf32>
    %360 = arith.maximumf %358, %359 : vector<2x128xf32>
    %c4_259 = arith.constant 4 : index
    %c0_260 = arith.constant 0 : index
    %c0_261 = arith.constant 0 : index
    %361 = vector.load %arg15[%c4_259, %c0_260, %c0_261] : memref<8x128x128xf32, #tpu.memory_space<vmem>>, vector<1x128x128xf32>
    %362 = vector.shape_cast %361 : vector<1x128x128xf32> to vector<128x128xf32>
    %cst_262 = arith.constant dense<0.000000e+00> : vector<2x128xf32>
    %363 = tpu.matmul %360, %362, %cst_262 {dimension_numbers = #tpu.dot_dimension_numbers<[1], [0], [0], [1], [0, 0, 1, 1], [], []>} : vector<2x128xf32>, vector<128x128xf32>, vector<2x128xf32> -> vector<2x128xf32>
    %c4_263 = arith.constant 4 : index
    %c0_264 = arith.constant 0 : index
    %c0_265 = arith.constant 0 : index
    %364 = vector.load %arg16[%c4_263, %c0_264, %c0_265] : memref<8x1x128xf32, #tpu.memory_space<vmem>>, vector<1x1x128xf32>
    %365 = vector.shape_cast %364 : vector<1x1x128xf32> to vector<1x128xf32>
    %366 = vector.broadcast %365 : vector<1x128xf32> to vector<2x128xf32>
    %367 = arith.addf %363, %366 : vector<2x128xf32>
    %cst_266 = arith.constant 0.000000e+00 : f32
    %368 = vector.broadcast %cst_266 : f32 to vector<2x128xf32>
    %369 = arith.maximumf %367, %368 : vector<2x128xf32>
    %c4_267 = arith.constant 4 : index
    %c0_268 = arith.constant 0 : index
    %c0_269 = arith.constant 0 : index
    %370 = vector.load %arg17[%c4_267, %c0_268, %c0_269] : memref<8x128x256xf32, #tpu.memory_space<vmem>>, vector<1x128x256xf32>
    %371 = vector.shape_cast %370 : vector<1x128x256xf32> to vector<128x256xf32>
    %cst_270 = arith.constant dense<0.000000e+00> : vector<2x256xf32>
    %372 = tpu.matmul %369, %371, %cst_270 {dimension_numbers = #tpu.dot_dimension_numbers<[1], [0], [0], [1], [0, 0, 1, 1], [], []>} : vector<2x128xf32>, vector<128x256xf32>, vector<2x256xf32> -> vector<2x256xf32>
    %373 = arith.addf %351, %372 : vector<2x256xf32>
    %c5 = arith.constant 5 : index
    %c0_271 = arith.constant 0 : index
    %c0_272 = arith.constant 0 : index
    %374 = vector.load %arg13[%c5, %c0_271, %c0_272] : memref<8x128x128xf32, #tpu.memory_space<vmem>>, vector<1x128x128xf32>
    %375 = vector.shape_cast %374 : vector<1x128x128xf32> to vector<128x128xf32>
    %cst_273 = arith.constant dense<0.000000e+00> : vector<2x128xf32>
    %376 = tpu.matmul %259, %375, %cst_273 {dimension_numbers = #tpu.dot_dimension_numbers<[1], [0], [0], [1], [0, 0, 1, 1], [], []>} : vector<2x128xf32>, vector<128x128xf32>, vector<2x128xf32> -> vector<2x128xf32>
    %c5_274 = arith.constant 5 : index
    %c0_275 = arith.constant 0 : index
    %c0_276 = arith.constant 0 : index
    %377 = vector.load %arg14[%c5_274, %c0_275, %c0_276] : memref<8x1x128xf32, #tpu.memory_space<vmem>>, vector<1x1x128xf32>
    %378 = vector.shape_cast %377 : vector<1x1x128xf32> to vector<1x128xf32>
    %379 = vector.broadcast %378 : vector<1x128xf32> to vector<2x128xf32>
    %380 = arith.addf %376, %379 : vector<2x128xf32>
    %cst_277 = arith.constant 0.000000e+00 : f32
    %381 = vector.broadcast %cst_277 : f32 to vector<2x128xf32>
    %382 = arith.maximumf %380, %381 : vector<2x128xf32>
    %c5_278 = arith.constant 5 : index
    %c0_279 = arith.constant 0 : index
    %c0_280 = arith.constant 0 : index
    %383 = vector.load %arg15[%c5_278, %c0_279, %c0_280] : memref<8x128x128xf32, #tpu.memory_space<vmem>>, vector<1x128x128xf32>
    %384 = vector.shape_cast %383 : vector<1x128x128xf32> to vector<128x128xf32>
    %cst_281 = arith.constant dense<0.000000e+00> : vector<2x128xf32>
    %385 = tpu.matmul %382, %384, %cst_281 {dimension_numbers = #tpu.dot_dimension_numbers<[1], [0], [0], [1], [0, 0, 1, 1], [], []>} : vector<2x128xf32>, vector<128x128xf32>, vector<2x128xf32> -> vector<2x128xf32>
    %c5_282 = arith.constant 5 : index
    %c0_283 = arith.constant 0 : index
    %c0_284 = arith.constant 0 : index
    %386 = vector.load %arg16[%c5_282, %c0_283, %c0_284] : memref<8x1x128xf32, #tpu.memory_space<vmem>>, vector<1x1x128xf32>
    %387 = vector.shape_cast %386 : vector<1x1x128xf32> to vector<1x128xf32>
    %388 = vector.broadcast %387 : vector<1x128xf32> to vector<2x128xf32>
    %389 = arith.addf %385, %388 : vector<2x128xf32>
    %cst_285 = arith.constant 0.000000e+00 : f32
    %390 = vector.broadcast %cst_285 : f32 to vector<2x128xf32>
    %391 = arith.maximumf %389, %390 : vector<2x128xf32>
    %c5_286 = arith.constant 5 : index
    %c0_287 = arith.constant 0 : index
    %c0_288 = arith.constant 0 : index
    %392 = vector.load %arg17[%c5_286, %c0_287, %c0_288] : memref<8x128x256xf32, #tpu.memory_space<vmem>>, vector<1x128x256xf32>
    %393 = vector.shape_cast %392 : vector<1x128x256xf32> to vector<128x256xf32>
    %cst_289 = arith.constant dense<0.000000e+00> : vector<2x256xf32>
    %394 = tpu.matmul %391, %393, %cst_289 {dimension_numbers = #tpu.dot_dimension_numbers<[1], [0], [0], [1], [0, 0, 1, 1], [], []>} : vector<2x128xf32>, vector<128x256xf32>, vector<2x256xf32> -> vector<2x256xf32>
    %395 = arith.addf %373, %394 : vector<2x256xf32>
    %c6 = arith.constant 6 : index
    %c0_290 = arith.constant 0 : index
    %c0_291 = arith.constant 0 : index
    %396 = vector.load %arg13[%c6, %c0_290, %c0_291] : memref<8x128x128xf32, #tpu.memory_space<vmem>>, vector<1x128x128xf32>
    %397 = vector.shape_cast %396 : vector<1x128x128xf32> to vector<128x128xf32>
    %cst_292 = arith.constant dense<0.000000e+00> : vector<2x128xf32>
    %398 = tpu.matmul %259, %397, %cst_292 {dimension_numbers = #tpu.dot_dimension_numbers<[1], [0], [0], [1], [0, 0, 1, 1], [], []>} : vector<2x128xf32>, vector<128x128xf32>, vector<2x128xf32> -> vector<2x128xf32>
    %c6_293 = arith.constant 6 : index
    %c0_294 = arith.constant 0 : index
    %c0_295 = arith.constant 0 : index
    %399 = vector.load %arg14[%c6_293, %c0_294, %c0_295] : memref<8x1x128xf32, #tpu.memory_space<vmem>>, vector<1x1x128xf32>
    %400 = vector.shape_cast %399 : vector<1x1x128xf32> to vector<1x128xf32>
    %401 = vector.broadcast %400 : vector<1x128xf32> to vector<2x128xf32>
    %402 = arith.addf %398, %401 : vector<2x128xf32>
    %cst_296 = arith.constant 0.000000e+00 : f32
    %403 = vector.broadcast %cst_296 : f32 to vector<2x128xf32>
    %404 = arith.maximumf %402, %403 : vector<2x128xf32>
    %c6_297 = arith.constant 6 : index
    %c0_298 = arith.constant 0 : index
    %c0_299 = arith.constant 0 : index
    %405 = vector.load %arg15[%c6_297, %c0_298, %c0_299] : memref<8x128x128xf32, #tpu.memory_space<vmem>>, vector<1x128x128xf32>
    %406 = vector.shape_cast %405 : vector<1x128x128xf32> to vector<128x128xf32>
    %cst_300 = arith.constant dense<0.000000e+00> : vector<2x128xf32>
    %407 = tpu.matmul %404, %406, %cst_300 {dimension_numbers = #tpu.dot_dimension_numbers<[1], [0], [0], [1], [0, 0, 1, 1], [], []>} : vector<2x128xf32>, vector<128x128xf32>, vector<2x128xf32> -> vector<2x128xf32>
    %c6_301 = arith.constant 6 : index
    %c0_302 = arith.constant 0 : index
    %c0_303 = arith.constant 0 : index
    %408 = vector.load %arg16[%c6_301, %c0_302, %c0_303] : memref<8x1x128xf32, #tpu.memory_space<vmem>>, vector<1x1x128xf32>
    %409 = vector.shape_cast %408 : vector<1x1x128xf32> to vector<1x128xf32>
    %410 = vector.broadcast %409 : vector<1x128xf32> to vector<2x128xf32>
    %411 = arith.addf %407, %410 : vector<2x128xf32>
    %cst_304 = arith.constant 0.000000e+00 : f32
    %412 = vector.broadcast %cst_304 : f32 to vector<2x128xf32>
    %413 = arith.maximumf %411, %412 : vector<2x128xf32>
    %c6_305 = arith.constant 6 : index
    %c0_306 = arith.constant 0 : index
    %c0_307 = arith.constant 0 : index
    %414 = vector.load %arg17[%c6_305, %c0_306, %c0_307] : memref<8x128x256xf32, #tpu.memory_space<vmem>>, vector<1x128x256xf32>
    %415 = vector.shape_cast %414 : vector<1x128x256xf32> to vector<128x256xf32>
    %cst_308 = arith.constant dense<0.000000e+00> : vector<2x256xf32>
    %416 = tpu.matmul %413, %415, %cst_308 {dimension_numbers = #tpu.dot_dimension_numbers<[1], [0], [0], [1], [0, 0, 1, 1], [], []>} : vector<2x128xf32>, vector<128x256xf32>, vector<2x256xf32> -> vector<2x256xf32>
    %417 = arith.addf %395, %416 : vector<2x256xf32>
    %c7 = arith.constant 7 : index
    %c0_309 = arith.constant 0 : index
    %c0_310 = arith.constant 0 : index
    %418 = vector.load %arg13[%c7, %c0_309, %c0_310] : memref<8x128x128xf32, #tpu.memory_space<vmem>>, vector<1x128x128xf32>
    %419 = vector.shape_cast %418 : vector<1x128x128xf32> to vector<128x128xf32>
    %cst_311 = arith.constant dense<0.000000e+00> : vector<2x128xf32>
    %420 = tpu.matmul %259, %419, %cst_311 {dimension_numbers = #tpu.dot_dimension_numbers<[1], [0], [0], [1], [0, 0, 1, 1], [], []>} : vector<2x128xf32>, vector<128x128xf32>, vector<2x128xf32> -> vector<2x128xf32>
    %c7_312 = arith.constant 7 : index
    %c0_313 = arith.constant 0 : index
    %c0_314 = arith.constant 0 : index
    %421 = vector.load %arg14[%c7_312, %c0_313, %c0_314] : memref<8x1x128xf32, #tpu.memory_space<vmem>>, vector<1x1x128xf32>
    %422 = vector.shape_cast %421 : vector<1x1x128xf32> to vector<1x128xf32>
    %423 = vector.broadcast %422 : vector<1x128xf32> to vector<2x128xf32>
    %424 = arith.addf %420, %423 : vector<2x128xf32>
    %cst_315 = arith.constant 0.000000e+00 : f32
    %425 = vector.broadcast %cst_315 : f32 to vector<2x128xf32>
    %426 = arith.maximumf %424, %425 : vector<2x128xf32>
    %c7_316 = arith.constant 7 : index
    %c0_317 = arith.constant 0 : index
    %c0_318 = arith.constant 0 : index
    %427 = vector.load %arg15[%c7_316, %c0_317, %c0_318] : memref<8x128x128xf32, #tpu.memory_space<vmem>>, vector<1x128x128xf32>
    %428 = vector.shape_cast %427 : vector<1x128x128xf32> to vector<128x128xf32>
    %cst_319 = arith.constant dense<0.000000e+00> : vector<2x128xf32>
    %429 = tpu.matmul %426, %428, %cst_319 {dimension_numbers = #tpu.dot_dimension_numbers<[1], [0], [0], [1], [0, 0, 1, 1], [], []>} : vector<2x128xf32>, vector<128x128xf32>, vector<2x128xf32> -> vector<2x128xf32>
    %c7_320 = arith.constant 7 : index
    %c0_321 = arith.constant 0 : index
    %c0_322 = arith.constant 0 : index
    %430 = vector.load %arg16[%c7_320, %c0_321, %c0_322] : memref<8x1x128xf32, #tpu.memory_space<vmem>>, vector<1x1x128xf32>
    %431 = vector.shape_cast %430 : vector<1x1x128xf32> to vector<1x128xf32>
    %432 = vector.broadcast %431 : vector<1x128xf32> to vector<2x128xf32>
    %433 = arith.addf %429, %432 : vector<2x128xf32>
    %cst_323 = arith.constant 0.000000e+00 : f32
    %434 = vector.broadcast %cst_323 : f32 to vector<2x128xf32>
    %435 = arith.maximumf %433, %434 : vector<2x128xf32>
    %c7_324 = arith.constant 7 : index
    %c0_325 = arith.constant 0 : index
    %c0_326 = arith.constant 0 : index
    %436 = vector.load %arg17[%c7_324, %c0_325, %c0_326] : memref<8x128x256xf32, #tpu.memory_space<vmem>>, vector<1x128x256xf32>
    %437 = vector.shape_cast %436 : vector<1x128x256xf32> to vector<128x256xf32>
    %cst_327 = arith.constant dense<0.000000e+00> : vector<2x256xf32>
    %438 = tpu.matmul %435, %437, %cst_327 {dimension_numbers = #tpu.dot_dimension_numbers<[1], [0], [0], [1], [0, 0, 1, 1], [], []>} : vector<2x128xf32>, vector<128x256xf32>, vector<2x256xf32> -> vector<2x256xf32>
    %439 = arith.addf %417, %438 : vector<2x256xf32>
    %c0_328 = arith.constant 0 : index
    %c0_329 = arith.constant 0 : index
    %440 = vector.load %arg19[%c0_328, %c0_329] : memref<2x256xf32, #tpu.memory_space<vmem>>, vector<2x256xf32>
    tpu.vector_store %arg19[%c0_328, %c0_329], %439 {strides = array<i32>} : memref<2x256xf32, #tpu.memory_space<vmem>>, vector<2x256xf32>,
    return
  }
}

</mosaic_0001>

<llo_original>
// kernel: tile.9
$region0: #{tile.9}
  %s0 = inlined_call_operand.vmem [shape: f32[2,5,128], index: 0, kind: input, shape index: {}]
  %s1 = inlined_call_operand.vmem [shape: f32[10,128], index: 1, kind: output, shape index: {}]
  %v2 = vld [vmem:[%s0] sm:$0x1f]
  %3 = vst [vmem:[%s1] sm:$0x1f] %v2
  %s4 = scalar_lea.vmem %s0, 8
  %v5 = vld [vmem:[%s4] sm:$0x1f]
  %s6 = scalar_lea.vmem %s1, 5
  %7 = vst [vmem:[%s6] sm:$0x1f] %v5

// kernel: forward.1
$region0: #{forward.1}
  #allocation0 [shape = 'u32[]', space=smem, size = 0x4, offset = 0x4, fixed_abs, tag = 'smem constant byte address 0x4 - core index']
  #allocation1 [shape = 'u32[72,128]{1,0:T(1,128)}', space=vmem, size = 0x9000, scoped, tag = 'internal scratch']
  %s0 = inlined_call_operand.vmem [shape: f32[10,256], index: 0, kind: input, shape index: {}]
  %s1 = inlined_call_operand.vmem [shape: f32[10,128], index: 1, kind: input, shape index: {}]
  %s2 = inlined_call_operand.vmem [shape: f32[10,10], index: 2, kind: input, shape index: {}]
  %s3 = inlined_call_operand.vmem [shape: f32[256,128], index: 3, kind: input, shape index: {}]
  %s4 = inlined_call_operand.vmem [shape: f32[2,2,128,64], index: 4, kind: input, shape index: {}]
  %s5 = inlined_call_operand.vmem [shape: f32[2,2,128,64], index: 5, kind: input, shape index: {}]
  %s6 = inlined_call_operand.vmem [shape: f32[2,2,128,64], index: 6, kind: input, shape index: {}]
  %s7 = inlined_call_operand.vmem [shape: f32[2,2,64,128], index: 7, kind: input, shape index: {}]
  %s8 = inlined_call_operand.vmem [shape: f32[2,1,128], index: 8, kind: input, shape index: {}]
  %s9 = inlined_call_operand.vmem [shape: f32[2,1,128], index: 9, kind: input, shape index: {}]
  %s10 = inlined_call_operand.vmem [shape: f32[2,128,512], index: 10, kind: input, shape index: {}]
  %s11 = inlined_call_operand.hbm [shape: f32[2,512,128], index: 11, kind: input, shape index: {}]
  %s12 = inlined_call_operand.vmem [shape: f32[1,128], index: 12, kind: input, shape index: {}]
  %s13 = inlined_call_operand.hbm [shape: f32[8,128,128], index: 13, kind: input, shape index: {}]
  %s14 = inlined_call_operand.vmem [shape: f32[8,1,128], index: 14, kind: input, shape index: {}]
  %s15 = inlined_call_operand.hbm [shape: f32[8,128,128], index: 15, kind: input, shape index: {}]
  %s16 = inlined_call_operand.vmem [shape: f32[8,1,128], index: 16, kind: input, shape index: {}]
  %s17 = inlined_call_operand.hbm [shape: f32[8,128,256], index: 17, kind: input, shape index: {}]
  %s18 = inlined_call_operand.vmem [shape: f32[1,256], index: 18, kind: input, shape index: {}]
  %s19 = inlined_call_operand.vmem [shape: f32[2,256], index: 19, kind: output, shape index: {}]
  %s20 = sld [smem:[#allocation0]]
  $region102: #{forward.1} parent=0
    _
  %s22 = ssub.s32 1, %s20
  %s23 = scalar_select 0, %s22, %s20
  $region1: #{forward.1} parent=0
    #allocation2 [shape = 'u8[524288]{0}', space=vmem, size = 0x80000, scoped, tag = 'input window, operand 11, single buffered']
    #allocation3 [shape = 's32[1]{0}', space=sflag, size = 0x4, scoped, tag = 'scoped memory for forward.1']
    #allocation4 [shape = 'u8[524288]{0}', space=vmem, size = 0x80000, scoped, tag = 'input window, operand 13, single buffered']
    #allocation5 [shape = 's32[1]{0}', space=sflag, size = 0x4, scoped, tag = 'scoped memory for forward.1']
    #allocation6 [shape = 'u8[524288]{0}', space=vmem, size = 0x80000, scoped, tag = 'input window, operand 15, single buffered']
    #allocation7 [shape = 'u8[1048576]{0}', space=vmem, size = 0x100000, scoped, tag = 'input window, operand 17, single buffered']
    #allocation8 [shape = 's32[1]{0}', space=sflag, size = 0x4, scoped, tag = 'scoped memory for forward.1']
    %24 = vsyncpa [#allocation3], 0
    %25 = vsyncpa [#allocation5], 0
    %26 = vsyncpa [#allocation8], 0
    // Predicated region
    $region2: #{forward.1} parent=1 // pred_check
      _
    $region3: #{forward.1} parent=1 // pred_check_branch
      %28 = sbr.rel (0) target = $region5
    $region4: #{forward.1} parent=1 // pred_region
      _
    $region5: #{forward.1} parent=1 // pred_fallthru
      _
    // Predicated region
    $region6: #{forward.1} parent=1 // pred_check
      _
    $region7: #{forward.1} parent=1 // pred_check_branch
      %30 = sbr.rel (0) target = $region9
    $region8: #{forward.1} parent=1 // pred_region
      _
    $region9: #{forward.1} parent=1 // pred_fallthru
      _
    // Predicated region
    $region10: #{forward.1} parent=1 // pred_check
      _
    $region11: #{forward.1} parent=1 // pred_check_branch
      %32 = sbr.rel (0) target = $region13
    $region12: #{forward.1} parent=1 // pred_region
      _
    $region13: #{forward.1} parent=1 // pred_fallthru
      _
    // Predicated region
    $region14: #{forward.1} parent=1 // pred_check
      _
    $region15: #{forward.1} parent=1 // pred_check_branch
      %34 = sbr.rel (0) target = $region17
    $region16: #{forward.1} parent=1 // pred_region
      _
    $region17: #{forward.1} parent=1 // pred_fallthru
      _
    // Predicated region
    $region18: #{forward.1} parent=1 // pred_check
      _
    $region19: #{forward.1} parent=1 // pred_check_branch
      %36 = sbr.rel (0) target = $region21
    $region20: #{forward.1} parent=1 // pred_region
      _
    $region21: #{forward.1} parent=1 // pred_fallthru
      _
    // Predicated region
    $region22: #{forward.1} parent=1 // pred_check
      _
    $region23: #{forward.1} parent=1 // pred_check_branch
      %38 = sbr.rel (0) target = $region25
    $region24: #{forward.1} parent=1 // pred_region
      _
    $region25: #{forward.1} parent=1 // pred_fallthru
      _
    // Predicated region
    $region26: #{forward.1} parent=1 // pred_check
      _
    $region27: #{forward.1} parent=1 // pred_check_branch
      %40 = sbr.rel (0) target = $region29
    $region28: #{forward.1} parent=1 // pred_region
      _
    $region29: #{forward.1} parent=1 // pred_fallthru
      _
    // Predicated region
    $region30: #{forward.1} parent=1 // pred_check
      _
    $region31: #{forward.1} parent=1 // pred_check_branch
      %42 = sbr.rel (0) target = $region33
    $region32: #{forward.1} parent=1 // pred_region
      _
    $region33: #{forward.1} parent=1 // pred_fallthru
      _
    // Predicated region
    $region34: #{forward.1} parent=1 // pred_check
      _
    $region35: #{forward.1} parent=1 // pred_check_branch
      %44 = sbr.rel (0) target = $region37
    $region36: #{forward.1} parent=1 // pred_region
      _
    $region37: #{forward.1} parent=1 // pred_fallthru
      _
    // Predicated region
    $region38: #{forward.1} parent=1 // pred_check
      _
    $region39: #{forward.1} parent=1 // pred_check_branch
      %46 = sbr.rel (0) target = $region41
    $region40: #{forward.1} parent=1 // pred_region
      _
    $region41: #{forward.1} parent=1 // pred_fallthru
      _
    // Predicated region
    $region42: #{forward.1} parent=1 // pred_check
      _
    $region43: #{forward.1} parent=1 // pred_check_branch
      %48 = sbr.rel (0) target = $region45
    $region44: #{forward.1} parent=1 // pred_region
      _
    $region45: #{forward.1} parent=1 // pred_fallthru
      _
    // Predicated region
    $region46: #{forward.1} parent=1 // pred_check
      _
    $region47: #{forward.1} parent=1 // pred_check_branch
      %50 = sbr.rel (0) target = $region49
    $region48: #{forward.1} parent=1 // pred_region
      %52 = vsyncadd [#allocation3], 0
      %s53 = sshll.u32 %s11, 4
      %s54 = int_to_ptr.hbm [resolvable:$true] %s53
      %s55 = sshll.u32 [#allocation2], 4
      %s56 = int_to_ptr.vmem [resolvable:$true] %s55
      %61 = dma.hbm_to_vmem [thread:$0]  %s54, 16384, %s56, [#allocation3], 128, 128, 8
    $region49: #{forward.1} parent=1 // pred_fallthru
      _
    // Predicated region
    $region50: #{forward.1} parent=1 // pred_check
      _
    $region51: #{forward.1} parent=1 // pred_check_branch
      %63 = sbr.rel (0) target = $region53
    $region52: #{forward.1} parent=1 // pred_region
      _
    $region53: #{forward.1} parent=1 // pred_fallthru
      _
    // Predicated region
    $region54: #{forward.1} parent=1 // pred_check
      _
    $region55: #{forward.1} parent=1 // pred_check_branch
      %65 = sbr.rel (0) target = $region57
    $region56: #{forward.1} parent=1 // pred_region
      %67 = vsyncadd [#allocation5], 0
      %s68 = sshll.u32 %s13, 4
      %s69 = int_to_ptr.hbm [resolvable:$true] %s68
      %s70 = sshll.u32 [#allocation4], 4
      %s71 = int_to_ptr.vmem [resolvable:$true] %s70
      %76 = dma.hbm_to_vmem [thread:$0]  %s69, 16384, %s71, [#allocation5], 128, 128, 8
    $region57: #{forward.1} parent=1 // pred_fallthru
      _
    // Predicated region
    $region58: #{forward.1} parent=1 // pred_check
      _
    $region59: #{forward.1} parent=1 // pred_check_branch
      %78 = sbr.rel (0) target = $region61
    $region60: #{forward.1} parent=1 // pred_region
      _
    $region61: #{forward.1} parent=1 // pred_fallthru
      _
    // Predicated region
    $region62: #{forward.1} parent=1 // pred_check
      _
    $region63: #{forward.1} parent=1 // pred_check_branch
      %80 = sbr.rel (0) target = $region65
    $region64: #{forward.1} parent=1 // pred_region
      %82 = vsyncadd [#allocation5], 0
      %s83 = sshll.u32 %s15, 4
      %s84 = int_to_ptr.hbm [resolvable:$true] %s83
      %s85 = sshll.u32 [#allocation6], 4
      %s86 = int_to_ptr.vmem [resolvable:$true] %s85
      %91 = dma.hbm_to_vmem [thread:$0]  %s84, 16384, %s86, [#allocation5], 128, 128, 8
    $region65: #{forward.1} parent=1 // pred_fallthru
      _
    // Predicated region
    $region66: #{forward.1} parent=1 // pred_check
      _
    $region67: #{forward.1} parent=1 // pred_check_branch
      %93 = sbr.rel (0) target = $region69
    $region68: #{forward.1} parent=1 // pred_region
      _
    $region69: #{forward.1} parent=1 // pred_fallthru
      _
    // Predicated region
    $region70: #{forward.1} parent=1 // pred_check
      _
    $region71: #{forward.1} parent=1 // pred_check_branch
      %95 = sbr.rel (0) target = $region73
    $region72: #{forward.1} parent=1 // pred_region
      %97 = vsyncadd [#allocation8], 0
      %s98 = sshll.u32 %s17, 4
      %s99 = int_to_ptr.hbm [resolvable:$true] %s98
      %s100 = sshll.u32 [#allocation7], 4
      %s101 = int_to_ptr.vmem [resolvable:$true] %s100
      %106 = dma.hbm_to_vmem [thread:$0]  %s99, 32768, %s101, [#allocation8], 256, 256, 16
    $region73: #{forward.1} parent=1 // pred_fallthru
      _
    // Predicated region
    $region74: #{forward.1} parent=1 // pred_check
      _
    $region75: #{forward.1} parent=1 // pred_check_branch
      %108 = sbr.rel (0) target = $region77
    $region76: #{forward.1} parent=1 // pred_region
      _
    $region77: #{forward.1} parent=1 // pred_fallthru
      _
    // Predicated region
    $region78: #{forward.1} parent=1 // pred_check
      _
    $region79: #{forward.1} parent=1 // pred_check_branch
      %110 = sbr.rel (0) target = $region81
    $region80: #{forward.1} parent=1 // pred_region
      %112 = dma.done [#allocation3], 16384
    $region81: #{forward.1} parent=1 // pred_fallthru
      _
    // Predicated region
    $region82: #{forward.1} parent=1 // pred_check
      _
    $region83: #{forward.1} parent=1 // pred_check_branch
      %114 = sbr.rel (0) target = $region85
    $region84: #{forward.1} parent=1 // pred_region
      %116 = dma.done [#allocation5], 16384
    $region85: #{forward.1} parent=1 // pred_fallthru
      _
    // Predicated region
    $region86: #{forward.1} parent=1 // pred_check
      _
    $region87: #{forward.1} parent=1 // pred_check_branch
      %118 = sbr.rel (0) target = $region89
    $region88: #{forward.1} parent=1 // pred_region
      %120 = dma.done [#allocation5], 16384
    $region89: #{forward.1} parent=1 // pred_fallthru
      _
    // Predicated region
    $region90: #{forward.1} parent=1 // pred_check
      _
    $region91: #{forward.1} parent=1 // pred_check_branch
      %122 = sbr.rel (0) target = $region93
    $region92: #{forward.1} parent=1 // pred_region
      %124 = dma.done [#allocation8], 32768
    $region93: #{forward.1} parent=1 // pred_fallthru
      _
    %v125 = vld [vmem:[%s0] sm:$0xff]
    %v126 = vld [vmem:[%s0 + $0x8] sm:$0xff]
    %v127 = vld [vmem:[%s0 + $0x10] sm:$0x3]
    %v128 = vld [vmem:[%s0 + $0x18] sm:$0x3]
    %v129 = vld [vmem:[%s3] sm:$0xff]
    %v130 = vld [vmem:[%s3 + $0x8] sm:$0xff]
    %v131 = vld [vmem:[%s3 + $0x10] sm:$0xff]
    %v132 = vld [vmem:[%s3 + $0x18] sm:$0xff]
    %v133 = vld [vmem:[%s3 + $0x20] sm:$0xff]
    %v134 = vld [vmem:[%s3 + $0x28] sm:$0xff]
    %v135 = vld [vmem:[%s3 + $0x30] sm:$0xff]
    %v136 = vld [vmem:[%s3 + $0x38] sm:$0xff]
    %v137 = vld [vmem:[%s3 + $0x40] sm:$0xff]
    %v138 = vld [vmem:[%s3 + $0x48] sm:$0xff]
    %v139 = vld [vmem:[%s3 + $0x50] sm:$0xff]
    %v140 = vld [vmem:[%s3 + $0x58] sm:$0xff]
    %v141 = vld [vmem:[%s3 + $0x60] sm:$0xff]
    %v142 = vld [vmem:[%s3 + $0x68] sm:$0xff]
    %v143 = vld [vmem:[%s3 + $0x70] sm:$0xff]
    %v144 = vld [vmem:[%s3 + $0x78] sm:$0xff]
    %v145 = vld [vmem:[%s3 + $0x80] sm:$0xff]
    %v146 = vld [vmem:[%s3 + $0x88] sm:$0xff]
    %v147 = vld [vmem:[%s3 + $0x90] sm:$0xff]
    %v148 = vld [vmem:[%s3 + $0x98] sm:$0xff]
    %v149 = vld [vmem:[%s3 + $0xa0] sm:$0xff]
    %v150 = vld [vmem:[%s3 + $0xa8] sm:$0xff]
    %v151 = vld [vmem:[%s3 + $0xb0] sm:$0xff]
    %v152 = vld [vmem:[%s3 + $0xb8] sm:$0xff]
    %v153 = vld [vmem:[%s3 + $0xc0] sm:$0xff]
    %v154 = vld [vmem:[%s3 + $0xc8] sm:$0xff]
    %v155 = vld [vmem:[%s3 + $0xd0] sm:$0xff]
    %v156 = vld [vmem:[%s3 + $0xd8] sm:$0xff]
    %v157 = vld [vmem:[%s3 + $0xe0] sm:$0xff]
    %v158 = vld [vmem:[%s3 + $0xe8] sm:$0xff]
    %v159 = vld [vmem:[%s3 + $0xf0] sm:$0xff]
    %v160 = vld [vmem:[%s3 + $0xf8] sm:$0xff]
    %v161 = vld [vmem:[%s1] sm:$0xff]
    %v162 = vld [vmem:[%s1 + $0x8] sm:$0x3]
    %163 = vmatpush.msra.mxu0 %v144
    %164 = vmatpush.msra.mxu0 %v143
    %165 = vmatpush.msra.mxu0 %v142
    %166 = vmatpush.msra.mxu0 %v141
    %167 = vmatpush.msra.mxu0 %v140
    %168 = vmatpush.msra.mxu0 %v139
    %169 = vmatpush.msra.mxu0 %v138
    %170 = vmatpush.msra.mxu0 %v137
    %171 = vmatpush.msra.mxu0 %v136
    %172 = vmatpush.msra.mxu0 %v135
    %173 = vmatpush.msra.mxu0 %v134
    %174 = vmatpush.msra.mxu0 %v133
    %175 = vmatpush.msra.mxu0 %v132
    %176 = vmatpush.msra.mxu0 %v131
    %177 = vmatpush.msra.mxu0 %v130
    %178 = vmatpush.msra.mxu0 %v129
    %179 = vmatmul.f32.gmra.mxu0 %v125
    %v180 = vpop.f32.mrf.mxu0
    %v181 = vadd.f32 %v161, %v180
    %182 = vmatmul.f32.gmra.mxu0 %v127
    %v183 = vpop.f32.mrf.mxu0
    %v184 = vadd.f32 %v162, %v183
    %185 = vdwg.mxu0
    %186 = vmatpush.msra.mxu0 %v160
    %187 = vmatpush.msra.mxu0 %v159
    %188 = vmatpush.msra.mxu0 %v158
    %189 = vmatpush.msra.mxu0 %v157
    %190 = vmatpush.msra.mxu0 %v156
    %191 = vmatpush.msra.mxu0 %v155
    %192 = vmatpush.msra.mxu0 %v154
    %193 = vmatpush.msra.mxu0 %v153
    %194 = vmatpush.msra.mxu0 %v152
    %195 = vmatpush.msra.mxu0 %v151
    %196 = vmatpush.msra.mxu0 %v150
    %197 = vmatpush.msra.mxu0 %v149
    %198 = vmatpush.msra.mxu0 %v148
    %199 = vmatpush.msra.mxu0 %v147
    %200 = vmatpush.msra.mxu0 %v146
    %201 = vmatpush.msra.mxu0 %v145
    %202 = vmatmul.f32.gmra.mxu0 %v126
    %v203 = vpop.f32.mrf.mxu0
    %v204 = vadd.f32 %v181, %v203
    %205 = vmatmul.f32.gmra.mxu0 %v128
    %v206 = vpop.f32.mrf.mxu0
    %v207 = vadd.f32 %v184, %v206
    %208 = vdwg.mxu0
    %v209 = vld [vmem:[%s2] sm:$0xff]
    %v210 = vld [vmem:[%s2 + $0x8] sm:$0x3]
    %v211 = vld [vmem:[%s8] sm:$0x1]
    %212 = vadd.xlane.f32.xlu0 %v204
    %v213 = vpop.xlane.xlu0 %212
    %vm214 = vcmask 1041408
    %v215 = vsel %vm214, %v207, 0.0
    %216 = vadd.xlane.f32.xlu0 %v215
    %v217 = vpop.xlane.xlu0 %216
    %v218 = vrcp.pop 128.0
    %v219 = vmul.f32 128.0, %v218
    %v220 = vsub.f32 1.0, %v219
    %v221 = vmul.f32 %v218, %v220
    %v222 = vadd.f32 %v218, %v221
    %vm223 = vweird.f32 %v218
    %v224 = vsel %vm223, %v218, %v222
    %v225 = vmul.f32 %v213, %v224
    %v226 = vmul.f32 %v217, %v224
    %v227 = vsub.f32 %v204, %v225
    %v228 = vsub.f32 %v207, %v226
    %v229 = vmul.f32 %v227, %v227
    %v230 = vmul.f32 %v228, %v228
    %231 = vadd.xlane.f32.xlu0 %v229
    %v232 = vpop.xlane.xlu0 %231
    %v233 = vsel %vm214, %v230, 0.0
    %234 = vadd.xlane.f32.xlu0 %v233
    %v235 = vpop.xlane.xlu0 %234
    %v236 = vmul.f32 %v232, %v224
    %v237 = vmul.f32 %v235, %v224
    %v238 = vadd.f32 %v236, 1e-05
    %v239 = vadd.f32 %v237, 1e-05
    %v240 = vrsqrt.pop %v238
    %v241 = vmul.f32 %v240, %v238
    %v242 = vmul.f32 %v241, %v240
    %v243 = vmul.f32 0.5, %v242
    %v244 = vsub.f32 1.5, %v243
    %v245 = vmul.f32 %v240, %v244
    %vm246 = vweird.f32 %v238
    %vm247 = vweird.f32 %v240
    %vm248 = vmor %vm246, %vm247
    %v249 = vsel %vm248, %v240, %v245
    %v250 = vrsqrt.pop %v239
    %v251 = vmul.f32 %v250, %v239
    %v252 = vmul.f32 %v251, %v250
    %v253 = vmul.f32 0.5, %v252
    %v254 = vsub.f32 1.5, %v253
    %v255 = vmul.f32 %v250, %v254
    %vm256 = vweird.f32 %v239
    %vm257 = vweird.f32 %v250
    %vm258 = vmor %vm256, %vm257
    %v259 = vsel %vm258, %v250, %v255
    %v260 = vmul.f32 %v227, %v249
    %v261 = vmul.f32 %v228, %v259
    %v263 = vperm.slane %v211, 0
    %v265 = vmul.f32 %v260, %v263
    %v266 = vmul.f32 %v261, %v263
    %v267 = vld [vmem:[%s4] sm:$0xff]
    %v268 = vld [vmem:[%s4 + $0x8] sm:$0xff]
    %v269 = vld [vmem:[%s4 + $0x10] sm:$0xff]
    %v270 = vld [vmem:[%s4 + $0x18] sm:$0xff]
    %v271 = vld [vmem:[%s4 + $0x20] sm:$0xff]
    %v272 = vld [vmem:[%s4 + $0x28] sm:$0xff]
    %v273 = vld [vmem:[%s4 + $0x30] sm:$0xff]
    %v274 = vld [vmem:[%s4 + $0x38] sm:$0xff]
    %v275 = vld [vmem:[%s4 + $0x40] sm:$0xff]
    %v276 = vld [vmem:[%s4 + $0x48] sm:$0xff]
    %v277 = vld [vmem:[%s4 + $0x50] sm:$0xff]
    %v278 = vld [vmem:[%s4 + $0x58] sm:$0xff]
    %v279 = vld [vmem:[%s4 + $0x60] sm:$0xff]
    %v280 = vld [vmem:[%s4 + $0x68] sm:$0xff]
    %v281 = vld [vmem:[%s4 + $0x70] sm:$0xff]
    %v282 = vld [vmem:[%s4 + $0x78] sm:$0xff]
    %283 = vmatpush.msra.mxu0 %v282
    %284 = vmatpush.msra.mxu0 %v281
    %285 = vmatpush.msra.mxu0 %v280
    %286 = vmatpush.msra.mxu0 %v279
    %287 = vmatpush.msra.mxu0 %v278
    %288 = vmatpush.msra.mxu0 %v277
    %289 = vmatpush.msra.mxu0 %v276
    %290 = vmatpush.msra.mxu0 %v275
    %291 = vmatpush.msra.mxu0 %v274
    %292 = vmatpush.msra.mxu0 %v273
    %293 = vmatpush.msra.mxu0 %v272
    %294 = vmatpush.msra.mxu0 %v271
    %295 = vmatpush.msra.mxu0 %v270
    %296 = vmatpush.msra.mxu0 %v269
    %297 = vmatpush.msra.mxu0 %v268
    %298 = vmatpush.msra.mxu0 %v267
    %299 = vmatmul.f32.gmra.mxu0 %v265
    %v300 = vpop.f32.mrf.mxu0
    %v301 = vadd.f32 0.0, %v300
    %302 = vmatmul.f32.gmra.mxu0 %v266
    %v303 = vpop.f32.mrf.mxu0
    %v304 = vadd.f32 0.0, %v303
    %305 = vdwg.mxu0
    %v306 = vld [vmem:[%s5] sm:$0xff]
    %v307 = vld [vmem:[%s5 + $0x8] sm:$0xff]
    %v308 = vld [vmem:[%s5 + $0x10] sm:$0xff]
    %v309 = vld [vmem:[%s5 + $0x18] sm:$0xff]
    %v310 = vld [vmem:[%s5 + $0x20] sm:$0xff]
    %v311 = vld [vmem:[%s5 + $0x28] sm:$0xff]
    %v312 = vld [vmem:[%s5 + $0x30] sm:$0xff]
    %v313 = vld [vmem:[%s5 + $0x38] sm:$0xff]
    %v314 = vld [vmem:[%s5 + $0x40] sm:$0xff]
    %v315 = vld [vmem:[%s5 + $0x48] sm:$0xff]
    %v316 = vld [vmem:[%s5 + $0x50] sm:$0xff]
    %v317 = vld [vmem:[%s5 + $0x58] sm:$0xff]
    %v318 = vld [vmem:[%s5 + $0x60] sm:$0xff]
    %v319 = vld [vmem:[%s5 + $0x68] sm:$0xff]
    %v320 = vld [vmem:[%s5 + $0x70] sm:$0xff]
    %v321 = vld [vmem:[%s5 + $0x78] sm:$0xff]
    %322 = vmatpush.msra.mxu0 %v321
    %323 = vmatpush.msra.mxu0 %v320
    %324 = vmatpush.msra.mxu0 %v319
    %325 = vmatpush.msra.mxu0 %v318
    %326 = vmatpush.msra.mxu0 %v317
    %327 = vmatpush.msra.mxu0 %v316
    %328 = vmatpush.msra.mxu0 %v315
    %329 = vmatpush.msra.mxu0 %v314
    %330 = vmatpush.msra.mxu0 %v313
    %331 = vmatpush.msra.mxu0 %v312
    %332 = vmatpush.msra.mxu0 %v311
    %333 = vmatpush.msra.mxu0 %v310
    %334 = vmatpush.msra.mxu0 %v309
    %335 = vmatpush.msra.mxu0 %v308
    %336 = vmatpush.msra.mxu0 %v307
    %337 = vmatpush.msra.mxu0 %v306
    %338 = vmatmul.f32.gmra.mxu0 %v265
    %v339 = vpop.f32.mrf.mxu0
    %v340 = vadd.f32 0.0, %v339
    %341 = vmatmul.f32.gmra.mxu0 %v266
    %v342 = vpop.f32.mrf.mxu0
    %v343 = vadd.f32 0.0, %v342
    %344 = vdwg.mxu0
    %v345 = vld [vmem:[%s6] sm:$0xff]
    %v346 = vld [vmem:[%s6 + $0x8] sm:$0xff]
    %v347 = vld [vmem:[%s6 + $0x10] sm:$0xff]
    %v348 = vld [vmem:[%s6 + $0x18] sm:$0xff]
    %v349 = vld [vmem:[%s6 + $0x20] sm:$0xff]
    %v350 = vld [vmem:[%s6 + $0x28] sm:$0xff]
    %v351 = vld [vmem:[%s6 + $0x30] sm:$0xff]
    %v352 = vld [vmem:[%s6 + $0x38] sm:$0xff]
    %v353 = vld [vmem:[%s6 + $0x40] sm:$0xff]
    %v354 = vld [vmem:[%s6 + $0x48] sm:$0xff]
    %v355 = vld [vmem:[%s6 + $0x50] sm:$0xff]
    %v356 = vld [vmem:[%s6 + $0x58] sm:$0xff]
    %v357 = vld [vmem:[%s6 + $0x60] sm:$0xff]
    %v358 = vld [vmem:[%s6 + $0x68] sm:$0xff]
    %v359 = vld [vmem:[%s6 + $0x70] sm:$0xff]
    %v360 = vld [vmem:[%s6 + $0x78] sm:$0xff]
    %361 = vmatpush.msra.mxu0 %v360
    %362 = vmatpush.msra.mxu0 %v359
    %363 = vmatpush.msra.mxu0 %v358
    %364 = vmatpush.msra.mxu0 %v357
    %365 = vmatpush.msra.mxu0 %v356
    %366 = vmatpush.msra.mxu0 %v355
    %367 = vmatpush.msra.mxu0 %v354
    %368 = vmatpush.msra.mxu0 %v353
    %369 = vmatpush.msra.mxu0 %v352
    %370 = vmatpush.msra.mxu0 %v351
    %371 = vmatpush.msra.mxu0 %v350
    %372 = vmatpush.msra.mxu0 %v349
    %373 = vmatpush.msra.mxu0 %v348
    %374 = vmatpush.msra.mxu0 %v347
    %375 = vmatpush.msra.mxu0 %v346
    %376 = vmatpush.msra.mxu0 %v345
    %377 = vmatmul.f32.gmra.mxu0 %v265
    %v378 = vpop.f32.mrf.mxu0
    %v379 = vadd.f32 0.0, %v378
    %380 = vmatmul.f32.gmra.mxu0 %v266
    %v381 = vpop.f32.mrf.mxu0
    %v382 = vadd.f32 0.0, %v381
    %383 = vdwg.mxu0
    %vm384 = vcmask 523264
    %v386 = vsel %vm384, %v301, 0
    %v389 = vsel %vm384, %v304, 0
    %v392 = vsel %vm384, %v340, 0
    %v395 = vsel %vm384, %v343, 0
    %397 = vmatpush.xpose.msra.mxu0 0.0
    %398 = vmatpush.xpose.msra.mxu0 0.0
    %399 = vmatpush.xpose.msra.mxu0 0.0
    %400 = vmatpush.xpose.msra.mxu0 0.0
    %401 = vmatpush.xpose.msra.mxu0 0.0
    %402 = vmatpush.xpose.msra.mxu0 0.0
    %403 = vmatpush.xpose.msra.mxu0 0.0
    %404 = vmatpush.xpose.msra.mxu0 0.0
    %405 = vmatpush.xpose.msra.mxu0 0.0
    %406 = vmatpush.xpose.msra.mxu0 0.0
    %407 = vmatpush.xpose.msra.mxu0 0.0
    %408 = vmatpush.xpose.msra.mxu0 0.0
    %409 = vmatpush.xpose.msra.mxu0 0.0
    %410 = vmatpush.xpose.msra.mxu0 0.0
    %411 = vmatpush.xpose.msra.mxu0 %v395
    %412 = vmatpush.xpose.msra.mxu0 %v392
    %413 = vmatmul.f32.gmra.mxu0 %v386
    %v414 = vpop.f32.mrf.mxu0
    %v415 = vadd.f32 0.0, %v414
    %416 = vmatmul.f32.gmra.mxu0 %v389
    %v417 = vpop.f32.mrf.mxu0
    %v418 = vadd.f32 0.0, %v417
    %419 = vdwg.mxu0
    %v420 = vmul.f32 %v415, 0.125
    %v421 = vmul.f32 %v418, 0.125
    %v422 = vadd.f32 %v420, %v209
    %v423 = vadd.f32 %v421, %v210
    %vm424 = vcmask 80896
    %v425 = vsel %vm424, %v422, -inf
    %426 = vmax.xlane.f32.xlu0 %v425
    %v427 = vpop.xlane.xlu0 %426
    %vm428 = vcmask 74752
    %v429 = vsel %vm428, %v423, -inf
    %430 = vmax.xlane.f32.xlu0 %v429
    %v431 = vpop.xlane.xlu0 %430
    %v432 = vsub.f32 %v422, %v427
    %v433 = vsub.f32 %v423, %v431
    %v434 = vmul.f32 %v432, 1.442695
    %v435 = vpow.pop %v434
    %v436 = vmul.f32 %v433, 1.442695
    %v437 = vpow.pop %v436
    %v438 = vsel %vm424, %v435, 0.0
    %439 = vadd.xlane.f32.xlu0 %v438
    %v440 = vpop.xlane.xlu0 %439
    %v441 = vsel %vm428, %v437, 0.0
    %442 = vadd.xlane.f32.xlu0 %v441
    %v443 = vpop.xlane.xlu0 %442
    %v444 = vrcp.pop %v440
    %v445 = vmul.f32 %v440, %v444
    %v446 = vsub.f32 1.0, %v445
    %v447 = vmul.f32 %v444, %v446
    %v448 = vadd.f32 %v444, %v447
    %vm449 = vweird.f32 %v440
    %vm450 = vweird.f32 %v444
    %vm451 = vmor %vm449, %vm450
    %v452 = vsel %vm451, %v444, %v448
    %v453 = vand.u32 2147483647, %v440
    %vm454 = vcmp.eq.f32.partialorder %v453, 8.507059e+37
    %v455 = vand.u32 %v440, 2147483648
    %v456 = vor.u32 1.1754944e-38, %v455
    %v457 = vsel %vm454, %v456, %v452
    %v458 = vmul.f32 %v435, %v457
    %v459 = vrcp.pop %v443
    %v460 = vmul.f32 %v443, %v459
    %v461 = vsub.f32 1.0, %v460
    %v462 = vmul.f32 %v459, %v461
    %v463 = vadd.f32 %v459, %v462
    %vm464 = vweird.f32 %v443
    %vm465 = vweird.f32 %v459
    %vm466 = vmor %vm464, %vm465
    %v467 = vsel %vm466, %v459, %v463
    %v468 = vand.u32 2147483647, %v443
    %vm469 = vcmp.eq.f32.partialorder %v468, 8.507059e+37
    %v470 = vand.u32 %v443, 2147483648
    %v471 = vor.u32 1.1754944e-38, %v470
    %v472 = vsel %vm469, %v471, %v467
    %v473 = vmul.f32 %v437, %v472
    %v475 = vsel %vm424, %v458, 0
    %v478 = vsel %vm424, %v473, 0
    %v481 = vsel %vm214, %v382, 0
    %483 = vmatpush.msra.mxu0 0.0
    %484 = vmatpush.msra.mxu0 0.0
    %485 = vmatpush.msra.mxu0 0.0
    %486 = vmatpush.msra.mxu0 0.0
    %487 = vmatpush.msra.mxu0 0.0
    %488 = vmatpush.msra.mxu0 0.0
    %489 = vmatpush.msra.mxu0 0.0
    %490 = vmatpush.msra.mxu0 0.0
    %491 = vmatpush.msra.mxu0 0.0
    %492 = vmatpush.msra.mxu0 0.0
    %493 = vmatpush.msra.mxu0 0.0
    %494 = vmatpush.msra.mxu0 0.0
    %495 = vmatpush.msra.mxu0 0.0
    %496 = vmatpush.msra.mxu0 0.0
    %497 = vmatpush.msra.mxu0 %v481
    %498 = vmatpush.msra.mxu0 %v379
    %499 = vmatmul.f32.gmra.mxu0 %v475
    %v500 = vpop.f32.mrf.mxu0
    %v501 = vadd.f32 0.0, %v500
    %502 = vmatmul.f32.gmra.mxu0 %v478
    %v503 = vpop.f32.mrf.mxu0
    %v504 = vadd.f32 0.0, %v503
    %505 = vdwg.mxu0
    %v506 = vld [vmem:[%s7] sm:$0xff]
    %v507 = vld [vmem:[%s7 + $0x8] sm:$0xff]
    %v508 = vld [vmem:[%s7 + $0x10] sm:$0xff]
    %v509 = vld [vmem:[%s7 + $0x18] sm:$0xff]
    %v510 = vld [vmem:[%s7 + $0x20] sm:$0xff]
    %v511 = vld [vmem:[%s7 + $0x28] sm:$0xff]
    %v512 = vld [vmem:[%s7 + $0x30] sm:$0xff]
    %v513 = vld [vmem:[%s7 + $0x38] sm:$0xff]
    %s514 = scalar_lea.vmem %s4, 128
    %v515 = vld [vmem:[%s514] sm:$0xff]
    %v516 = vld [vmem:[%s514 + $0x8] sm:$0xff]
    %v517 = vld [vmem:[%s514 + $0x10] sm:$0xff]
    %v518 = vld [vmem:[%s514 + $0x18] sm:$0xff]
    %v519 = vld [vmem:[%s514 + $0x20] sm:$0xff]
    %v520 = vld [vmem:[%s514 + $0x28] sm:$0xff]
    %v521 = vld [vmem:[%s514 + $0x30] sm:$0xff]
    %v522 = vld [vmem:[%s514 + $0x38] sm:$0xff]
    %v523 = vld [vmem:[%s514 + $0x40] sm:$0xff]
    %v524 = vld [vmem:[%s514 + $0x48] sm:$0xff]
    %v525 = vld [vmem:[%s514 + $0x50] sm:$0xff]
    %v526 = vld [vmem:[%s514 + $0x58] sm:$0xff]
    %v527 = vld [vmem:[%s514 + $0x60] sm:$0xff]
    %v528 = vld [vmem:[%s514 + $0x68] sm:$0xff]
    %v529 = vld [vmem:[%s514 + $0x70] sm:$0xff]
    %v530 = vld [vmem:[%s514 + $0x78] sm:$0xff]
    %531 = vmatpush.msra.mxu0 %v530
    %532 = vmatpush.msra.mxu0 %v529
    %533 = vmatpush.msra.mxu0 %v528
    %534 = vmatpush.msra.mxu0 %v527
    %535 = vmatpush.msra.mxu0 %v526
    %536 = vmatpush.msra.mxu0 %v525
    %537 = vmatpush.msra.mxu0 %v524
    %538 = vmatpush.msra.mxu0 %v523
    %539 = vmatpush.msra.mxu0 %v522
    %540 = vmatpush.msra.mxu0 %v521
    %541 = vmatpush.msra.mxu0 %v520
    %542 = vmatpush.msra.mxu0 %v519
    %543 = vmatpush.msra.mxu0 %v518
    %544 = vmatpush.msra.mxu0 %v517
    %545 = vmatpush.msra.mxu0 %v516
    %546 = vmatpush.msra.mxu0 %v515
    %547 = vmatmul.f32.gmra.mxu0 %v265
    %v548 = vpop.f32.mrf.mxu0
    %v549 = vadd.f32 0.0, %v548
    %550 = vmatmul.f32.gmra.mxu0 %v266
    %v551 = vpop.f32.mrf.mxu0
    %v552 = vadd.f32 0.0, %v551
    %553 = vdwg.mxu0
    %s554 = scalar_lea.vmem %s5, 128
    %v555 = vld [vmem:[%s554] sm:$0xff]
    %v556 = vld [vmem:[%s554 + $0x8] sm:$0xff]
    %v557 = vld [vmem:[%s554 + $0x10] sm:$0xff]
    %v558 = vld [vmem:[%s554 + $0x18] sm:$0xff]
    %v559 = vld [vmem:[%s554 + $0x20] sm:$0xff]
    %v560 = vld [vmem:[%s554 + $0x28] sm:$0xff]
    %v561 = vld [vmem:[%s554 + $0x30] sm:$0xff]
    %v562 = vld [vmem:[%s554 + $0x38] sm:$0xff]
    %v563 = vld [vmem:[%s554 + $0x40] sm:$0xff]
    %v564 = vld [vmem:[%s554 + $0x48] sm:$0xff]
    %v565 = vld [vmem:[%s554 + $0x50] sm:$0xff]
    %v566 = vld [vmem:[%s554 + $0x58] sm:$0xff]
    %v567 = vld [vmem:[%s554 + $0x60] sm:$0xff]
    %v568 = vld [vmem:[%s554 + $0x68] sm:$0xff]
    %v569 = vld [vmem:[%s554 + $0x70] sm:$0xff]
    %v570 = vld [vmem:[%s554 + $0x78] sm:$0xff]
    %571 = vmatpush.msra.mxu0 %v570
    %572 = vmatpush.msra.mxu0 %v569
    %573 = vmatpush.msra.mxu0 %v568
    %574 = vmatpush.msra.mxu0 %v567
    %575 = vmatpush.msra.mxu0 %v566
    %576 = vmatpush.msra.mxu0 %v565
    %577 = vmatpush.msra.mxu0 %v564
    %578 = vmatpush.msra.mxu0 %v563
    %579 = vmatpush.msra.mxu0 %v562
    %580 = vmatpush.msra.mxu0 %v561
    %581 = vmatpush.msra.mxu0 %v560
    %582 = vmatpush.msra.mxu0 %v559
    %583 = vmatpush.msra.mxu0 %v558
    %584 = vmatpush.msra.mxu0 %v557
    %585 = vmatpush.msra.mxu0 %v556
    %586 = vmatpush.msra.mxu0 %v555
    %587 = vmatmul.f32.gmra.mxu0 %v265
    %v588 = vpop.f32.mrf.mxu0
    %v589 = vadd.f32 0.0, %v588
    %590 = vmatmul.f32.gmra.mxu0 %v266
    %v591 = vpop.f32.mrf.mxu0
    %v592 = vadd.f32 0.0, %v591
    %593 = vdwg.mxu0
    %s594 = scalar_lea.vmem %s6, 128
    %v595 = vld [vmem:[%s594] sm:$0xff]
    %v596 = vld [vmem:[%s594 + $0x8] sm:$0xff]
    %v597 = vld [vmem:[%s594 + $0x10] sm:$0xff]
    %v598 = vld [vmem:[%s594 + $0x18] sm:$0xff]
    %v599 = vld [vmem:[%s594 + $0x20] sm:$0xff]
    %v600 = vld [vmem:[%s594 + $0x28] sm:$0xff]
    %v601 = vld [vmem:[%s594 + $0x30] sm:$0xff]
    %v602 = vld [vmem:[%s594 + $0x38] sm:$0xff]
    %v603 = vld [vmem:[%s594 + $0x40] sm:$0xff]
    %v604 = vld [vmem:[%s594 + $0x48] sm:$0xff]
    %v605 = vld [vmem:[%s594 + $0x50] sm:$0xff]
    %v606 = vld [vmem:[%s594 + $0x58] sm:$0xff]
    %v607 = vld [vmem:[%s594 + $0x60] sm:$0xff]
    %v608 = vld [vmem:[%s594 + $0x68] sm:$0xff]
    %v609 = vld [vmem:[%s594 + $0x70] sm:$0xff]
    %v610 = vld [vmem:[%s594 + $0x78] sm:$0xff]
    %611 = vmatpush.msra.mxu0 %v610
    %612 = vmatpush.msra.mxu0 %v609
    %613 = vmatpush.msra.mxu0 %v608
    %614 = vmatpush.msra.mxu0 %v607
    %615 = vmatpush.msra.mxu0 %v606
    %616 = vmatpush.msra.mxu0 %v605
    %617 = vmatpush.msra.mxu0 %v604
    %618 = vmatpush.msra.mxu0 %v603
    %619 = vmatpush.msra.mxu0 %v602
    %620 = vmatpush.msra.mxu0 %v601
    %621 = vmatpush.msra.mxu0 %v600
    %622 = vmatpush.msra.mxu0 %v599
    %623 = vmatpush.msra.mxu0 %v598
    %624 = vmatpush.msra.mxu0 %v597
    %625 = vmatpush.msra.mxu0 %v596
    %626 = vmatpush.msra.mxu0 %v595
    %627 = vmatmul.f32.gmra.mxu0 %v265
    %v628 = vpop.f32.mrf.mxu0
    %v629 = vadd.f32 0.0, %v628
    %630 = vmatmul.f32.gmra.mxu0 %v266
    %v631 = vpop.f32.mrf.mxu0
    %v632 = vadd.f32 0.0, %v631
    %633 = vdwg.mxu0
    %v635 = vsel %vm384, %v549, 0
    %v638 = vsel %vm384, %v552, 0
    %v641 = vsel %vm384, %v589, 0
    %v644 = vsel %vm384, %v592, 0
    %646 = vmatpush.xpose.msra.mxu0 0.0
    %647 = vmatpush.xpose.msra.mxu0 0.0
    %648 = vmatpush.xpose.msra.mxu0 0.0
    %649 = vmatpush.xpose.msra.mxu0 0.0
    %650 = vmatpush.xpose.msra.mxu0 0.0
    %651 = vmatpush.xpose.msra.mxu0 0.0
    %652 = vmatpush.xpose.msra.mxu0 0.0
    %653 = vmatpush.xpose.msra.mxu0 0.0
    %654 = vmatpush.xpose.msra.mxu0 0.0
    %655 = vmatpush.xpose.msra.mxu0 0.0
    %656 = vmatpush.xpose.msra.mxu0 0.0
    %657 = vmatpush.xpose.msra.mxu0 0.0
    %658 = vmatpush.xpose.msra.mxu0 0.0
    %659 = vmatpush.xpose.msra.mxu0 0.0
    %660 = vmatpush.xpose.msra.mxu0 %v644
    %661 = vmatpush.xpose.msra.mxu0 %v641
    %662 = vmatmul.f32.gmra.mxu0 %v635
    %v663 = vpop.f32.mrf.mxu0
    %v664 = vadd.f32 0.0, %v663
    %665 = vmatmul.f32.gmra.mxu0 %v638
    %v666 = vpop.f32.mrf.mxu0
    %v667 = vadd.f32 0.0, %v666
    %668 = vdwg.mxu0
    %v669 = vmul.f32 %v664, 0.125
    %v670 = vmul.f32 %v667, 0.125
    %v671 = vadd.f32 %v669, %v209
    %v672 = vadd.f32 %v670, %v210
    %v673 = vsel %vm424, %v671, -inf
    %674 = vmax.xlane.f32.xlu0 %v673
    %v675 = vpop.xlane.xlu0 %674
    %v676 = vsel %vm428, %v672, -inf
    %677 = vmax.xlane.f32.xlu0 %v676
    %v678 = vpop.xlane.xlu0 %677
    %v679 = vsub.f32 %v671, %v675
    %v680 = vsub.f32 %v672, %v678
    %v681 = vmul.f32 %v679, 1.442695
    %v682 = vpow.pop %v681
    %v683 = vmul.f32 %v680, 1.442695
    %v684 = vpow.pop %v683
    %v685 = vsel %vm424, %v682, 0.0
    %686 = vadd.xlane.f32.xlu0 %v685
    %v687 = vpop.xlane.xlu0 %686
    %v688 = vsel %vm428, %v684, 0.0
    %689 = vadd.xlane.f32.xlu0 %v688
    %v690 = vpop.xlane.xlu0 %689
    %v691 = vrcp.pop %v687
    %v692 = vmul.f32 %v687, %v691
    %v693 = vsub.f32 1.0, %v692
    %v694 = vmul.f32 %v691, %v693
    %v695 = vadd.f32 %v691, %v694
    %vm696 = vweird.f32 %v687
    %vm697 = vweird.f32 %v691
    %vm698 = vmor %vm696, %vm697
    %v699 = vsel %vm698, %v691, %v695
    %v700 = vand.u32 2147483647, %v687
    %vm701 = vcmp.eq.f32.partialorder %v700, 8.507059e+37
    %v702 = vand.u32 %v687, 2147483648
    %v703 = vor.u32 1.1754944e-38, %v702
    %v704 = vsel %vm701, %v703, %v699
    %v705 = vmul.f32 %v682, %v704
    %v706 = vrcp.pop %v690
    %v707 = vmul.f32 %v690, %v706
    %v708 = vsub.f32 1.0, %v707
    %v709 = vmul.f32 %v706, %v708
    %v710 = vadd.f32 %v706, %v709
    %vm711 = vweird.f32 %v690
    %vm712 = vweird.f32 %v706
    %vm713 = vmor %vm711, %vm712
    %v714 = vsel %vm713, %v706, %v710
    %v715 = vand.u32 2147483647, %v690
    %vm716 = vcmp.eq.f32.partialorder %v715, 8.507059e+37
    %v717 = vand.u32 %v690, 2147483648
    %v718 = vor.u32 1.1754944e-38, %v717
    %v719 = vsel %vm716, %v718, %v714
    %v720 = vmul.f32 %v684, %v719
    %v722 = vsel %vm424, %v705, 0
    %v725 = vsel %vm424, %v720, 0
    %v728 = vsel %vm214, %v632, 0
    %730 = vmatpush.msra.mxu0 0.0
    %731 = vmatpush.msra.mxu0 0.0
    %732 = vmatpush.msra.mxu0 0.0
    %733 = vmatpush.msra.mxu0 0.0
    %734 = vmatpush.msra.mxu0 0.0
    %735 = vmatpush.msra.mxu0 0.0
    %736 = vmatpush.msra.mxu0 0.0
    %737 = vmatpush.msra.mxu0 0.0
    %738 = vmatpush.msra.mxu0 0.0
    %739 = vmatpush.msra.mxu0 0.0
    %740 = vmatpush.msra.mxu0 0.0
    %741 = vmatpush.msra.mxu0 0.0
    %742 = vmatpush.msra.mxu0 0.0
    %743 = vmatpush.msra.mxu0 0.0
    %744 = vmatpush.msra.mxu0 %v728
    %745 = vmatpush.msra.mxu0 %v629
    %746 = vmatmul.f32.gmra.mxu0 %v722
    %v747 = vpop.f32.mrf.mxu0
    %v748 = vadd.f32 0.0, %v747
    %749 = vmatmul.f32.gmra.mxu0 %v725
    %v750 = vpop.f32.mrf.mxu0
    %v751 = vadd.f32 0.0, %v750
    %752 = vdwg.mxu0
    %s753 = scalar_lea.vmem %s7, 64
    %v754 = vld [vmem:[%s753] sm:$0xff]
    %v755 = vld [vmem:[%s753 + $0x8] sm:$0xff]
    %v756 = vld [vmem:[%s753 + $0x10] sm:$0xff]
    %v757 = vld [vmem:[%s753 + $0x18] sm:$0xff]
    %v758 = vld [vmem:[%s753 + $0x20] sm:$0xff]
    %v759 = vld [vmem:[%s753 + $0x28] sm:$0xff]
    %v760 = vld [vmem:[%s753 + $0x30] sm:$0xff]
    %v761 = vld [vmem:[%s753 + $0x38] sm:$0xff]
    %v763 = vsel %vm384, %v748, 0
    %v766 = vsel %vm384, %v751, 0
    %768 = vmatpush.msra.mxu0 0.0
    %769 = vmatpush.msra.mxu0 0.0
    %770 = vmatpush.msra.mxu0 0.0
    %771 = vmatpush.msra.mxu0 0.0
    %772 = vmatpush.msra.mxu0 0.0
    %773 = vmatpush.msra.mxu0 0.0
    %774 = vmatpush.msra.mxu0 0.0
    %775 = vmatpush.msra.mxu0 0.0
    %776 = vmatpush.msra.mxu0 %v761
    %777 = vmatpush.msra.mxu0 %v760
    %778 = vmatpush.msra.mxu0 %v759
    %779 = vmatpush.msra.mxu0 %v758
    %780 = vmatpush.msra.mxu0 %v757
    %781 = vmatpush.msra.mxu0 %v756
    %782 = vmatpush.msra.mxu0 %v755
    %783 = vmatpush.msra.mxu0 %v754
    %784 = vmatmul.f32.gmra.mxu0 %v763
    %v785 = vpop.f32.mrf.mxu0
    %v786 = vadd.f32 0.0, %v785
    %787 = vmatmul.f32.gmra.mxu0 %v766
    %v788 = vpop.f32.mrf.mxu0
    %v789 = vadd.f32 0.0, %v788
    %790 = vdwg.mxu0
    %v792 = vsel %vm384, %v501, 0
    %v795 = vsel %vm384, %v504, 0
    %797 = vmatpush.msra.mxu0 0.0
    %798 = vmatpush.msra.mxu0 0.0
    %799 = vmatpush.msra.mxu0 0.0
    %800 = vmatpush.msra.mxu0 0.0
    %801 = vmatpush.msra.mxu0 0.0
    %802 = vmatpush.msra.mxu0 0.0
    %803 = vmatpush.msra.mxu0 0.0
    %804 = vmatpush.msra.mxu0 0.0
    %805 = vmatpush.msra.mxu0 %v513
    %806 = vmatpush.msra.mxu0 %v512
    %807 = vmatpush.msra.mxu0 %v511
    %808 = vmatpush.msra.mxu0 %v510
    %809 = vmatpush.msra.mxu0 %v509
    %810 = vmatpush.msra.mxu0 %v508
    %811 = vmatpush.msra.mxu0 %v507
    %812 = vmatpush.msra.mxu0 %v506
    %813 = vmatmul.f32.gmra.mxu0 %v792
    %v814 = vpop.f32.mrf.mxu0
    %v815 = vadd.f32 %v786, %v814
    %816 = vmatmul.f32.gmra.mxu0 %v795
    %v817 = vpop.f32.mrf.mxu0
    %v818 = vadd.f32 %v789, %v817
    %819 = vdwg.mxu0
    %v820 = vadd.f32 %v204, %v815
    %v821 = vadd.f32 %v207, %v818
    %v822 = vld [vmem:[%s9] sm:$0x1]
    %823 = vadd.xlane.f32.xlu0 %v820
    %v824 = vpop.xlane.xlu0 %823
    %v825 = vsel %vm214, %v821, 0.0
    %826 = vadd.xlane.f32.xlu0 %v825
    %v827 = vpop.xlane.xlu0 %826
    %v828 = vmul.f32 %v824, %v224
    %v829 = vmul.f32 %v827, %v224
    %v830 = vsub.f32 %v820, %v828
    %v831 = vsub.f32 %v821, %v829
    %v832 = vmul.f32 %v830, %v830
    %v833 = vmul.f32 %v831, %v831
    %834 = vadd.xlane.f32.xlu0 %v832
    %v835 = vpop.xlane.xlu0 %834
    %v836 = vsel %vm214, %v833, 0.0
    %837 = vadd.xlane.f32.xlu0 %v836
    %v838 = vpop.xlane.xlu0 %837
    %v839 = vmul.f32 %v835, %v224
    %v840 = vmul.f32 %v838, %v224
    %v841 = vadd.f32 %v839, 1e-05
    %v842 = vadd.f32 %v840, 1e-05
    %v843 = vrsqrt.pop %v841
    %v844 = vmul.f32 %v843, %v841
    %v845 = vmul.f32 %v844, %v843
    %v846 = vmul.f32 0.5, %v845
    %v847 = vsub.f32 1.5, %v846
    %v848 = vmul.f32 %v843, %v847
    %vm849 = vweird.f32 %v841
    %vm850 = vweird.f32 %v843
    %vm851 = vmor %vm849, %vm850
    %v852 = vsel %vm851, %v843, %v848
    %v853 = vrsqrt.pop %v842
    %v854 = vmul.f32 %v853, %v842
    %v855 = vmul.f32 %v854, %v853
    %v856 = vmul.f32 0.5, %v855
    %v857 = vsub.f32 1.5, %v856
    %v858 = vmul.f32 %v853, %v857
    %vm859 = vweird.f32 %v842
    %vm860 = vweird.f32 %v853
    %vm861 = vmor %vm859, %vm860
    %v862 = vsel %vm861, %v853, %v858
    %v863 = vmul.f32 %v830, %v852
    %v864 = vmul.f32 %v831, %v862
    %v866 = vperm.slane %v822, 0
    %v868 = vmul.f32 %v863, %v866
    %v869 = vmul.f32 %v864, %v866
    %v870 = vld [vmem:[%s10] sm:$0xff]
    %v871 = vld [vmem:[%s10 + $0x8] sm:$0xff]
    %v872 = vld [vmem:[%s10 + $0x10] sm:$0xff]
    %v873 = vld [vmem:[%s10 + $0x18] sm:$0xff]
    %v874 = vld [vmem:[%s10 + $0x20] sm:$0xff]
    %v875 = vld [vmem:[%s10 + $0x28] sm:$0xff]
    %v876 = vld [vmem:[%s10 + $0x30] sm:$0xff]
    %v877 = vld [vmem:[%s10 + $0x38] sm:$0xff]
    %v878 = vld [vmem:[%s10 + $0x40] sm:$0xff]
    %v879 = vld [vmem:[%s10 + $0x48] sm:$0xff]
    %v880 = vld [vmem:[%s10 + $0x50] sm:$0xff]
    %v881 = vld [vmem:[%s10 + $0x58] sm:$0xff]
    %v882 = vld [vmem:[%s10 + $0x60] sm:$0xff]
    %v883 = vld [vmem:[%s10 + $0x68] sm:$0xff]
    %v884 = vld [vmem:[%s10 + $0x70] sm:$0xff]
    %v885 = vld [vmem:[%s10 + $0x78] sm:$0xff]
    %v886 = vld [vmem:[%s10 + $0x80] sm:$0xff]
    %v887 = vld [vmem:[%s10 + $0x88] sm:$0xff]
    %v888 = vld [vmem:[%s10 + $0x90] sm:$0xff]
    %v889 = vld [vmem:[%s10 + $0x98] sm:$0xff]
    %v890 = vld [vmem:[%s10 + $0xa0] sm:$0xff]
    %v891 = vld [vmem:[%s10 + $0xa8] sm:$0xff]
    %v892 = vld [vmem:[%s10 + $0xb0] sm:$0xff]
    %v893 = vld [vmem:[%s10 + $0xb8] sm:$0xff]
    %v894 = vld [vmem:[%s10 + $0xc0] sm:$0xff]
    %v895 = vld [vmem:[%s10 + $0xc8] sm:$0xff]
    %v896 = vld [vmem:[%s10 + $0xd0] sm:$0xff]
    %v897 = vld [vmem:[%s10 + $0xd8] sm:$0xff]
    %v898 = vld [vmem:[%s10 + $0xe0] sm:$0xff]
    %v899 = vld [vmem:[%s10 + $0xe8] sm:$0xff]
    %v900 = vld [vmem:[%s10 + $0xf0] sm:$0xff]
    %v901 = vld [vmem:[%s10 + $0xf8] sm:$0xff]
    %v902 = vld [vmem:[%s10 + $0x100] sm:$0xff]
    %v903 = vld [vmem:[%s10 + $0x108] sm:$0xff]
    %v904 = vld [vmem:[%s10 + $0x110] sm:$0xff]
    %v905 = vld [vmem:[%s10 + $0x118] sm:$0xff]
    %v906 = vld [vmem:[%s10 + $0x120] sm:$0xff]
    %v907 = vld [vmem:[%s10 + $0x128] sm:$0xff]
    %v908 = vld [vmem:[%s10 + $0x130] sm:$0xff]
    %v909 = vld [vmem:[%s10 + $0x138] sm:$0xff]
    %v910 = vld [vmem:[%s10 + $0x140] sm:$0xff]
    %v911 = vld [vmem:[%s10 + $0x148] sm:$0xff]
    %v912 = vld [vmem:[%s10 + $0x150] sm:$0xff]
    %v913 = vld [vmem:[%s10 + $0x158] sm:$0xff]
    %v914 = vld [vmem:[%s10 + $0x160] sm:$0xff]
    %v915 = vld [vmem:[%s10 + $0x168] sm:$0xff]
    %v916 = vld [vmem:[%s10 + $0x170] sm:$0xff]
    %v917 = vld [vmem:[%s10 + $0x178] sm:$0xff]
    %v918 = vld [vmem:[%s10 + $0x180] sm:$0xff]
    %v919 = vld [vmem:[%s10 + $0x188] sm:$0xff]
    %v920 = vld [vmem:[%s10 + $0x190] sm:$0xff]
    %v921 = vld [vmem:[%s10 + $0x198] sm:$0xff]
    %v922 = vld [vmem:[%s10 + $0x1a0] sm:$0xff]
    %v923 = vld [vmem:[%s10 + $0x1a8] sm:$0xff]
    %v924 = vld [vmem:[%s10 + $0x1b0] sm:$0xff]
    %v925 = vld [vmem:[%s10 + $0x1b8] sm:$0xff]
    %v926 = vld [vmem:[%s10 + $0x1c0] sm:$0xff]
    %v927 = vld [vmem:[%s10 + $0x1c8] sm:$0xff]
    %v928 = vld [vmem:[%s10 + $0x1d0] sm:$0xff]
    %v929 = vld [vmem:[%s10 + $0x1d8] sm:$0xff]
    %v930 = vld [vmem:[%s10 + $0x1e0] sm:$0xff]
    %v931 = vld [vmem:[%s10 + $0x1e8] sm:$0xff]
    %v932 = vld [vmem:[%s10 + $0x1f0] sm:$0xff]
    %v933 = vld [vmem:[%s10 + $0x1f8] sm:$0xff]
    %934 = vmatpush.msra.mxu0 %v930
    %935 = vmatpush.msra.mxu0 %v926
    %936 = vmatpush.msra.mxu0 %v922
    %937 = vmatpush.msra.mxu0 %v918
    %938 = vmatpush.msra.mxu0 %v914
    %939 = vmatpush.msra.mxu0 %v910
    %940 = vmatpush.msra.mxu0 %v906
    %941 = vmatpush.msra.mxu0 %v902
    %942 = vmatpush.msra.mxu0 %v898
    %943 = vmatpush.msra.mxu0 %v894
    %944 = vmatpush.msra.mxu0 %v890
    %945 = vmatpush.msra.mxu0 %v886
    %946 = vmatpush.msra.mxu0 %v882
    %947 = vmatpush.msra.mxu0 %v878
    %948 = vmatpush.msra.mxu0 %v874
    %949 = vmatpush.msra.mxu0 %v870
    %950 = vmatmul.f32.gmra.mxu0 %v868
    %v951 = vpop.f32.mrf.mxu0
    %v952 = vadd.f32 0.0, %v951
    %953 = vmatmul.f32.gmra.mxu0 %v869
    %v954 = vpop.f32.mrf.mxu0
    %v955 = vadd.f32 0.0, %v954
    %956 = vdwg.mxu0
    %957 = vmatpush.msra.mxu0 %v931
    %958 = vmatpush.msra.mxu0 %v927
    %959 = vmatpush.msra.mxu0 %v923
    %960 = vmatpush.msra.mxu0 %v919
    %961 = vmatpush.msra.mxu0 %v915
    %962 = vmatpush.msra.mxu0 %v911
    %963 = vmatpush.msra.mxu0 %v907
    %964 = vmatpush.msra.mxu0 %v903
    %965 = vmatpush.msra.mxu0 %v899
    %966 = vmatpush.msra.mxu0 %v895
    %967 = vmatpush.msra.mxu0 %v891
    %968 = vmatpush.msra.mxu0 %v887
    %969 = vmatpush.msra.mxu0 %v883
    %970 = vmatpush.msra.mxu0 %v879
    %971 = vmatpush.msra.mxu0 %v875
    %972 = vmatpush.msra.mxu0 %v871
    %973 = vmatmul.f32.gmra.mxu0 %v868
    %v974 = vpop.f32.mrf.mxu0
    %v975 = vadd.f32 0.0, %v974
    %976 = vmatmul.f32.gmra.mxu0 %v869
    %v977 = vpop.f32.mrf.mxu0
    %v978 = vadd.f32 0.0, %v977
    %979 = vdwg.mxu0
    %980 = vmatpush.msra.mxu0 %v932
    %981 = vmatpush.msra.mxu0 %v928
    %982 = vmatpush.msra.mxu0 %v924
    %983 = vmatpush.msra.mxu0 %v920
    %984 = vmatpush.msra.mxu0 %v916
    %985 = vmatpush.msra.mxu0 %v912
    %986 = vmatpush.msra.mxu0 %v908
    %987 = vmatpush.msra.mxu0 %v904
    %988 = vmatpush.msra.mxu0 %v900
    %989 = vmatpush.msra.mxu0 %v896
    %990 = vmatpush.msra.mxu0 %v892
    %991 = vmatpush.msra.mxu0 %v888
    %992 = vmatpush.msra.mxu0 %v884
    %993 = vmatpush.msra.mxu0 %v880
    %994 = vmatpush.msra.mxu0 %v876
    %995 = vmatpush.msra.mxu0 %v872
    %996 = vmatmul.f32.gmra.mxu0 %v868
    %v997 = vpop.f32.mrf.mxu0
    %v998 = vadd.f32 0.0, %v997
    %999 = vmatmul.f32.gmra.mxu0 %v869
    %v1000 = vpop.f32.mrf.mxu0
    %v1001 = vadd.f32 0.0, %v1000
    %1002 = vdwg.mxu0
    %1003 = vmatpush.msra.mxu0 %v933
    %1004 = vmatpush.msra.mxu0 %v929
    %1005 = vmatpush.msra.mxu0 %v925
    %1006 = vmatpush.msra.mxu0 %v921
    %1007 = vmatpush.msra.mxu0 %v917
    %1008 = vmatpush.msra.mxu0 %v913
    %1009 = vmatpush.msra.mxu0 %v909
    %1010 = vmatpush.msra.mxu0 %v905
    %1011 = vmatpush.msra.mxu0 %v901
    %1012 = vmatpush.msra.mxu0 %v897
    %1013 = vmatpush.msra.mxu0 %v893
    %1014 = vmatpush.msra.mxu0 %v889
    %1015 = vmatpush.msra.mxu0 %v885
    %1016 = vmatpush.msra.mxu0 %v881
    %1017 = vmatpush.msra.mxu0 %v877
    %1018 = vmatpush.msra.mxu0 %v873
    %1019 = vmatmul.f32.gmra.mxu0 %v868
    %v1020 = vpop.f32.mrf.mxu0
    %v1021 = vadd.f32 0.0, %v1020
    %1022 = vmatmul.f32.gmra.mxu0 %v869
    %v1023 = vpop.f32.mrf.mxu0
    %v1024 = vadd.f32 0.0, %v1023
    %1025 = vdwg.mxu0
    %v1026 = vmul.f32 %v952, %v952
    %v1027 = vmul.f32 %v975, %v975
    %v1028 = vmul.f32 %v998, %v998
    %v1029 = vmul.f32 %v1021, %v1021
    %v1030 = vmul.f32 %v955, %v955
    %v1031 = vmul.f32 %v978, %v978
    %v1032 = vmul.f32 %v1001, %v1001
    %v1033 = vmul.f32 %v1024, %v1024
    %v1034 = vmul.f32 %v952, %v1026
    %v1035 = vmul.f32 %v975, %v1027
    %v1036 = vmul.f32 %v998, %v1028
    %v1037 = vmul.f32 %v1021, %v1029
    %v1038 = vmul.f32 %v955, %v1030
    %v1039 = vmul.f32 %v978, %v1031
    %v1040 = vmul.f32 %v1001, %v1032
    %v1041 = vmul.f32 %v1024, %v1033
    %v1042 = vmul.f32 %v1034, 0.044715
    %v1043 = vmul.f32 %v1035, 0.044715
    %v1044 = vmul.f32 %v1036, 0.044715
    %v1045 = vmul.f32 %v1037, 0.044715
    %v1046 = vmul.f32 %v1038, 0.044715
    %v1047 = vmul.f32 %v1039, 0.044715
    %v1048 = vmul.f32 %v1040, 0.044715
    %v1049 = vmul.f32 %v1041, 0.044715
    %v1050 = vadd.f32 %v952, %v1042
    %v1051 = vadd.f32 %v975, %v1043
    %v1052 = vadd.f32 %v998, %v1044
    %v1053 = vadd.f32 %v1021, %v1045
    %v1054 = vadd.f32 %v955, %v1046
    %v1055 = vadd.f32 %v978, %v1047
    %v1056 = vadd.f32 %v1001, %v1048
    %v1057 = vadd.f32 %v1024, %v1049
    %v1058 = vmul.f32 %v1050, 0.7978846
    %v1059 = vmul.f32 %v1051, 0.7978846
    %v1060 = vmul.f32 %v1052, 0.7978846
    %v1061 = vmul.f32 %v1053, 0.7978846
    %v1062 = vmul.f32 %v1054, 0.7978846
    %v1063 = vmul.f32 %v1055, 0.7978846
    %v1064 = vmul.f32 %v1056, 0.7978846
    %v1065 = vmul.f32 %v1057, 0.7978846
    %v1066 = vtanh.pop %v1058
    %v1067 = vtanh.pop %v1059
    %v1068 = vtanh.pop %v1060
    %v1069 = vtanh.pop %v1061
    %v1070 = vtanh.pop %v1062
    %v1071 = vtanh.pop %v1063
    %v1072 = vtanh.pop %v1064
    %v1073 = vtanh.pop %v1065
    %v1074 = vadd.f32 %v1066, 1.0
    %v1075 = vadd.f32 %v1067, 1.0
    %v1076 = vadd.f32 %v1068, 1.0
    %v1077 = vadd.f32 %v1069, 1.0
    %v1078 = vadd.f32 %v1070, 1.0
    %v1079 = vadd.f32 %v1071, 1.0
    %v1080 = vadd.f32 %v1072, 1.0
    %v1081 = vadd.f32 %v1073, 1.0
    %v1082 = vmul.f32 %v1074, 0.5
    %v1083 = vmul.f32 %v1075, 0.5
    %v1084 = vmul.f32 %v1076, 0.5
    %v1085 = vmul.f32 %v1077, 0.5
    %v1086 = vmul.f32 %v1078, 0.5
    %v1087 = vmul.f32 %v1079, 0.5
    %v1088 = vmul.f32 %v1080, 0.5
    %v1089 = vmul.f32 %v1081, 0.5
    %v1090 = vmul.f32 %v952, %v1082
    %v1091 = vmul.f32 %v975, %v1083
    %v1092 = vmul.f32 %v998, %v1084
    %v1093 = vmul.f32 %v1021, %v1085
    %v1094 = vmul.f32 %v955, %v1086
    %v1095 = vmul.f32 %v978, %v1087
    %v1096 = vmul.f32 %v1001, %v1088
    %v1097 = vmul.f32 %v1024, %v1089
    %v1098 = vld [vmem:[#allocation2] sm:$0xff]
    %v1099 = vld [vmem:[#allocation2 + $0x8] sm:$0xff]
    %v1100 = vld [vmem:[#allocation2 + $0x10] sm:$0xff]
    %v1101 = vld [vmem:[#allocation2 + $0x18] sm:$0xff]
    %v1102 = vld [vmem:[#allocation2 + $0x20] sm:$0xff]
    %v1103 = vld [vmem:[#allocation2 + $0x28] sm:$0xff]
    %v1104 = vld [vmem:[#allocation2 + $0x30] sm:$0xff]
    %v1105 = vld [vmem:[#allocation2 + $0x38] sm:$0xff]
    %v1106 = vld [vmem:[#allocation2 + $0x40] sm:$0xff]
    %v1107 = vld [vmem:[#allocation2 + $0x48] sm:$0xff]
    %v1108 = vld [vmem:[#allocation2 + $0x50] sm:$0xff]
    %v1109 = vld [vmem:[#allocation2 + $0x58] sm:$0xff]
    %v1110 = vld [vmem:[#allocation2 + $0x60] sm:$0xff]
    %v1111 = vld [vmem:[#allocation2 + $0x68] sm:$0xff]
    %v1112 = vld [vmem:[#allocation2 + $0x70] sm:$0xff]
    %v1113 = vld [vmem:[#allocation2 + $0x78] sm:$0xff]
    %v1114 = vld [vmem:[#allocation2 + $0x80] sm:$0xff]
    %v1115 = vld [vmem:[#allocation2 + $0x88] sm:$0xff]
    %v1116 = vld [vmem:[#allocation2 + $0x90] sm:$0xff]
    %v1117 = vld [vmem:[#allocation2 + $0x98] sm:$0xff]
    %v1118 = vld [vmem:[#allocation2 + $0xa0] sm:$0xff]
    %v1119 = vld [vmem:[#allocation2 + $0xa8] sm:$0xff]
    %v1120 = vld [vmem:[#allocation2 + $0xb0] sm:$0xff]
    %v1121 = vld [vmem:[#allocation2 + $0xb8] sm:$0xff]
    %v1122 = vld [vmem:[#allocation2 + $0xc0] sm:$0xff]
    %v1123 = vld [vmem:[#allocation2 + $0xc8] sm:$0xff]
    %v1124 = vld [vmem:[#allocation2 + $0xd0] sm:$0xff]
    %v1125 = vld [vmem:[#allocation2 + $0xd8] sm:$0xff]
    %v1126 = vld [vmem:[#allocation2 + $0xe0] sm:$0xff]
    %v1127 = vld [vmem:[#allocation2 + $0xe8] sm:$0xff]
    %v1128 = vld [vmem:[#allocation2 + $0xf0] sm:$0xff]
    %v1129 = vld [vmem:[#allocation2 + $0xf8] sm:$0xff]
    %v1130 = vld [vmem:[#allocation2 + $0x100] sm:$0xff]
    %v1131 = vld [vmem:[#allocation2 + $0x108] sm:$0xff]
    %v1132 = vld [vmem:[#allocation2 + $0x110] sm:$0xff]
    %v1133 = vld [vmem:[#allocation2 + $0x118] sm:$0xff]
    %v1134 = vld [vmem:[#allocation2 + $0x120] sm:$0xff]
    %v1135 = vld [vmem:[#allocation2 + $0x128] sm:$0xff]
    %v1136 = vld [vmem:[#allocation2 + $0x130] sm:$0xff]
    %v1137 = vld [vmem:[#allocation2 + $0x138] sm:$0xff]
    %v1138 = vld [vmem:[#allocation2 + $0x140] sm:$0xff]
    %v1139 = vld [vmem:[#allocation2 + $0x148] sm:$0xff]
    %v1140 = vld [vmem:[#allocation2 + $0x150] sm:$0xff]
    %v1141 = vld [vmem:[#allocation2 + $0x158] sm:$0xff]
    %v1142 = vld [vmem:[#allocation2 + $0x160] sm:$0xff]
    %v1143 = vld [vmem:[#allocation2 + $0x168] sm:$0xff]
    %v1144 = vld [vmem:[#allocation2 + $0x170] sm:$0xff]
    %v1145 = vld [vmem:[#allocation2 + $0x178] sm:$0xff]
    %v1146 = vld [vmem:[#allocation2 + $0x180] sm:$0xff]
    %v1147 = vld [vmem:[#allocation2 + $0x188] sm:$0xff]
    %v1148 = vld [vmem:[#allocation2 + $0x190] sm:$0xff]
    %v1149 = vld [vmem:[#allocation2 + $0x198] sm:$0xff]
    %v1150 = vld [vmem:[#allocation2 + $0x1a0] sm:$0xff]
    %v1151 = vld [vmem:[#allocation2 + $0x1a8] sm:$0xff]
    %v1152 = vld [vmem:[#allocation2 + $0x1b0] sm:$0xff]
    %v1153 = vld [vmem:[#allocation2 + $0x1b8] sm:$0xff]
    %v1154 = vld [vmem:[#allocation2 + $0x1c0] sm:$0xff]
    %v1155 = vld [vmem:[#allocation2 + $0x1c8] sm:$0xff]
    %v1156 = vld [vmem:[#allocation2 + $0x1d0] sm:$0xff]
    %v1157 = vld [vmem:[#allocation2 + $0x1d8] sm:$0xff]
    %v1158 = vld [vmem:[#allocation2 + $0x1e0] sm:$0xff]
    %v1159 = vld [vmem:[#allocation2 + $0x1e8] sm:$0xff]
    %v1160 = vld [vmem:[#allocation2 + $0x1f0] sm:$0xff]
    %v1161 = vld [vmem:[#allocation2 + $0x1f8] sm:$0xff]
    %1162 = vmatpush.msra.mxu0 %v1113
    %1163 = vmatpush.msra.mxu0 %v1112
    %1164 = vmatpush.msra.mxu0 %v1111
    %1165 = vmatpush.msra.mxu0 %v1110
    %1166 = vmatpush.msra.mxu0 %v1109
    %1167 = vmatpush.msra.mxu0 %v1108
    %1168 = vmatpush.msra.mxu0 %v1107
    %1169 = vmatpush.msra.mxu0 %v1106
    %1170 = vmatpush.msra.mxu0 %v1105
    %1171 = vmatpush.msra.mxu0 %v1104
    %1172 = vmatpush.msra.mxu0 %v1103
    %1173 = vmatpush.msra.mxu0 %v1102
    %1174 = vmatpush.msra.mxu0 %v1101
    %1175 = vmatpush.msra.mxu0 %v1100
    %1176 = vmatpush.msra.mxu0 %v1099
    %1177 = vmatpush.msra.mxu0 %v1098
    %1178 = vmatmul.f32.gmra.mxu0 %v1090
    %v1179 = vpop.f32.mrf.mxu0
    %v1180 = vadd.f32 0.0, %v1179
    %1181 = vmatmul.f32.gmra.mxu0 %v1094
    %v1182 = vpop.f32.mrf.mxu0
    %v1183 = vadd.f32 0.0, %v1182
    %1184 = vdwg.mxu0
    %1185 = vmatpush.msra.mxu0 %v1129
    %1186 = vmatpush.msra.mxu0 %v1128
    %1187 = vmatpush.msra.mxu0 %v1127
    %1188 = vmatpush.msra.mxu0 %v1126
    %1189 = vmatpush.msra.mxu0 %v1125
    %1190 = vmatpush.msra.mxu0 %v1124
    %1191 = vmatpush.msra.mxu0 %v1123
    %1192 = vmatpush.msra.mxu0 %v1122
    %1193 = vmatpush.msra.mxu0 %v1121
    %1194 = vmatpush.msra.mxu0 %v1120
    %1195 = vmatpush.msra.mxu0 %v1119
    %1196 = vmatpush.msra.mxu0 %v1118
    %1197 = vmatpush.msra.mxu0 %v1117
    %1198 = vmatpush.msra.mxu0 %v1116
    %1199 = vmatpush.msra.mxu0 %v1115
    %1200 = vmatpush.msra.mxu0 %v1114
    %1201 = vmatmul.f32.gmra.mxu0 %v1091
    %v1202 = vpop.f32.mrf.mxu0
    %v1203 = vadd.f32 %v1180, %v1202
    %1204 = vmatmul.f32.gmra.mxu0 %v1095
    %v1205 = vpop.f32.mrf.mxu0
    %v1206 = vadd.f32 %v1183, %v1205
    %1207 = vdwg.mxu0
    %1208 = vmatpush.msra.mxu0 %v1145
    %1209 = vmatpush.msra.mxu0 %v1144
    %1210 = vmatpush.msra.mxu0 %v1143
    %1211 = vmatpush.msra.mxu0 %v1142
    %1212 = vmatpush.msra.mxu0 %v1141
    %1213 = vmatpush.msra.mxu0 %v1140
    %1214 = vmatpush.msra.mxu0 %v1139
    %1215 = vmatpush.msra.mxu0 %v1138
    %1216 = vmatpush.msra.mxu0 %v1137
    %1217 = vmatpush.msra.mxu0 %v1136
    %1218 = vmatpush.msra.mxu0 %v1135
    %1219 = vmatpush.msra.mxu0 %v1134
    %1220 = vmatpush.msra.mxu0 %v1133
    %1221 = vmatpush.msra.mxu0 %v1132
    %1222 = vmatpush.msra.mxu0 %v1131
    %1223 = vmatpush.msra.mxu0 %v1130
    %1224 = vmatmul.f32.gmra.mxu0 %v1092
    %v1225 = vpop.f32.mrf.mxu0
    %v1226 = vadd.f32 %v1203, %v1225
    %1227 = vmatmul.f32.gmra.mxu0 %v1096
    %v1228 = vpop.f32.mrf.mxu0
    %v1229 = vadd.f32 %v1206, %v1228
    %1230 = vdwg.mxu0
    %1231 = vmatpush.msra.mxu0 %v1161
    %1232 = vmatpush.msra.mxu0 %v1160
    %1233 = vmatpush.msra.mxu0 %v1159
    %1234 = vmatpush.msra.mxu0 %v1158
    %1235 = vmatpush.msra.mxu0 %v1157
    %1236 = vmatpush.msra.mxu0 %v1156
    %1237 = vmatpush.msra.mxu0 %v1155
    %1238 = vmatpush.msra.mxu0 %v1154
    %1239 = vmatpush.msra.mxu0 %v1153
    %1240 = vmatpush.msra.mxu0 %v1152
    %1241 = vmatpush.msra.mxu0 %v1151
    %1242 = vmatpush.msra.mxu0 %v1150
    %1243 = vmatpush.msra.mxu0 %v1149
    %1244 = vmatpush.msra.mxu0 %v1148
    %1245 = vmatpush.msra.mxu0 %v1147
    %1246 = vmatpush.msra.mxu0 %v1146
    %1247 = vmatmul.f32.gmra.mxu0 %v1093
    %v1248 = vpop.f32.mrf.mxu0
    %v1249 = vadd.f32 %v1226, %v1248
    %1250 = vmatmul.f32.gmra.mxu0 %v1097
    %v1251 = vpop.f32.mrf.mxu0
    %v1252 = vadd.f32 %v1229, %v1251
    %1253 = vdwg.mxu0
    %v1254 = vadd.f32 %v820, %v1249
    %v1255 = vadd.f32 %v821, %v1252
    %s1256 = scalar_lea.vmem %s8, 1
    %v1257 = vld [vmem:[%s1256] sm:$0x1]
    %1258 = vadd.xlane.f32.xlu0 %v1254
    %v1259 = vpop.xlane.xlu0 %1258
    %v1260 = vsel %vm214, %v1255, 0.0
    %1261 = vadd.xlane.f32.xlu0 %v1260
    %v1262 = vpop.xlane.xlu0 %1261
    %v1263 = vmul.f32 %v1259, %v224
    %v1264 = vmul.f32 %v1262, %v224
    %v1265 = vsub.f32 %v1254, %v1263
    %v1266 = vsub.f32 %v1255, %v1264
    %v1267 = vmul.f32 %v1265, %v1265
    %v1268 = vmul.f32 %v1266, %v1266
    %1269 = vadd.xlane.f32.xlu0 %v1267
    %v1270 = vpop.xlane.xlu0 %1269
    %v1271 = vsel %vm214, %v1268, 0.0
    %1272 = vadd.xlane.f32.xlu0 %v1271
    %v1273 = vpop.xlane.xlu0 %1272
    %v1274 = vmul.f32 %v1270, %v224
    %v1275 = vmul.f32 %v1273, %v224
    %v1276 = vadd.f32 %v1274, 1e-05
    %v1277 = vadd.f32 %v1275, 1e-05
    %v1278 = vrsqrt.pop %v1276
    %v1279 = vmul.f32 %v1278, %v1276
    %v1280 = vmul.f32 %v1279, %v1278
    %v1281 = vmul.f32 0.5, %v1280
    %v1282 = vsub.f32 1.5, %v1281
    %v1283 = vmul.f32 %v1278, %v1282
    %vm1284 = vweird.f32 %v1276
    %vm1285 = vweird.f32 %v1278
    %vm1286 = vmor %vm1284, %vm1285
    %v1287 = vsel %vm1286, %v1278, %v1283
    %v1288 = vrsqrt.pop %v1277
    %v1289 = vmul.f32 %v1288, %v1277
    %v1290 = vmul.f32 %v1289, %v1288
    %v1291 = vmul.f32 0.5, %v1290
    %v1292 = vsub.f32 1.5, %v1291
    %v1293 = vmul.f32 %v1288, %v1292
    %vm1294 = vweird.f32 %v1277
    %vm1295 = vweird.f32 %v1288
    %vm1296 = vmor %vm1294, %vm1295
    %v1297 = vsel %vm1296, %v1288, %v1293
    %v1298 = vmul.f32 %v1265, %v1287
    %v1299 = vmul.f32 %v1266, %v1297
    %v1301 = vperm.slane %v1257, 0
    %v1303 = vmul.f32 %v1298, %v1301
    %v1304 = vmul.f32 %v1299, %v1301
    %s1305 = scalar_lea.vmem %s4, 256
    %v1306 = vld [vmem:[%s1305] sm:$0xff]
    %v1307 = vld [vmem:[%s1305 + $0x8] sm:$0xff]
    %v1308 = vld [vmem:[%s1305 + $0x10] sm:$0xff]
    %v1309 = vld [vmem:[%s1305 + $0x18] sm:$0xff]
    %v1310 = vld [vmem:[%s1305 + $0x20] sm:$0xff]
    %v1311 = vld [vmem:[%s1305 + $0x28] sm:$0xff]
    %v1312 = vld [vmem:[%s1305 + $0x30] sm:$0xff]
    %v1313 = vld [vmem:[%s1305 + $0x38] sm:$0xff]
    %v1314 = vld [vmem:[%s1305 + $0x40] sm:$0xff]
    %v1315 = vld [vmem:[%s1305 + $0x48] sm:$0xff]
    %v1316 = vld [vmem:[%s1305 + $0x50] sm:$0xff]
    %v1317 = vld [vmem:[%s1305 + $0x58] sm:$0xff]
    %v1318 = vld [vmem:[%s1305 + $0x60] sm:$0xff]
    %v1319 = vld [vmem:[%s1305 + $0x68] sm:$0xff]
    %v1320 = vld [vmem:[%s1305 + $0x70] sm:$0xff]
    %v1321 = vld [vmem:[%s1305 + $0x78] sm:$0xff]
    %1322 = vmatpush.msra.mxu0 %v1321
    %1323 = vmatpush.msra.mxu0 %v1320
    %1324 = vmatpush.msra.mxu0 %v1319
    %1325 = vmatpush.msra.mxu0 %v1318
    %1326 = vmatpush.msra.mxu0 %v1317
    %1327 = vmatpush.msra.mxu0 %v1316
    %1328 = vmatpush.msra.mxu0 %v1315
    %1329 = vmatpush.msra.mxu0 %v1314
    %1330 = vmatpush.msra.mxu0 %v1313
    %1331 = vmatpush.msra.mxu0 %v1312
    %1332 = vmatpush.msra.mxu0 %v1311
    %1333 = vmatpush.msra.mxu0 %v1310
    %1334 = vmatpush.msra.mxu0 %v1309
    %1335 = vmatpush.msra.mxu0 %v1308
    %1336 = vmatpush.msra.mxu0 %v1307
    %1337 = vmatpush.msra.mxu0 %v1306
    %1338 = vmatmul.f32.gmra.mxu0 %v1303
    %v1339 = vpop.f32.mrf.mxu0
    %v1340 = vadd.f32 0.0, %v1339
    %1341 = vmatmul.f32.gmra.mxu0 %v1304
    %v1342 = vpop.f32.mrf.mxu0
    %v1343 = vadd.f32 0.0, %v1342
    %1344 = vdwg.mxu0
    %s1345 = scalar_lea.vmem %s5, 256
    %v1346 = vld [vmem:[%s1345] sm:$0xff]
    %v1347 = vld [vmem:[%s1345 + $0x8] sm:$0xff]
    %v1348 = vld [vmem:[%s1345 + $0x10] sm:$0xff]
    %v1349 = vld [vmem:[%s1345 + $0x18] sm:$0xff]
    %v1350 = vld [vmem:[%s1345 + $0x20] sm:$0xff]
    %v1351 = vld [vmem:[%s1345 + $0x28] sm:$0xff]
    %v1352 = vld [vmem:[%s1345 + $0x30] sm:$0xff]
    %v1353 = vld [vmem:[%s1345 + $0x38] sm:$0xff]
    %v1354 = vld [vmem:[%s1345 + $0x40] sm:$0xff]
    %v1355 = vld [vmem:[%s1345 + $0x48] sm:$0xff]
    %v1356 = vld [vmem:[%s1345 + $0x50] sm:$0xff]
    %v1357 = vld [vmem:[%s1345 + $0x58] sm:$0xff]
    %v1358 = vld [vmem:[%s1345 + $0x60] sm:$0xff]
    %v1359 = vld [vmem:[%s1345 + $0x68] sm:$0xff]
    %v1360 = vld [vmem:[%s1345 + $0x70] sm:$0xff]
    %v1361 = vld [vmem:[%s1345 + $0x78] sm:$0xff]
    %1362 = vmatpush.msra.mxu0 %v1361
    %1363 = vmatpush.msra.mxu0 %v1360
    %1364 = vmatpush.msra.mxu0 %v1359
    %1365 = vmatpush.msra.mxu0 %v1358
    %1366 = vmatpush.msra.mxu0 %v1357
    %1367 = vmatpush.msra.mxu0 %v1356
    %1368 = vmatpush.msra.mxu0 %v1355
    %1369 = vmatpush.msra.mxu0 %v1354
    %1370 = vmatpush.msra.mxu0 %v1353
    %1371 = vmatpush.msra.mxu0 %v1352
    %1372 = vmatpush.msra.mxu0 %v1351
    %1373 = vmatpush.msra.mxu0 %v1350
    %1374 = vmatpush.msra.mxu0 %v1349
    %1375 = vmatpush.msra.mxu0 %v1348
    %1376 = vmatpush.msra.mxu0 %v1347
    %1377 = vmatpush.msra.mxu0 %v1346
    %1378 = vmatmul.f32.gmra.mxu0 %v1303
    %v1379 = vpop.f32.mrf.mxu0
    %v1380 = vadd.f32 0.0, %v1379
    %1381 = vmatmul.f32.gmra.mxu0 %v1304
    %v1382 = vpop.f32.mrf.mxu0
    %v1383 = vadd.f32 0.0, %v1382
    %1384 = vdwg.mxu0
    %s1385 = scalar_lea.vmem %s6, 256
    %v1386 = vld [vmem:[%s1385] sm:$0xff]
    %v1387 = vld [vmem:[%s1385 + $0x8] sm:$0xff]
    %v1388 = vld [vmem:[%s1385 + $0x10] sm:$0xff]
    %v1389 = vld [vmem:[%s1385 + $0x18] sm:$0xff]
    %v1390 = vld [vmem:[%s1385 + $0x20] sm:$0xff]
    %v1391 = vld [vmem:[%s1385 + $0x28] sm:$0xff]
    %v1392 = vld [vmem:[%s1385 + $0x30] sm:$0xff]
    %v1393 = vld [vmem:[%s1385 + $0x38] sm:$0xff]
    %v1394 = vld [vmem:[%s1385 + $0x40] sm:$0xff]
    %v1395 = vld [vmem:[%s1385 + $0x48] sm:$0xff]
    %v1396 = vld [vmem:[%s1385 + $0x50] sm:$0xff]
    %v1397 = vld [vmem:[%s1385 + $0x58] sm:$0xff]
    %v1398 = vld [vmem:[%s1385 + $0x60] sm:$0xff]
    %v1399 = vld [vmem:[%s1385 + $0x68] sm:$0xff]
    %v1400 = vld [vmem:[%s1385 + $0x70] sm:$0xff]
    %v1401 = vld [vmem:[%s1385 + $0x78] sm:$0xff]
    %1402 = vmatpush.msra.mxu0 %v1401
    %1403 = vmatpush.msra.mxu0 %v1400
    %1404 = vmatpush.msra.mxu0 %v1399
    %1405 = vmatpush.msra.mxu0 %v1398
    %1406 = vmatpush.msra.mxu0 %v1397
    %1407 = vmatpush.msra.mxu0 %v1396
    %1408 = vmatpush.msra.mxu0 %v1395
    %1409 = vmatpush.msra.mxu0 %v1394
    %1410 = vmatpush.msra.mxu0 %v1393
    %1411 = vmatpush.msra.mxu0 %v1392
    %1412 = vmatpush.msra.mxu0 %v1391
    %1413 = vmatpush.msra.mxu0 %v1390
    %1414 = vmatpush.msra.mxu0 %v1389
    %1415 = vmatpush.msra.mxu0 %v1388
    %1416 = vmatpush.msra.mxu0 %v1387
    %1417 = vmatpush.msra.mxu0 %v1386
    %1418 = vmatmul.f32.gmra.mxu0 %v1303
    %v1419 = vpop.f32.mrf.mxu0
    %v1420 = vadd.f32 0.0, %v1419
    %1421 = vmatmul.f32.gmra.mxu0 %v1304
    %v1422 = vpop.f32.mrf.mxu0
    %v1423 = vadd.f32 0.0, %v1422
    %1424 = vdwg.mxu0
    %v1426 = vsel %vm384, %v1340, 0
    %v1429 = vsel %vm384, %v1343, 0
    %v1432 = vsel %vm384, %v1380, 0
    %v1435 = vsel %vm384, %v1383, 0
    %1437 = vmatpush.xpose.msra.mxu0 0.0
    %1438 = vmatpush.xpose.msra.mxu0 0.0
    %1439 = vmatpush.xpose.msra.mxu0 0.0
    %1440 = vmatpush.xpose.msra.mxu0 0.0
    %1441 = vmatpush.xpose.msra.mxu0 0.0
    %1442 = vmatpush.xpose.msra.mxu0 0.0
    %1443 = vmatpush.xpose.msra.mxu0 0.0
    %1444 = vmatpush.xpose.msra.mxu0 0.0
    %1445 = vmatpush.xpose.msra.mxu0 0.0
    %1446 = vmatpush.xpose.msra.mxu0 0.0
    %1447 = vmatpush.xpose.msra.mxu0 0.0
    %1448 = vmatpush.xpose.msra.mxu0 0.0
    %1449 = vmatpush.xpose.msra.mxu0 0.0
    %1450 = vmatpush.xpose.msra.mxu0 0.0
    %1451 = vmatpush.xpose.msra.mxu0 %v1435
    %1452 = vmatpush.xpose.msra.mxu0 %v1432
    %1453 = vmatmul.f32.gmra.mxu0 %v1426
    %v1454 = vpop.f32.mrf.mxu0
    %v1455 = vadd.f32 0.0, %v1454
    %1456 = vmatmul.f32.gmra.mxu0 %v1429
    %v1457 = vpop.f32.mrf.mxu0
    %v1458 = vadd.f32 0.0, %v1457
    %1459 = vdwg.mxu0
    %v1460 = vmul.f32 %v1455, 0.125
    %v1461 = vmul.f32 %v1458, 0.125
    %v1462 = vadd.f32 %v1460, %v209
    %v1463 = vadd.f32 %v1461, %v210
    %v1464 = vsel %vm424, %v1462, -inf
    %1465 = vmax.xlane.f32.xlu0 %v1464
    %v1466 = vpop.xlane.xlu0 %1465
    %v1467 = vsel %vm428, %v1463, -inf
    %1468 = vmax.xlane.f32.xlu0 %v1467
    %v1469 = vpop.xlane.xlu0 %1468
    %v1470 = vsub.f32 %v1462, %v1466
    %v1471 = vsub.f32 %v1463, %v1469
    %v1472 = vmul.f32 %v1470, 1.442695
    %v1473 = vpow.pop %v1472
    %v1474 = vmul.f32 %v1471, 1.442695
    %v1475 = vpow.pop %v1474
    %v1476 = vsel %vm424, %v1473, 0.0
    %1477 = vadd.xlane.f32.xlu0 %v1476
    %v1478 = vpop.xlane.xlu0 %1477
    %v1479 = vsel %vm428, %v1475, 0.0
    %1480 = vadd.xlane.f32.xlu0 %v1479
    %v1481 = vpop.xlane.xlu0 %1480
    %v1482 = vrcp.pop %v1478
    %v1483 = vmul.f32 %v1478, %v1482
    %v1484 = vsub.f32 1.0, %v1483
    %v1485 = vmul.f32 %v1482, %v1484
    %v1486 = vadd.f32 %v1482, %v1485
    %vm1487 = vweird.f32 %v1478
    %vm1488 = vweird.f32 %v1482
    %vm1489 = vmor %vm1487, %vm1488
    %v1490 = vsel %vm1489, %v1482, %v1486
    %v1491 = vand.u32 2147483647, %v1478
    %vm1492 = vcmp.eq.f32.partialorder %v1491, 8.507059e+37
    %v1493 = vand.u32 %v1478, 2147483648
    %v1494 = vor.u32 1.1754944e-38, %v1493
    %v1495 = vsel %vm1492, %v1494, %v1490
    %v1496 = vmul.f32 %v1473, %v1495
    %v1497 = vrcp.pop %v1481
    %v1498 = vmul.f32 %v1481, %v1497
    %v1499 = vsub.f32 1.0, %v1498
    %v1500 = vmul.f32 %v1497, %v1499
    %v1501 = vadd.f32 %v1497, %v1500
    %vm1502 = vweird.f32 %v1481
    %vm1503 = vweird.f32 %v1497
    %vm1504 = vmor %vm1502, %vm1503
    %v1505 = vsel %vm1504, %v1497, %v1501
    %v1506 = vand.u32 2147483647, %v1481
    %vm1507 = vcmp.eq.f32.partialorder %v1506, 8.507059e+37
    %v1508 = vand.u32 %v1481, 2147483648
    %v1509 = vor.u32 1.1754944e-38, %v1508
    %v1510 = vsel %vm1507, %v1509, %v1505
    %v1511 = vmul.f32 %v1475, %v1510
    %v1513 = vsel %vm424, %v1496, 0
    %v1516 = vsel %vm424, %v1511, 0
    %v1519 = vsel %vm214, %v1423, 0
    %1521 = vmatpush.msra.mxu0 0.0
    %1522 = vmatpush.msra.mxu0 0.0
    %1523 = vmatpush.msra.mxu0 0.0
    %1524 = vmatpush.msra.mxu0 0.0
    %1525 = vmatpush.msra.mxu0 0.0
    %1526 = vmatpush.msra.mxu0 0.0
    %1527 = vmatpush.msra.mxu0 0.0
    %1528 = vmatpush.msra.mxu0 0.0
    %1529 = vmatpush.msra.mxu0 0.0
    %1530 = vmatpush.msra.mxu0 0.0
    %1531 = vmatpush.msra.mxu0 0.0
    %1532 = vmatpush.msra.mxu0 0.0
    %1533 = vmatpush.msra.mxu0 0.0
    %1534 = vmatpush.msra.mxu0 0.0
    %1535 = vmatpush.msra.mxu0 %v1519
    %1536 = vmatpush.msra.mxu0 %v1420
    %1537 = vmatmul.f32.gmra.mxu0 %v1513
    %v1538 = vpop.f32.mrf.mxu0
    %v1539 = vadd.f32 0.0, %v1538
    %1540 = vmatmul.f32.gmra.mxu0 %v1516
    %v1541 = vpop.f32.mrf.mxu0
    %v1542 = vadd.f32 0.0, %v1541
    %1543 = vdwg.mxu0
    %s1544 = scalar_lea.vmem %s7, 128
    %v1545 = vld [vmem:[%s1544] sm:$0xff]
    %v1546 = vld [vmem:[%s1544 + $0x8] sm:$0xff]
    %v1547 = vld [vmem:[%s1544 + $0x10] sm:$0xff]
    %v1548 = vld [vmem:[%s1544 + $0x18] sm:$0xff]
    %v1549 = vld [vmem:[%s1544 + $0x20] sm:$0xff]
    %v1550 = vld [vmem:[%s1544 + $0x28] sm:$0xff]
    %v1551 = vld [vmem:[%s1544 + $0x30] sm:$0xff]
    %v1552 = vld [vmem:[%s1544 + $0x38] sm:$0xff]
    %s1553 = scalar_lea.vmem %s4, 384
    %v1554 = vld [vmem:[%s1553] sm:$0xff]
    %v1555 = vld [vmem:[%s1553 + $0x8] sm:$0xff]
    %v1556 = vld [vmem:[%s1553 + $0x10] sm:$0xff]
    %v1557 = vld [vmem:[%s1553 + $0x18] sm:$0xff]
    %v1558 = vld [vmem:[%s1553 + $0x20] sm:$0xff]
    %v1559 = vld [vmem:[%s1553 + $0x28] sm:$0xff]
    %v1560 = vld [vmem:[%s1553 + $0x30] sm:$0xff]
    %v1561 = vld [vmem:[%s1553 + $0x38] sm:$0xff]
    %v1562 = vld [vmem:[%s1553 + $0x40] sm:$0xff]
    %v1563 = vld [vmem:[%s1553 + $0x48] sm:$0xff]
    %v1564 = vld [vmem:[%s1553 + $0x50] sm:$0xff]
    %v1565 = vld [vmem:[%s1553 + $0x58] sm:$0xff]
    %v1566 = vld [vmem:[%s1553 + $0x60] sm:$0xff]
    %v1567 = vld [vmem:[%s1553 + $0x68] sm:$0xff]
    %v1568 = vld [vmem:[%s1553 + $0x70] sm:$0xff]
    %v1569 = vld [vmem:[%s1553 + $0x78] sm:$0xff]
    %1570 = vmatpush.msra.mxu0 %v1569
    %1571 = vmatpush.msra.mxu0 %v1568
    %1572 = vmatpush.msra.mxu0 %v1567
    %1573 = vmatpush.msra.mxu0 %v1566
    %1574 = vmatpush.msra.mxu0 %v1565
    %1575 = vmatpush.msra.mxu0 %v1564
    %1576 = vmatpush.msra.mxu0 %v1563
    %1577 = vmatpush.msra.mxu0 %v1562
    %1578 = vmatpush.msra.mxu0 %v1561
    %1579 = vmatpush.msra.mxu0 %v1560
    %1580 = vmatpush.msra.mxu0 %v1559
    %1581 = vmatpush.msra.mxu0 %v1558
    %1582 = vmatpush.msra.mxu0 %v1557
    %1583 = vmatpush.msra.mxu0 %v1556
    %1584 = vmatpush.msra.mxu0 %v1555
    %1585 = vmatpush.msra.mxu0 %v1554
    %1586 = vmatmul.f32.gmra.mxu0 %v1303
    %v1587 = vpop.f32.mrf.mxu0
    %v1588 = vadd.f32 0.0, %v1587
    %1589 = vmatmul.f32.gmra.mxu0 %v1304
    %v1590 = vpop.f32.mrf.mxu0
    %v1591 = vadd.f32 0.0, %v1590
    %1592 = vdwg.mxu0
    %s1593 = scalar_lea.vmem %s5, 384
    %v1594 = vld [vmem:[%s1593] sm:$0xff]
    %v1595 = vld [vmem:[%s1593 + $0x8] sm:$0xff]
    %v1596 = vld [vmem:[%s1593 + $0x10] sm:$0xff]
    %v1597 = vld [vmem:[%s1593 + $0x18] sm:$0xff]
    %v1598 = vld [vmem:[%s1593 + $0x20] sm:$0xff]
    %v1599 = vld [vmem:[%s1593 + $0x28] sm:$0xff]
    %v1600 = vld [vmem:[%s1593 + $0x30] sm:$0xff]
    %v1601 = vld [vmem:[%s1593 + $0x38] sm:$0xff]
    %v1602 = vld [vmem:[%s1593 + $0x40] sm:$0xff]
    %v1603 = vld [vmem:[%s1593 + $0x48] sm:$0xff]
    %v1604 = vld [vmem:[%s1593 + $0x50] sm:$0xff]
    %v1605 = vld [vmem:[%s1593 + $0x58] sm:$0xff]
    %v1606 = vld [vmem:[%s1593 + $0x60] sm:$0xff]
    %v1607 = vld [vmem:[%s1593 + $0x68] sm:$0xff]
    %v1608 = vld [vmem:[%s1593 + $0x70] sm:$0xff]
    %v1609 = vld [vmem:[%s1593 + $0x78] sm:$0xff]
    %1610 = vmatpush.msra.mxu0 %v1609
    %1611 = vmatpush.msra.mxu0 %v1608
    %1612 = vmatpush.msra.mxu0 %v1607
    %1613 = vmatpush.msra.mxu0 %v1606
    %1614 = vmatpush.msra.mxu0 %v1605
    %1615 = vmatpush.msra.mxu0 %v1604
    %1616 = vmatpush.msra.mxu0 %v1603
    %1617 = vmatpush.msra.mxu0 %v1602
    %1618 = vmatpush.msra.mxu0 %v1601
    %1619 = vmatpush.msra.mxu0 %v1600
    %1620 = vmatpush.msra.mxu0 %v1599
    %1621 = vmatpush.msra.mxu0 %v1598
    %1622 = vmatpush.msra.mxu0 %v1597
    %1623 = vmatpush.msra.mxu0 %v1596
    %1624 = vmatpush.msra.mxu0 %v1595
    %1625 = vmatpush.msra.mxu0 %v1594
    %1626 = vmatmul.f32.gmra.mxu0 %v1303
    %v1627 = vpop.f32.mrf.mxu0
    %v1628 = vadd.f32 0.0, %v1627
    %1629 = vmatmul.f32.gmra.mxu0 %v1304
    %v1630 = vpop.f32.mrf.mxu0
    %v1631 = vadd.f32 0.0, %v1630
    %1632 = vdwg.mxu0
    %s1633 = scalar_lea.vmem %s6, 384
    %v1634 = vld [vmem:[%s1633] sm:$0xff]
    %v1635 = vld [vmem:[%s1633 + $0x8] sm:$0xff]
    %v1636 = vld [vmem:[%s1633 + $0x10] sm:$0xff]
    %v1637 = vld [vmem:[%s1633 + $0x18] sm:$0xff]
    %v1638 = vld [vmem:[%s1633 + $0x20] sm:$0xff]
    %v1639 = vld [vmem:[%s1633 + $0x28] sm:$0xff]
    %v1640 = vld [vmem:[%s1633 + $0x30] sm:$0xff]
    %v1641 = vld [vmem:[%s1633 + $0x38] sm:$0xff]
    %v1642 = vld [vmem:[%s1633 + $0x40] sm:$0xff]
    %v1643 = vld [vmem:[%s1633 + $0x48] sm:$0xff]
    %v1644 = vld [vmem:[%s1633 + $0x50] sm:$0xff]
    %v1645 = vld [vmem:[%s1633 + $0x58] sm:$0xff]
    %v1646 = vld [vmem:[%s1633 + $0x60] sm:$0xff]
    %v1647 = vld [vmem:[%s1633 + $0x68] sm:$0xff]
    %v1648 = vld [vmem:[%s1633 + $0x70] sm:$0xff]
    %v1649 = vld [vmem:[%s1633 + $0x78] sm:$0xff]
    %1650 = vmatpush.msra.mxu0 %v1649
    %1651 = vmatpush.msra.mxu0 %v1648
    %1652 = vmatpush.msra.mxu0 %v1647
    %1653 = vmatpush.msra.mxu0 %v1646
    %1654 = vmatpush.msra.mxu0 %v1645
    %1655 = vmatpush.msra.mxu0 %v1644
    %1656 = vmatpush.msra.mxu0 %v1643
    %1657 = vmatpush.msra.mxu0 %v1642
    %1658 = vmatpush.msra.mxu0 %v1641
    %1659 = vmatpush.msra.mxu0 %v1640
    %1660 = vmatpush.msra.mxu0 %v1639
    %1661 = vmatpush.msra.mxu0 %v1638
    %1662 = vmatpush.msra.mxu0 %v1637
    %1663 = vmatpush.msra.mxu0 %v1636
    %1664 = vmatpush.msra.mxu0 %v1635
    %1665 = vmatpush.msra.mxu0 %v1634
    %1666 = vmatmul.f32.gmra.mxu0 %v1303
    %v1667 = vpop.f32.mrf.mxu0
    %v1668 = vadd.f32 0.0, %v1667
    %1669 = vmatmul.f32.gmra.mxu0 %v1304
    %v1670 = vpop.f32.mrf.mxu0
    %v1671 = vadd.f32 0.0, %v1670
    %1672 = vdwg.mxu0
    %v1674 = vsel %vm384, %v1588, 0
    %v1677 = vsel %vm384, %v1591, 0
    %v1680 = vsel %vm384, %v1628, 0
    %v1683 = vsel %vm384, %v1631, 0
    %1685 = vmatpush.xpose.msra.mxu0 0.0
    %1686 = vmatpush.xpose.msra.mxu0 0.0
    %1687 = vmatpush.xpose.msra.mxu0 0.0
    %1688 = vmatpush.xpose.msra.mxu0 0.0
    %1689 = vmatpush.xpose.msra.mxu0 0.0
    %1690 = vmatpush.xpose.msra.mxu0 0.0
    %1691 = vmatpush.xpose.msra.mxu0 0.0
    %1692 = vmatpush.xpose.msra.mxu0 0.0
    %1693 = vmatpush.xpose.msra.mxu0 0.0
    %1694 = vmatpush.xpose.msra.mxu0 0.0
    %1695 = vmatpush.xpose.msra.mxu0 0.0
    %1696 = vmatpush.xpose.msra.mxu0 0.0
    %1697 = vmatpush.xpose.msra.mxu0 0.0
    %1698 = vmatpush.xpose.msra.mxu0 0.0
    %1699 = vmatpush.xpose.msra.mxu0 %v1683
    %1700 = vmatpush.xpose.msra.mxu0 %v1680
    %1701 = vmatmul.f32.gmra.mxu0 %v1674
    %v1702 = vpop.f32.mrf.mxu0
    %v1703 = vadd.f32 0.0, %v1702
    %1704 = vmatmul.f32.gmra.mxu0 %v1677
    %v1705 = vpop.f32.mrf.mxu0
    %v1706 = vadd.f32 0.0, %v1705
    %1707 = vdwg.mxu0
    %v1708 = vmul.f32 %v1703, 0.125
    %v1709 = vmul.f32 %v1706, 0.125
    %v1710 = vadd.f32 %v1708, %v209
    %v1711 = vadd.f32 %v1709, %v210
    %v1712 = vsel %vm424, %v1710, -inf
    %1713 = vmax.xlane.f32.xlu0 %v1712
    %v1714 = vpop.xlane.xlu0 %1713
    %v1715 = vsel %vm428, %v1711, -inf
    %1716 = vmax.xlane.f32.xlu0 %v1715
    %v1717 = vpop.xlane.xlu0 %1716
    %v1718 = vsub.f32 %v1710, %v1714
    %v1719 = vsub.f32 %v1711, %v1717
    %v1720 = vmul.f32 %v1718, 1.442695
    %v1721 = vpow.pop %v1720
    %v1722 = vmul.f32 %v1719, 1.442695
    %v1723 = vpow.pop %v1722
    %v1724 = vsel %vm424, %v1721, 0.0
    %1725 = vadd.xlane.f32.xlu0 %v1724
    %v1726 = vpop.xlane.xlu0 %1725
    %v1727 = vsel %vm428, %v1723, 0.0
    %1728 = vadd.xlane.f32.xlu0 %v1727
    %v1729 = vpop.xlane.xlu0 %1728
    %v1730 = vrcp.pop %v1726
    %v1731 = vmul.f32 %v1726, %v1730
    %v1732 = vsub.f32 1.0, %v1731
    %v1733 = vmul.f32 %v1730, %v1732
    %v1734 = vadd.f32 %v1730, %v1733
    %vm1735 = vweird.f32 %v1726
    %vm1736 = vweird.f32 %v1730
    %vm1737 = vmor %vm1735, %vm1736
    %v1738 = vsel %vm1737, %v1730, %v1734
    %v1739 = vand.u32 2147483647, %v1726
    %vm1740 = vcmp.eq.f32.partialorder %v1739, 8.507059e+37
    %v1741 = vand.u32 %v1726, 2147483648
    %v1742 = vor.u32 1.1754944e-38, %v1741
    %v1743 = vsel %vm1740, %v1742, %v1738
    %v1744 = vmul.f32 %v1721, %v1743
    %v1745 = vrcp.pop %v1729
    %v1746 = vmul.f32 %v1729, %v1745
    %v1747 = vsub.f32 1.0, %v1746
    %v1748 = vmul.f32 %v1745, %v1747
    %v1749 = vadd.f32 %v1745, %v1748
    %vm1750 = vweird.f32 %v1729
    %vm1751 = vweird.f32 %v1745
    %vm1752 = vmor %vm1750, %vm1751
    %v1753 = vsel %vm1752, %v1745, %v1749
    %v1754 = vand.u32 2147483647, %v1729
    %vm1755 = vcmp.eq.f32.partialorder %v1754, 8.507059e+37
    %v1756 = vand.u32 %v1729, 2147483648
    %v1757 = vor.u32 1.1754944e-38, %v1756
    %v1758 = vsel %vm1755, %v1757, %v1753
    %v1759 = vmul.f32 %v1723, %v1758
    %v1761 = vsel %vm424, %v1744, 0
    %v1764 = vsel %vm424, %v1759, 0
    %v1767 = vsel %vm214, %v1671, 0
    %1769 = vmatpush.msra.mxu0 0.0
    %1770 = vmatpush.msra.mxu0 0.0
    %1771 = vmatpush.msra.mxu0 0.0
    %1772 = vmatpush.msra.mxu0 0.0
    %1773 = vmatpush.msra.mxu0 0.0
    %1774 = vmatpush.msra.mxu0 0.0
    %1775 = vmatpush.msra.mxu0 0.0
    %1776 = vmatpush.msra.mxu0 0.0
    %1777 = vmatpush.msra.mxu0 0.0
    %1778 = vmatpush.msra.mxu0 0.0
    %1779 = vmatpush.msra.mxu0 0.0
    %1780 = vmatpush.msra.mxu0 0.0
    %1781 = vmatpush.msra.mxu0 0.0
    %1782 = vmatpush.msra.mxu0 0.0
    %1783 = vmatpush.msra.mxu0 %v1767
    %1784 = vmatpush.msra.mxu0 %v1668
    %1785 = vmatmul.f32.gmra.mxu0 %v1761
    %v1786 = vpop.f32.mrf.mxu0
    %v1787 = vadd.f32 0.0, %v1786
    %1788 = vmatmul.f32.gmra.mxu0 %v1764
    %v1789 = vpop.f32.mrf.mxu0
    %v1790 = vadd.f32 0.0, %v1789
    %1791 = vdwg.mxu0
    %s1792 = scalar_lea.vmem %s7, 192
    %v1793 = vld [vmem:[%s1792] sm:$0xff]
    %v1794 = vld [vmem:[%s1792 + $0x8] sm:$0xff]
    %v1795 = vld [vmem:[%s1792 + $0x10] sm:$0xff]
    %v1796 = vld [vmem:[%s1792 + $0x18] sm:$0xff]
    %v1797 = vld [vmem:[%s1792 + $0x20] sm:$0xff]
    %v1798 = vld [vmem:[%s1792 + $0x28] sm:$0xff]
    %v1799 = vld [vmem:[%s1792 + $0x30] sm:$0xff]
    %v1800 = vld [vmem:[%s1792 + $0x38] sm:$0xff]
    %v1802 = vsel %vm384, %v1787, 0
    %v1805 = vsel %vm384, %v1790, 0
    %1807 = vmatpush.msra.mxu0 0.0
    %1808 = vmatpush.msra.mxu0 0.0
    %1809 = vmatpush.msra.mxu0 0.0
    %1810 = vmatpush.msra.mxu0 0.0
    %1811 = vmatpush.msra.mxu0 0.0
    %1812 = vmatpush.msra.mxu0 0.0
    %1813 = vmatpush.msra.mxu0 0.0
    %1814 = vmatpush.msra.mxu0 0.0
    %1815 = vmatpush.msra.mxu0 %v1800
    %1816 = vmatpush.msra.mxu0 %v1799
    %1817 = vmatpush.msra.mxu0 %v1798
    %1818 = vmatpush.msra.mxu0 %v1797
    %1819 = vmatpush.msra.mxu0 %v1796
    %1820 = vmatpush.msra.mxu0 %v1795
    %1821 = vmatpush.msra.mxu0 %v1794
    %1822 = vmatpush.msra.mxu0 %v1793
    %1823 = vmatmul.f32.gmra.mxu0 %v1802
    %v1824 = vpop.f32.mrf.mxu0
    %v1825 = vadd.f32 0.0, %v1824
    %1826 = vmatmul.f32.gmra.mxu0 %v1805
    %v1827 = vpop.f32.mrf.mxu0
    %v1828 = vadd.f32 0.0, %v1827
    %1829 = vdwg.mxu0
    %v1831 = vsel %vm384, %v1539, 0
    %v1834 = vsel %vm384, %v1542, 0
    %1836 = vmatpush.msra.mxu0 0.0
    %1837 = vmatpush.msra.mxu0 0.0
    %1838 = vmatpush.msra.mxu0 0.0
    %1839 = vmatpush.msra.mxu0 0.0
    %1840 = vmatpush.msra.mxu0 0.0
    %1841 = vmatpush.msra.mxu0 0.0
    %1842 = vmatpush.msra.mxu0 0.0
    %1843 = vmatpush.msra.mxu0 0.0
    %1844 = vmatpush.msra.mxu0 %v1552
    %1845 = vmatpush.msra.mxu0 %v1551
    %1846 = vmatpush.msra.mxu0 %v1550
    %1847 = vmatpush.msra.mxu0 %v1549
    %1848 = vmatpush.msra.mxu0 %v1548
    %1849 = vmatpush.msra.mxu0 %v1547
    %1850 = vmatpush.msra.mxu0 %v1546
    %1851 = vmatpush.msra.mxu0 %v1545
    %1852 = vmatmul.f32.gmra.mxu0 %v1831
    %v1853 = vpop.f32.mrf.mxu0
    %v1854 = vadd.f32 %v1825, %v1853
    %1855 = vmatmul.f32.gmra.mxu0 %v1834
    %v1856 = vpop.f32.mrf.mxu0
    %v1857 = vadd.f32 %v1828, %v1856
    %1858 = vdwg.mxu0
    %v1859 = vadd.f32 %v1254, %v1854
    %v1860 = vadd.f32 %v1255, %v1857
    %s1861 = scalar_lea.vmem %s9, 1
    %v1862 = vld [vmem:[%s1861] sm:$0x1]
    %1863 = vadd.xlane.f32.xlu0 %v1859
    %v1864 = vpop.xlane.xlu0 %1863
    %v1865 = vsel %vm214, %v1860, 0.0
    %1866 = vadd.xlane.f32.xlu0 %v1865
    %v1867 = vpop.xlane.xlu0 %1866
    %v1868 = vmul.f32 %v1864, %v224
    %v1869 = vmul.f32 %v1867, %v224
    %v1870 = vsub.f32 %v1859, %v1868
    %v1871 = vsub.f32 %v1860, %v1869
    %v1872 = vmul.f32 %v1870, %v1870
    %v1873 = vmul.f32 %v1871, %v1871
    %1874 = vadd.xlane.f32.xlu0 %v1872
    %v1875 = vpop.xlane.xlu0 %1874
    %v1876 = vsel %vm214, %v1873, 0.0
    %1877 = vadd.xlane.f32.xlu0 %v1876
    %v1878 = vpop.xlane.xlu0 %1877
    %v1879 = vmul.f32 %v1875, %v224
    %v1880 = vmul.f32 %v1878, %v224
    %v1881 = vadd.f32 %v1879, 1e-05
    %v1882 = vadd.f32 %v1880, 1e-05
    %v1883 = vrsqrt.pop %v1881
    %v1884 = vmul.f32 %v1883, %v1881
    %v1885 = vmul.f32 %v1884, %v1883
    %v1886 = vmul.f32 0.5, %v1885
    %v1887 = vsub.f32 1.5, %v1886
    %v1888 = vmul.f32 %v1883, %v1887
    %vm1889 = vweird.f32 %v1881
    %vm1890 = vweird.f32 %v1883
    %vm1891 = vmor %vm1889, %vm1890
    %v1892 = vsel %vm1891, %v1883, %v1888
    %v1893 = vrsqrt.pop %v1882
    %v1894 = vmul.f32 %v1893, %v1882
    %v1895 = vmul.f32 %v1894, %v1893
    %v1896 = vmul.f32 0.5, %v1895
    %v1897 = vsub.f32 1.5, %v1896
    %v1898 = vmul.f32 %v1893, %v1897
    %vm1899 = vweird.f32 %v1882
    %vm1900 = vweird.f32 %v1893
    %vm1901 = vmor %vm1899, %vm1900
    %v1902 = vsel %vm1901, %v1893, %v1898
    %v1903 = vmul.f32 %v1870, %v1892
    %v1904 = vmul.f32 %v1871, %v1902
    %v1906 = vperm.slane %v1862, 0
    %v1908 = vmul.f32 %v1903, %v1906
    %v1909 = vmul.f32 %v1904, %v1906
    %s1910 = scalar_lea.vmem %s10, 512
    %v1911 = vld [vmem:[%s1910] sm:$0xff]
    %v1912 = vld [vmem:[%s1910 + $0x8] sm:$0xff]
    %v1913 = vld [vmem:[%s1910 + $0x10] sm:$0xff]
    %v1914 = vld [vmem:[%s1910 + $0x18] sm:$0xff]
    %v1915 = vld [vmem:[%s1910 + $0x20] sm:$0xff]
    %v1916 = vld [vmem:[%s1910 + $0x28] sm:$0xff]
    %v1917 = vld [vmem:[%s1910 + $0x30] sm:$0xff]
    %v1918 = vld [vmem:[%s1910 + $0x38] sm:$0xff]
    %v1919 = vld [vmem:[%s1910 + $0x40] sm:$0xff]
    %v1920 = vld [vmem:[%s1910 + $0x48] sm:$0xff]
    %v1921 = vld [vmem:[%s1910 + $0x50] sm:$0xff]
    %v1922 = vld [vmem:[%s1910 + $0x58] sm:$0xff]
    %v1923 = vld [vmem:[%s1910 + $0x60] sm:$0xff]
    %v1924 = vld [vmem:[%s1910 + $0x68] sm:$0xff]
    %v1925 = vld [vmem:[%s1910 + $0x70] sm:$0xff]
    %v1926 = vld [vmem:[%s1910 + $0x78] sm:$0xff]
    %v1927 = vld [vmem:[%s1910 + $0x80] sm:$0xff]
    %v1928 = vld [vmem:[%s1910 + $0x88] sm:$0xff]
    %v1929 = vld [vmem:[%s1910 + $0x90] sm:$0xff]
    %v1930 = vld [vmem:[%s1910 + $0x98] sm:$0xff]
    %v1931 = vld [vmem:[%s1910 + $0xa0] sm:$0xff]
    %v1932 = vld [vmem:[%s1910 + $0xa8] sm:$0xff]
    %v1933 = vld [vmem:[%s1910 + $0xb0] sm:$0xff]
    %v1934 = vld [vmem:[%s1910 + $0xb8] sm:$0xff]
    %v1935 = vld [vmem:[%s1910 + $0xc0] sm:$0xff]
    %v1936 = vld [vmem:[%s1910 + $0xc8] sm:$0xff]
    %v1937 = vld [vmem:[%s1910 + $0xd0] sm:$0xff]
    %v1938 = vld [vmem:[%s1910 + $0xd8] sm:$0xff]
    %v1939 = vld [vmem:[%s1910 + $0xe0] sm:$0xff]
    %v1940 = vld [vmem:[%s1910 + $0xe8] sm:$0xff]
    %v1941 = vld [vmem:[%s1910 + $0xf0] sm:$0xff]
    %v1942 = vld [vmem:[%s1910 + $0xf8] sm:$0xff]
    %v1943 = vld [vmem:[%s1910 + $0x100] sm:$0xff]
    %v1944 = vld [vmem:[%s1910 + $0x108] sm:$0xff]
    %v1945 = vld [vmem:[%s1910 + $0x110] sm:$0xff]
    %v1946 = vld [vmem:[%s1910 + $0x118] sm:$0xff]
    %v1947 = vld [vmem:[%s1910 + $0x120] sm:$0xff]
    %v1948 = vld [vmem:[%s1910 + $0x128] sm:$0xff]
    %v1949 = vld [vmem:[%s1910 + $0x130] sm:$0xff]
    %v1950 = vld [vmem:[%s1910 + $0x138] sm:$0xff]
    %v1951 = vld [vmem:[%s1910 + $0x140] sm:$0xff]
    %v1952 = vld [vmem:[%s1910 + $0x148] sm:$0xff]
    %v1953 = vld [vmem:[%s1910 + $0x150] sm:$0xff]
    %v1954 = vld [vmem:[%s1910 + $0x158] sm:$0xff]
    %v1955 = vld [vmem:[%s1910 + $0x160] sm:$0xff]
    %v1956 = vld [vmem:[%s1910 + $0x168] sm:$0xff]
    %v1957 = vld [vmem:[%s1910 + $0x170] sm:$0xff]
    %v1958 = vld [vmem:[%s1910 + $0x178] sm:$0xff]
    %v1959 = vld [vmem:[%s1910 + $0x180] sm:$0xff]
    %v1960 = vld [vmem:[%s1910 + $0x188] sm:$0xff]
    %v1961 = vld [vmem:[%s1910 + $0x190] sm:$0xff]
    %v1962 = vld [vmem:[%s1910 + $0x198] sm:$0xff]
    %v1963 = vld [vmem:[%s1910 + $0x1a0] sm:$0xff]
    %v1964 = vld [vmem:[%s1910 + $0x1a8] sm:$0xff]
    %v1965 = vld [vmem:[%s1910 + $0x1b0] sm:$0xff]
    %v1966 = vld [vmem:[%s1910 + $0x1b8] sm:$0xff]
    %v1967 = vld [vmem:[%s1910 + $0x1c0] sm:$0xff]
    %v1968 = vld [vmem:[%s1910 + $0x1c8] sm:$0xff]
    %v1969 = vld [vmem:[%s1910 + $0x1d0] sm:$0xff]
    %v1970 = vld [vmem:[%s1910 + $0x1d8] sm:$0xff]
    %v1971 = vld [vmem:[%s1910 + $0x1e0] sm:$0xff]
    %v1972 = vld [vmem:[%s1910 + $0x1e8] sm:$0xff]
    %v1973 = vld [vmem:[%s1910 + $0x1f0] sm:$0xff]
    %v1974 = vld [vmem:[%s1910 + $0x1f8] sm:$0xff]
    %1975 = vmatpush.msra.mxu0 %v1971
    %1976 = vmatpush.msra.mxu0 %v1967
    %1977 = vmatpush.msra.mxu0 %v1963
    %1978 = vmatpush.msra.mxu0 %v1959
    %1979 = vmatpush.msra.mxu0 %v1955
    %1980 = vmatpush.msra.mxu0 %v1951
    %1981 = vmatpush.msra.mxu0 %v1947
    %1982 = vmatpush.msra.mxu0 %v1943
    %1983 = vmatpush.msra.mxu0 %v1939
    %1984 = vmatpush.msra.mxu0 %v1935
    %1985 = vmatpush.msra.mxu0 %v1931
    %1986 = vmatpush.msra.mxu0 %v1927
    %1987 = vmatpush.msra.mxu0 %v1923
    %1988 = vmatpush.msra.mxu0 %v1919
    %1989 = vmatpush.msra.mxu0 %v1915
    %1990 = vmatpush.msra.mxu0 %v1911
    %1991 = vmatmul.f32.gmra.mxu0 %v1908
    %v1992 = vpop.f32.mrf.mxu0
    %v1993 = vadd.f32 0.0, %v1992
    %1994 = vmatmul.f32.gmra.mxu0 %v1909
    %v1995 = vpop.f32.mrf.mxu0
    %v1996 = vadd.f32 0.0, %v1995
    %1997 = vdwg.mxu0
    %1998 = vmatpush.msra.mxu0 %v1972
    %1999 = vmatpush.msra.mxu0 %v1968
    %2000 = vmatpush.msra.mxu0 %v1964
    %2001 = vmatpush.msra.mxu0 %v1960
    %2002 = vmatpush.msra.mxu0 %v1956
    %2003 = vmatpush.msra.mxu0 %v1952
    %2004 = vmatpush.msra.mxu0 %v1948
    %2005 = vmatpush.msra.mxu0 %v1944
    %2006 = vmatpush.msra.mxu0 %v1940
    %2007 = vmatpush.msra.mxu0 %v1936
    %2008 = vmatpush.msra.mxu0 %v1932
    %2009 = vmatpush.msra.mxu0 %v1928
    %2010 = vmatpush.msra.mxu0 %v1924
    %2011 = vmatpush.msra.mxu0 %v1920
    %2012 = vmatpush.msra.mxu0 %v1916
    %2013 = vmatpush.msra.mxu0 %v1912
    %2014 = vmatmul.f32.gmra.mxu0 %v1908
    %v2015 = vpop.f32.mrf.mxu0
    %v2016 = vadd.f32 0.0, %v2015
    %2017 = vmatmul.f32.gmra.mxu0 %v1909
    %v2018 = vpop.f32.mrf.mxu0
    %v2019 = vadd.f32 0.0, %v2018
    %2020 = vdwg.mxu0
    %2021 = vmatpush.msra.mxu0 %v1973
    %2022 = vmatpush.msra.mxu0 %v1969
    %2023 = vmatpush.msra.mxu0 %v1965
    %2024 = vmatpush.msra.mxu0 %v1961
    %2025 = vmatpush.msra.mxu0 %v1957
    %2026 = vmatpush.msra.mxu0 %v1953
    %2027 = vmatpush.msra.mxu0 %v1949
    %2028 = vmatpush.msra.mxu0 %v1945
    %2029 = vmatpush.msra.mxu0 %v1941
    %2030 = vmatpush.msra.mxu0 %v1937
    %2031 = vmatpush.msra.mxu0 %v1933
    %2032 = vmatpush.msra.mxu0 %v1929
    %2033 = vmatpush.msra.mxu0 %v1925
    %2034 = vmatpush.msra.mxu0 %v1921
    %2035 = vmatpush.msra.mxu0 %v1917
    %2036 = vmatpush.msra.mxu0 %v1913
    %2037 = vmatmul.f32.gmra.mxu0 %v1908
    %v2038 = vpop.f32.mrf.mxu0
    %v2039 = vadd.f32 0.0, %v2038
    %2040 = vmatmul.f32.gmra.mxu0 %v1909
    %v2041 = vpop.f32.mrf.mxu0
    %v2042 = vadd.f32 0.0, %v2041
    %2043 = vdwg.mxu0
    %2044 = vmatpush.msra.mxu0 %v1974
    %2045 = vmatpush.msra.mxu0 %v1970
    %2046 = vmatpush.msra.mxu0 %v1966
    %2047 = vmatpush.msra.mxu0 %v1962
    %2048 = vmatpush.msra.mxu0 %v1958
    %2049 = vmatpush.msra.mxu0 %v1954
    %2050 = vmatpush.msra.mxu0 %v1950
    %2051 = vmatpush.msra.mxu0 %v1946
    %2052 = vmatpush.msra.mxu0 %v1942
    %2053 = vmatpush.msra.mxu0 %v1938
    %2054 = vmatpush.msra.mxu0 %v1934
    %2055 = vmatpush.msra.mxu0 %v1930
    %2056 = vmatpush.msra.mxu0 %v1926
    %2057 = vmatpush.msra.mxu0 %v1922
    %2058 = vmatpush.msra.mxu0 %v1918
    %2059 = vmatpush.msra.mxu0 %v1914
    %2060 = vmatmul.f32.gmra.mxu0 %v1908
    %v2061 = vpop.f32.mrf.mxu0
    %v2062 = vadd.f32 0.0, %v2061
    %2063 = vmatmul.f32.gmra.mxu0 %v1909
    %v2064 = vpop.f32.mrf.mxu0
    %v2065 = vadd.f32 0.0, %v2064
    %2066 = vdwg.mxu0
    %v2067 = vmul.f32 %v1993, %v1993
    %v2068 = vmul.f32 %v2016, %v2016
    %v2069 = vmul.f32 %v2039, %v2039
    %v2070 = vmul.f32 %v2062, %v2062
    %v2071 = vmul.f32 %v1996, %v1996
    %v2072 = vmul.f32 %v2019, %v2019
    %v2073 = vmul.f32 %v2042, %v2042
    %v2074 = vmul.f32 %v2065, %v2065
    %v2075 = vmul.f32 %v1993, %v2067
    %v2076 = vmul.f32 %v2016, %v2068
    %v2077 = vmul.f32 %v2039, %v2069
    %v2078 = vmul.f32 %v2062, %v2070
    %v2079 = vmul.f32 %v1996, %v2071
    %v2080 = vmul.f32 %v2019, %v2072
    %v2081 = vmul.f32 %v2042, %v2073
    %v2082 = vmul.f32 %v2065, %v2074
    %v2083 = vmul.f32 %v2075, 0.044715
    %v2084 = vmul.f32 %v2076, 0.044715
    %v2085 = vmul.f32 %v2077, 0.044715
    %v2086 = vmul.f32 %v2078, 0.044715
    %v2087 = vmul.f32 %v2079, 0.044715
    %v2088 = vmul.f32 %v2080, 0.044715
    %v2089 = vmul.f32 %v2081, 0.044715
    %v2090 = vmul.f32 %v2082, 0.044715
    %v2091 = vadd.f32 %v1993, %v2083
    %v2092 = vadd.f32 %v2016, %v2084
    %v2093 = vadd.f32 %v2039, %v2085
    %v2094 = vadd.f32 %v2062, %v2086
    %v2095 = vadd.f32 %v1996, %v2087
    %v2096 = vadd.f32 %v2019, %v2088
    %v2097 = vadd.f32 %v2042, %v2089
    %v2098 = vadd.f32 %v2065, %v2090
    %v2099 = vmul.f32 %v2091, 0.7978846
    %v2100 = vmul.f32 %v2092, 0.7978846
    %v2101 = vmul.f32 %v2093, 0.7978846
    %v2102 = vmul.f32 %v2094, 0.7978846
    %v2103 = vmul.f32 %v2095, 0.7978846
    %v2104 = vmul.f32 %v2096, 0.7978846
    %v2105 = vmul.f32 %v2097, 0.7978846
    %v2106 = vmul.f32 %v2098, 0.7978846
    %v2107 = vtanh.pop %v2099
    %v2108 = vtanh.pop %v2100
    %v2109 = vtanh.pop %v2101
    %v2110 = vtanh.pop %v2102
    %v2111 = vtanh.pop %v2103
    %v2112 = vtanh.pop %v2104
    %v2113 = vtanh.pop %v2105
    %v2114 = vtanh.pop %v2106
    %v2115 = vadd.f32 %v2107, 1.0
    %v2116 = vadd.f32 %v2108, 1.0
    %v2117 = vadd.f32 %v2109, 1.0
    %v2118 = vadd.f32 %v2110, 1.0
    %v2119 = vadd.f32 %v2111, 1.0
    %v2120 = vadd.f32 %v2112, 1.0
    %v2121 = vadd.f32 %v2113, 1.0
    %v2122 = vadd.f32 %v2114, 1.0
    %v2123 = vmul.f32 %v2115, 0.5
    %v2124 = vmul.f32 %v2116, 0.5
    %v2125 = vmul.f32 %v2117, 0.5
    %v2126 = vmul.f32 %v2118, 0.5
    %v2127 = vmul.f32 %v2119, 0.5
    %v2128 = vmul.f32 %v2120, 0.5
    %v2129 = vmul.f32 %v2121, 0.5
    %v2130 = vmul.f32 %v2122, 0.5
    %v2131 = vmul.f32 %v1993, %v2123
    %v2132 = vmul.f32 %v2016, %v2124
    %v2133 = vmul.f32 %v2039, %v2125
    %v2134 = vmul.f32 %v2062, %v2126
    %v2135 = vmul.f32 %v1996, %v2127
    %v2136 = vmul.f32 %v2019, %v2128
    %v2137 = vmul.f32 %v2042, %v2129
    %v2138 = vmul.f32 %v2065, %v2130
    %s2139 = scalar_lea.vmem [#allocation2], 512
    %v2140 = vld [vmem:[%s2139] sm:$0xff]
    %v2141 = vld [vmem:[%s2139 + $0x8] sm:$0xff]
    %v2142 = vld [vmem:[%s2139 + $0x10] sm:$0xff]
    %v2143 = vld [vmem:[%s2139 + $0x18] sm:$0xff]
    %v2144 = vld [vmem:[%s2139 + $0x20] sm:$0xff]
    %v2145 = vld [vmem:[%s2139 + $0x28] sm:$0xff]
    %v2146 = vld [vmem:[%s2139 + $0x30] sm:$0xff]
    %v2147 = vld [vmem:[%s2139 + $0x38] sm:$0xff]
    %v2148 = vld [vmem:[%s2139 + $0x40] sm:$0xff]
    %v2149 = vld [vmem:[%s2139 + $0x48] sm:$0xff]
    %v2150 = vld [vmem:[%s2139 + $0x50] sm:$0xff]
    %v2151 = vld [vmem:[%s2139 + $0x58] sm:$0xff]
    %v2152 = vld [vmem:[%s2139 + $0x60] sm:$0xff]
    %v2153 = vld [vmem:[%s2139 + $0x68] sm:$0xff]
    %v2154 = vld [vmem:[%s2139 + $0x70] sm:$0xff]
    %v2155 = vld [vmem:[%s2139 + $0x78] sm:$0xff]
    %v2156 = vld [vmem:[%s2139 + $0x80] sm:$0xff]
    %v2157 = vld [vmem:[%s2139 + $0x88] sm:$0xff]
    %v2158 = vld [vmem:[%s2139 + $0x90] sm:$0xff]
    %v2159 = vld [vmem:[%s2139 + $0x98] sm:$0xff]
    %v2160 = vld [vmem:[%s2139 + $0xa0] sm:$0xff]
    %v2161 = vld [vmem:[%s2139 + $0xa8] sm:$0xff]
    %v2162 = vld [vmem:[%s2139 + $0xb0] sm:$0xff]
    %v2163 = vld [vmem:[%s2139 + $0xb8] sm:$0xff]
    %v2164 = vld [vmem:[%s2139 + $0xc0] sm:$0xff]
    %v2165 = vld [vmem:[%s2139 + $0xc8] sm:$0xff]
    %v2166 = vld [vmem:[%s2139 + $0xd0] sm:$0xff]
    %v2167 = vld [vmem:[%s2139 + $0xd8] sm:$0xff]
    %v2168 = vld [vmem:[%s2139 + $0xe0] sm:$0xff]
    %v2169 = vld [vmem:[%s2139 + $0xe8] sm:$0xff]
    %v2170 = vld [vmem:[%s2139 + $0xf0] sm:$0xff]
    %v2171 = vld [vmem:[%s2139 + $0xf8] sm:$0xff]
    %v2172 = vld [vmem:[%s2139 + $0x100] sm:$0xff]
    %v2173 = vld [vmem:[%s2139 + $0x108] sm:$0xff]
    %v2174 = vld [vmem:[%s2139 + $0x110] sm:$0xff]
    %v2175 = vld [vmem:[%s2139 + $0x118] sm:$0xff]
    %v2176 = vld [vmem:[%s2139 + $0x120] sm:$0xff]
    %v2177 = vld [vmem:[%s2139 + $0x128] sm:$0xff]
    %v2178 = vld [vmem:[%s2139 + $0x130] sm:$0xff]
    %v2179 = vld [vmem:[%s2139 + $0x138] sm:$0xff]
    %v2180 = vld [vmem:[%s2139 + $0x140] sm:$0xff]
    %v2181 = vld [vmem:[%s2139 + $0x148] sm:$0xff]
    %v2182 = vld [vmem:[%s2139 + $0x150] sm:$0xff]
    %v2183 = vld [vmem:[%s2139 + $0x158] sm:$0xff]
    %v2184 = vld [vmem:[%s2139 + $0x160] sm:$0xff]
    %v2185 = vld [vmem:[%s2139 + $0x168] sm:$0xff]
    %v2186 = vld [vmem:[%s2139 + $0x170] sm:$0xff]
    %v2187 = vld [vmem:[%s2139 + $0x178] sm:$0xff]
    %v2188 = vld [vmem:[%s2139 + $0x180] sm:$0xff]
    %v2189 = vld [vmem:[%s2139 + $0x188] sm:$0xff]
    %v2190 = vld [vmem:[%s2139 + $0x190] sm:$0xff]
    %v2191 = vld [vmem:[%s2139 + $0x198] sm:$0xff]
    %v2192 = vld [vmem:[%s2139 + $0x1a0] sm:$0xff]
    %v2193 = vld [vmem:[%s2139 + $0x1a8] sm:$0xff]
    %v2194 = vld [vmem:[%s2139 + $0x1b0] sm:$0xff]
    %v2195 = vld [vmem:[%s2139 + $0x1b8] sm:$0xff]
    %v2196 = vld [vmem:[%s2139 + $0x1c0] sm:$0xff]
    %v2197 = vld [vmem:[%s2139 + $0x1c8] sm:$0xff]
    %v2198 = vld [vmem:[%s2139 + $0x1d0] sm:$0xff]
    %v2199 = vld [vmem:[%s2139 + $0x1d8] sm:$0xff]
    %v2200 = vld [vmem:[%s2139 + $0x1e0] sm:$0xff]
    %v2201 = vld [vmem:[%s2139 + $0x1e8] sm:$0xff]
    %v2202 = vld [vmem:[%s2139 + $0x1f0] sm:$0xff]
    %v2203 = vld [vmem:[%s2139 + $0x1f8] sm:$0xff]
    %2204 = vmatpush.msra.mxu0 %v2155
    %2205 = vmatpush.msra.mxu0 %v2154
    %2206 = vmatpush.msra.mxu0 %v2153
    %2207 = vmatpush.msra.mxu0 %v2152
    %2208 = vmatpush.msra.mxu0 %v2151
    %2209 = vmatpush.msra.mxu0 %v2150
    %2210 = vmatpush.msra.mxu0 %v2149
    %2211 = vmatpush.msra.mxu0 %v2148
    %2212 = vmatpush.msra.mxu0 %v2147
    %2213 = vmatpush.msra.mxu0 %v2146
    %2214 = vmatpush.msra.mxu0 %v2145
    %2215 = vmatpush.msra.mxu0 %v2144
    %2216 = vmatpush.msra.mxu0 %v2143
    %2217 = vmatpush.msra.mxu0 %v2142
    %2218 = vmatpush.msra.mxu0 %v2141
    %2219 = vmatpush.msra.mxu0 %v2140
    %2220 = vmatmul.f32.gmra.mxu0 %v2131
    %v2221 = vpop.f32.mrf.mxu0
    %v2222 = vadd.f32 0.0, %v2221
    %2223 = vmatmul.f32.gmra.mxu0 %v2135
    %v2224 = vpop.f32.mrf.mxu0
    %2225 = vdwg.mxu0
    %2226 = vmatpush.msra.mxu0 %v2171
    %2227 = vmatpush.msra.mxu0 %v2170
    %2228 = vmatpush.msra.mxu0 %v2169
    %2229 = vmatpush.msra.mxu0 %v2168
    %2230 = vmatpush.msra.mxu0 %v2167
    %2231 = vmatpush.msra.mxu0 %v2166
    %2232 = vmatpush.msra.mxu0 %v2165
    %2233 = vmatpush.msra.mxu0 %v2164
    %2234 = vmatpush.msra.mxu0 %v2163
    %2235 = vmatpush.msra.mxu0 %v2162
    %2236 = vmatpush.msra.mxu0 %v2161
    %2237 = vmatpush.msra.mxu0 %v2160
    %2238 = vmatpush.msra.mxu0 %v2159
    %2239 = vmatpush.msra.mxu0 %v2158
    %2240 = vmatpush.msra.mxu0 %v2157
    %2241 = vmatpush.msra.mxu0 %v2156
    %2242 = vmatmul.f32.gmra.mxu0 %v2132
    %v2243 = vpop.f32.mrf.mxu0
    %v2244 = vadd.f32 %v2222, %v2243
    %2245 = vmatmul.f32.gmra.mxu0 %v2136
    %v2246 = vpop.f32.mrf.mxu0
    %2247 = vdwg.mxu0
    %2248 = vmatpush.msra.mxu0 %v2187
    %2249 = vmatpush.msra.mxu0 %v2186
    %2250 = vmatpush.msra.mxu0 %v2185
    %2251 = vmatpush.msra.mxu0 %v2184
    %2252 = vmatpush.msra.mxu0 %v2183
    %2253 = vmatpush.msra.mxu0 %v2182
    %2254 = vmatpush.msra.mxu0 %v2181
    %2255 = vmatpush.msra.mxu0 %v2180
    %2256 = vmatpush.msra.mxu0 %v2179
    %2257 = vmatpush.msra.mxu0 %v2178
    %2258 = vmatpush.msra.mxu0 %v2177
    %2259 = vmatpush.msra.mxu0 %v2176
    %2260 = vmatpush.msra.mxu0 %v2175
    %2261 = vmatpush.msra.mxu0 %v2174
    %2262 = vmatpush.msra.mxu0 %v2173
    %2263 = vmatpush.msra.mxu0 %v2172
    %2264 = vmatmul.f32.gmra.mxu0 %v2133
    %v2265 = vpop.f32.mrf.mxu0
    %v2266 = vadd.f32 %v2244, %v2265
    %2267 = vmatmul.f32.gmra.mxu0 %v2137
    %v2268 = vpop.f32.mrf.mxu0
    %2269 = vdwg.mxu0
    %2270 = vmatpush.msra.mxu0 %v2203
    %2271 = vmatpush.msra.mxu0 %v2202
    %2272 = vmatpush.msra.mxu0 %v2201
    %2273 = vmatpush.msra.mxu0 %v2200
    %2274 = vmatpush.msra.mxu0 %v2199
    %2275 = vmatpush.msra.mxu0 %v2198
    %2276 = vmatpush.msra.mxu0 %v2197
    %2277 = vmatpush.msra.mxu0 %v2196
    %2278 = vmatpush.msra.mxu0 %v2195
    %2279 = vmatpush.msra.mxu0 %v2194
    %2280 = vmatpush.msra.mxu0 %v2193
    %2281 = vmatpush.msra.mxu0 %v2192
    %2282 = vmatpush.msra.mxu0 %v2191
    %2283 = vmatpush.msra.mxu0 %v2190
    %2284 = vmatpush.msra.mxu0 %v2189
    %2285 = vmatpush.msra.mxu0 %v2188
    %2286 = vmatmul.f32.gmra.mxu0 %v2134
    %v2287 = vpop.f32.mrf.mxu0
    %v2288 = vadd.f32 %v2266, %v2287
    %2289 = vmatmul.f32.gmra.mxu0 %v2138
    %v2290 = vpop.f32.mrf.mxu0
    %2291 = vdwg.mxu0
    %v2292 = vadd.f32 %v1859, %v2288
    %v2294 = vrot.slane %v2292, 4
    %vm2296 = vcmask 1040384
    %v2297 = vsel %vm2296, %v2292, %v2294
    %v2298 = vld [vmem:[%s12] sm:$0x1]
    %v2299 = vsel %vm214, %v2297, 0.0
    %2300 = vadd.xlane.f32.xlu0 %v2299
    %v2301 = vpop.xlane.xlu0 %2300
    %v2302 = vmul.f32 %v2301, %v224
    %v2303 = vsub.f32 %v2297, %v2302
    %v2304 = vmul.f32 %v2303, %v2303
    %v2305 = vsel %vm214, %v2304, 0.0
    %2306 = vadd.xlane.f32.xlu0 %v2305
    %v2307 = vpop.xlane.xlu0 %2306
    %v2308 = vmul.f32 %v2307, %v224
    %v2309 = vadd.f32 %v2308, 1e-05
    %v2310 = vrsqrt.pop %v2309
    %v2311 = vmul.f32 %v2310, %v2309
    %v2312 = vmul.f32 %v2311, %v2310
    %v2313 = vmul.f32 0.5, %v2312
    %v2314 = vsub.f32 1.5, %v2313
    %v2315 = vmul.f32 %v2310, %v2314
    %vm2316 = vweird.f32 %v2309
    %vm2317 = vweird.f32 %v2310
    %vm2318 = vmor %vm2316, %vm2317
    %v2319 = vsel %vm2318, %v2310, %v2315
    %v2320 = vmul.f32 %v2303, %v2319
    %v2322 = vperm.slane %v2298, 0
    %v2324 = vmul.f32 %v2320, %v2322
    %v2325 = vld [vmem:[%s18] sm:$0x3]
    %v2327 = vperm.slane %v2325, 0
    %v2328 = vperm.slane %v2325, 1
    %v2331 = vadd.f32 %v2327, 0.0
    %v2332 = vadd.f32 %v2328, 0.0
    %v2333 = vld [vmem:[#allocation4] sm:$0xff]
    %v2334 = vld [vmem:[#allocation4 + $0x8] sm:$0xff]
    %v2335 = vld [vmem:[#allocation4 + $0x10] sm:$0xff]
    %v2336 = vld [vmem:[#allocation4 + $0x18] sm:$0xff]
    %v2337 = vld [vmem:[#allocation4 + $0x20] sm:$0xff]
    %v2338 = vld [vmem:[#allocation4 + $0x28] sm:$0xff]
    %v2339 = vld [vmem:[#allocation4 + $0x30] sm:$0xff]
    %v2340 = vld [vmem:[#allocation4 + $0x38] sm:$0xff]
    %v2341 = vld [vmem:[#allocation4 + $0x40] sm:$0xff]
    %v2342 = vld [vmem:[#allocation4 + $0x48] sm:$0xff]
    %v2343 = vld [vmem:[#allocation4 + $0x50] sm:$0xff]
    %v2344 = vld [vmem:[#allocation4 + $0x58] sm:$0xff]
    %v2345 = vld [vmem:[#allocation4 + $0x60] sm:$0xff]
    %v2346 = vld [vmem:[#allocation4 + $0x68] sm:$0xff]
    %v2347 = vld [vmem:[#allocation4 + $0x70] sm:$0xff]
    %v2348 = vld [vmem:[#allocation4 + $0x78] sm:$0xff]
    %v2349 = vld [vmem:[%s14] sm:$0x1]
    %v2351 = vperm.slane %v2349, 0
    %2353 = vmatpush.msra.mxu0 %v2348
    %2354 = vmatpush.msra.mxu0 %v2347
    %2355 = vmatpush.msra.mxu0 %v2346
    %2356 = vmatpush.msra.mxu0 %v2345
    %2357 = vmatpush.msra.mxu0 %v2344
    %2358 = vmatpush.msra.mxu0 %v2343
    %2359 = vmatpush.msra.mxu0 %v2342
    %2360 = vmatpush.msra.mxu0 %v2341
    %2361 = vmatpush.msra.mxu0 %v2340
    %2362 = vmatpush.msra.mxu0 %v2339
    %2363 = vmatpush.msra.mxu0 %v2338
    %2364 = vmatpush.msra.mxu0 %v2337
    %2365 = vmatpush.msra.mxu0 %v2336
    %2366 = vmatpush.msra.mxu0 %v2335
    %2367 = vmatpush.msra.mxu0 %v2334
    %2368 = vmatpush.msra.mxu0 %v2333
    %2369 = vmatmul.f32.gmra.mxu0 %v2324
    %v2370 = vpop.f32.mrf.mxu0
    %v2371 = vadd.f32 %v2351, %v2370
    %2372 = vdwg.mxu0
    %v2373 = vmax.f32 %v2371, 0.0
    %v2374 = vld [vmem:[#allocation6] sm:$0xff]
    %v2375 = vld [vmem:[#allocation6 + $0x8] sm:$0xff]
    %v2376 = vld [vmem:[#allocation6 + $0x10] sm:$0xff]
    %v2377 = vld [vmem:[#allocation6 + $0x18] sm:$0xff]
    %v2378 = vld [vmem:[#allocation6 + $0x20] sm:$0xff]
    %v2379 = vld [vmem:[#allocation6 + $0x28] sm:$0xff]
    %v2380 = vld [vmem:[#allocation6 + $0x30] sm:$0xff]
    %v2381 = vld [vmem:[#allocation6 + $0x38] sm:$0xff]
    %v2382 = vld [vmem:[#allocation6 + $0x40] sm:$0xff]
    %v2383 = vld [vmem:[#allocation6 + $0x48] sm:$0xff]
    %v2384 = vld [vmem:[#allocation6 + $0x50] sm:$0xff]
    %v2385 = vld [vmem:[#allocation6 + $0x58] sm:$0xff]
    %v2386 = vld [vmem:[#allocation6 + $0x60] sm:$0xff]
    %v2387 = vld [vmem:[#allocation6 + $0x68] sm:$0xff]
    %v2388 = vld [vmem:[#allocation6 + $0x70] sm:$0xff]
    %v2389 = vld [vmem:[#allocation6 + $0x78] sm:$0xff]
    %v2390 = vld [vmem:[%s16] sm:$0x1]
    %v2392 = vperm.slane %v2390, 0
    %2394 = vmatpush.msra.mxu0 %v2389
    %2395 = vmatpush.msra.mxu0 %v2388
    %2396 = vmatpush.msra.mxu0 %v2387
    %2397 = vmatpush.msra.mxu0 %v2386
    %2398 = vmatpush.msra.mxu0 %v2385
    %2399 = vmatpush.msra.mxu0 %v2384
    %2400 = vmatpush.msra.mxu0 %v2383
    %2401 = vmatpush.msra.mxu0 %v2382
    %2402 = vmatpush.msra.mxu0 %v2381
    %2403 = vmatpush.msra.mxu0 %v2380
    %2404 = vmatpush.msra.mxu0 %v2379
    %2405 = vmatpush.msra.mxu0 %v2378
    %2406 = vmatpush.msra.mxu0 %v2377
    %2407 = vmatpush.msra.mxu0 %v2376
    %2408 = vmatpush.msra.mxu0 %v2375
    %2409 = vmatpush.msra.mxu0 %v2374
    %2410 = vmatmul.f32.gmra.mxu0 %v2373
    %v2411 = vpop.f32.mrf.mxu0
    %v2412 = vadd.f32 %v2392, %v2411
    %2413 = vdwg.mxu0
    %v2414 = vmax.f32 %v2412, 0.0
    %v2415 = vld [vmem:[#allocation7] sm:$0xff]
    %v2416 = vld [vmem:[#allocation7 + $0x8] sm:$0xff]
    %v2417 = vld [vmem:[#allocation7 + $0x10] sm:$0xff]
    %v2418 = vld [vmem:[#allocation7 + $0x18] sm:$0xff]
    %v2419 = vld [vmem:[#allocation7 + $0x20] sm:$0xff]
    %v2420 = vld [vmem:[#allocation7 + $0x28] sm:$0xff]
    %v2421 = vld [vmem:[#allocation7 + $0x30] sm:$0xff]
    %v2422 = vld [vmem:[#allocation7 + $0x38] sm:$0xff]
    %v2423 = vld [vmem:[#allocation7 + $0x40] sm:$0xff]
    %v2424 = vld [vmem:[#allocation7 + $0x48] sm:$0xff]
    %v2425 = vld [vmem:[#allocation7 + $0x50] sm:$0xff]
    %v2426 = vld [vmem:[#allocation7 + $0x58] sm:$0xff]
    %v2427 = vld [vmem:[#allocation7 + $0x60] sm:$0xff]
    %v2428 = vld [vmem:[#allocation7 + $0x68] sm:$0xff]
    %v2429 = vld [vmem:[#allocation7 + $0x70] sm:$0xff]
    %v2430 = vld [vmem:[#allocation7 + $0x78] sm:$0xff]
    %v2431 = vld [vmem:[#allocation7 + $0x80] sm:$0xff]
    %v2432 = vld [vmem:[#allocation7 + $0x88] sm:$0xff]
    %v2433 = vld [vmem:[#allocation7 + $0x90] sm:$0xff]
    %v2434 = vld [vmem:[#allocation7 + $0x98] sm:$0xff]
    %v2435 = vld [vmem:[#allocation7 + $0xa0] sm:$0xff]
    %v2436 = vld [vmem:[#allocation7 + $0xa8] sm:$0xff]
    %v2437 = vld [vmem:[#allocation7 + $0xb0] sm:$0xff]
    %v2438 = vld [vmem:[#allocation7 + $0xb8] sm:$0xff]
    %v2439 = vld [vmem:[#allocation7 + $0xc0] sm:$0xff]
    %v2440 = vld [vmem:[#allocation7 + $0xc8] sm:$0xff]
    %v2441 = vld [vmem:[#allocation7 + $0xd0] sm:$0xff]
    %v2442 = vld [vmem:[#allocation7 + $0xd8] sm:$0xff]
    %v2443 = vld [vmem:[#allocation7 + $0xe0] sm:$0xff]
    %v2444 = vld [vmem:[#allocation7 + $0xe8] sm:$0xff]
    %v2445 = vld [vmem:[#allocation7 + $0xf0] sm:$0xff]
    %v2446 = vld [vmem:[#allocation7 + $0xf8] sm:$0xff]
    %2447 = vmatpush.msra.mxu0 %v2445
    %2448 = vmatpush.msra.mxu0 %v2443
    %2449 = vmatpush.msra.mxu0 %v2441
    %2450 = vmatpush.msra.mxu0 %v2439
    %2451 = vmatpush.msra.mxu0 %v2437
    %2452 = vmatpush.msra.mxu0 %v2435
    %2453 = vmatpush.msra.mxu0 %v2433
    %2454 = vmatpush.msra.mxu0 %v2431
    %2455 = vmatpush.msra.mxu0 %v2429
    %2456 = vmatpush.msra.mxu0 %v2427
    %2457 = vmatpush.msra.mxu0 %v2425
    %2458 = vmatpush.msra.mxu0 %v2423
    %2459 = vmatpush.msra.mxu0 %v2421
    %2460 = vmatpush.msra.mxu0 %v2419
    %2461 = vmatpush.msra.mxu0 %v2417
    %2462 = vmatpush.msra.mxu0 %v2415
    %2463 = vmatmul.f32.gmra.mxu0 %v2414
    %v2464 = vpop.f32.mrf.mxu0
    %v2465 = vadd.f32 0.0, %v2464
    %2466 = vdwg.mxu0
    %2467 = vmatpush.msra.mxu0 %v2446
    %2468 = vmatpush.msra.mxu0 %v2444
    %2469 = vmatpush.msra.mxu0 %v2442
    %2470 = vmatpush.msra.mxu0 %v2440
    %2471 = vmatpush.msra.mxu0 %v2438
    %2472 = vmatpush.msra.mxu0 %v2436
    %2473 = vmatpush.msra.mxu0 %v2434
    %2474 = vmatpush.msra.mxu0 %v2432
    %2475 = vmatpush.msra.mxu0 %v2430
    %2476 = vmatpush.msra.mxu0 %v2428
    %2477 = vmatpush.msra.mxu0 %v2426
    %2478 = vmatpush.msra.mxu0 %v2424
    %2479 = vmatpush.msra.mxu0 %v2422
    %2480 = vmatpush.msra.mxu0 %v2420
    %2481 = vmatpush.msra.mxu0 %v2418
    %2482 = vmatpush.msra.mxu0 %v2416
    %2483 = vmatmul.f32.gmra.mxu0 %v2414
    %v2484 = vpop.f32.mrf.mxu0
    %v2485 = vadd.f32 0.0, %v2484
    %2486 = vdwg.mxu0
    %v2487 = vadd.f32 %v2331, %v2465
    %v2488 = vadd.f32 %v2332, %v2485
    %s2489 = scalar_lea.vmem [#allocation4], 128
    %v2490 = vld [vmem:[%s2489] sm:$0xff]
    %v2491 = vld [vmem:[%s2489 + $0x8] sm:$0xff]
    %v2492 = vld [vmem:[%s2489 + $0x10] sm:$0xff]
    %v2493 = vld [vmem:[%s2489 + $0x18] sm:$0xff]
    %v2494 = vld [vmem:[%s2489 + $0x20] sm:$0xff]
    %v2495 = vld [vmem:[%s2489 + $0x28] sm:$0xff]
    %v2496 = vld [vmem:[%s2489 + $0x30] sm:$0xff]
    %v2497 = vld [vmem:[%s2489 + $0x38] sm:$0xff]
    %v2498 = vld [vmem:[%s2489 + $0x40] sm:$0xff]
    %v2499 = vld [vmem:[%s2489 + $0x48] sm:$0xff]
    %v2500 = vld [vmem:[%s2489 + $0x50] sm:$0xff]
    %v2501 = vld [vmem:[%s2489 + $0x58] sm:$0xff]
    %v2502 = vld [vmem:[%s2489 + $0x60] sm:$0xff]
    %v2503 = vld [vmem:[%s2489 + $0x68] sm:$0xff]
    %v2504 = vld [vmem:[%s2489 + $0x70] sm:$0xff]
    %v2505 = vld [vmem:[%s2489 + $0x78] sm:$0xff]
    %s2506 = scalar_lea.vmem %s14, 1
    %v2507 = vld [vmem:[%s2506] sm:$0x1]
    %v2509 = vperm.slane %v2507, 0
    %2511 = vmatpush.msra.mxu0 %v2505
    %2512 = vmatpush.msra.mxu0 %v2504
    %2513 = vmatpush.msra.mxu0 %v2503
    %2514 = vmatpush.msra.mxu0 %v2502
    %2515 = vmatpush.msra.mxu0 %v2501
    %2516 = vmatpush.msra.mxu0 %v2500
    %2517 = vmatpush.msra.mxu0 %v2499
    %2518 = vmatpush.msra.mxu0 %v2498
    %2519 = vmatpush.msra.mxu0 %v2497
    %2520 = vmatpush.msra.mxu0 %v2496
    %2521 = vmatpush.msra.mxu0 %v2495
    %2522 = vmatpush.msra.mxu0 %v2494
    %2523 = vmatpush.msra.mxu0 %v2493
    %2524 = vmatpush.msra.mxu0 %v2492
    %2525 = vmatpush.msra.mxu0 %v2491
    %2526 = vmatpush.msra.mxu0 %v2490
    %2527 = vmatmul.f32.gmra.mxu0 %v2324
    %v2528 = vpop.f32.mrf.mxu0
    %v2529 = vadd.f32 %v2509, %v2528
    %2530 = vdwg.mxu0
    %v2531 = vmax.f32 %v2529, 0.0
    %s2532 = scalar_lea.vmem [#allocation6], 128
    %v2533 = vld [vmem:[%s2532] sm:$0xff]
    %v2534 = vld [vmem:[%s2532 + $0x8] sm:$0xff]
    %v2535 = vld [vmem:[%s2532 + $0x10] sm:$0xff]
    %v2536 = vld [vmem:[%s2532 + $0x18] sm:$0xff]
    %v2537 = vld [vmem:[%s2532 + $0x20] sm:$0xff]
    %v2538 = vld [vmem:[%s2532 + $0x28] sm:$0xff]
    %v2539 = vld [vmem:[%s2532 + $0x30] sm:$0xff]
    %v2540 = vld [vmem:[%s2532 + $0x38] sm:$0xff]
    %v2541 = vld [vmem:[%s2532 + $0x40] sm:$0xff]
    %v2542 = vld [vmem:[%s2532 + $0x48] sm:$0xff]
    %v2543 = vld [vmem:[%s2532 + $0x50] sm:$0xff]
    %v2544 = vld [vmem:[%s2532 + $0x58] sm:$0xff]
    %v2545 = vld [vmem:[%s2532 + $0x60] sm:$0xff]
    %v2546 = vld [vmem:[%s2532 + $0x68] sm:$0xff]
    %v2547 = vld [vmem:[%s2532 + $0x70] sm:$0xff]
    %v2548 = vld [vmem:[%s2532 + $0x78] sm:$0xff]
    %s2549 = scalar_lea.vmem %s16, 1
    %v2550 = vld [vmem:[%s2549] sm:$0x1]
    %v2552 = vperm.slane %v2550, 0
    %2554 = vmatpush.msra.mxu0 %v2548
    %2555 = vmatpush.msra.mxu0 %v2547
    %2556 = vmatpush.msra.mxu0 %v2546
    %2557 = vmatpush.msra.mxu0 %v2545
    %2558 = vmatpush.msra.mxu0 %v2544
    %2559 = vmatpush.msra.mxu0 %v2543
    %2560 = vmatpush.msra.mxu0 %v2542
    %2561 = vmatpush.msra.mxu0 %v2541
    %2562 = vmatpush.msra.mxu0 %v2540
    %2563 = vmatpush.msra.mxu0 %v2539
    %2564 = vmatpush.msra.mxu0 %v2538
    %2565 = vmatpush.msra.mxu0 %v2537
    %2566 = vmatpush.msra.mxu0 %v2536
    %2567 = vmatpush.msra.mxu0 %v2535
    %2568 = vmatpush.msra.mxu0 %v2534
    %2569 = vmatpush.msra.mxu0 %v2533
    %2570 = vmatmul.f32.gmra.mxu0 %v2531
    %v2571 = vpop.f32.mrf.mxu0
    %v2572 = vadd.f32 %v2552, %v2571
    %2573 = vdwg.mxu0
    %v2574 = vmax.f32 %v2572, 0.0
    %s2575 = scalar_lea.vmem [#allocation7], 256
    %v2576 = vld [vmem:[%s2575] sm:$0xff]
    %v2577 = vld [vmem:[%s2575 + $0x8] sm:$0xff]
    %v2578 = vld [vmem:[%s2575 + $0x10] sm:$0xff]
    %v2579 = vld [vmem:[%s2575 + $0x18] sm:$0xff]
    %v2580 = vld [vmem:[%s2575 + $0x20] sm:$0xff]
    %v2581 = vld [vmem:[%s2575 + $0x28] sm:$0xff]
    %v2582 = vld [vmem:[%s2575 + $0x30] sm:$0xff]
    %v2583 = vld [vmem:[%s2575 + $0x38] sm:$0xff]
    %v2584 = vld [vmem:[%s2575 + $0x40] sm:$0xff]
    %v2585 = vld [vmem:[%s2575 + $0x48] sm:$0xff]
    %v2586 = vld [vmem:[%s2575 + $0x50] sm:$0xff]
    %v2587 = vld [vmem:[%s2575 + $0x58] sm:$0xff]
    %v2588 = vld [vmem:[%s2575 + $0x60] sm:$0xff]
    %v2589 = vld [vmem:[%s2575 + $0x68] sm:$0xff]
    %v2590 = vld [vmem:[%s2575 + $0x70] sm:$0xff]
    %v2591 = vld [vmem:[%s2575 + $0x78] sm:$0xff]
    %v2592 = vld [vmem:[%s2575 + $0x80] sm:$0xff]
    %v2593 = vld [vmem:[%s2575 + $0x88] sm:$0xff]
    %v2594 = vld [vmem:[%s2575 + $0x90] sm:$0xff]
    %v2595 = vld [vmem:[%s2575 + $0x98] sm:$0xff]
    %v2596 = vld [vmem:[%s2575 + $0xa0] sm:$0xff]
    %v2597 = vld [vmem:[%s2575 + $0xa8] sm:$0xff]
    %v2598 = vld [vmem:[%s2575 + $0xb0] sm:$0xff]
    %v2599 = vld [vmem:[%s2575 + $0xb8] sm:$0xff]
    %v2600 = vld [vmem:[%s2575 + $0xc0] sm:$0xff]
    %v2601 = vld [vmem:[%s2575 + $0xc8] sm:$0xff]
    %v2602 = vld [vmem:[%s2575 + $0xd0] sm:$0xff]
    %v2603 = vld [vmem:[%s2575 + $0xd8] sm:$0xff]
    %v2604 = vld [vmem:[%s2575 + $0xe0] sm:$0xff]
    %v2605 = vld [vmem:[%s2575 + $0xe8] sm:$0xff]
    %v2606 = vld [vmem:[%s2575 + $0xf0] sm:$0xff]
    %v2607 = vld [vmem:[%s2575 + $0xf8] sm:$0xff]
    %2608 = vmatpush.msra.mxu0 %v2606
    %2609 = vmatpush.msra.mxu0 %v2604
    %2610 = vmatpush.msra.mxu0 %v2602
    %2611 = vmatpush.msra.mxu0 %v2600
    %2612 = vmatpush.msra.mxu0 %v2598
    %2613 = vmatpush.msra.mxu0 %v2596
    %2614 = vmatpush.msra.mxu0 %v2594
    %2615 = vmatpush.msra.mxu0 %v2592
    %2616 = vmatpush.msra.mxu0 %v2590
    %2617 = vmatpush.msra.mxu0 %v2588
    %2618 = vmatpush.msra.mxu0 %v2586
    %2619 = vmatpush.msra.mxu0 %v2584
    %2620 = vmatpush.msra.mxu0 %v2582
    %2621 = vmatpush.msra.mxu0 %v2580
    %2622 = vmatpush.msra.mxu0 %v2578
    %2623 = vmatpush.msra.mxu0 %v2576
    %2624 = vmatmul.f32.gmra.mxu0 %v2574
    %v2625 = vpop.f32.mrf.mxu0
    %v2626 = vadd.f32 0.0, %v2625
    %2627 = vdwg.mxu0
    %2628 = vmatpush.msra.mxu0 %v2607
    %2629 = vmatpush.msra.mxu0 %v2605
    %2630 = vmatpush.msra.mxu0 %v2603
    %2631 = vmatpush.msra.mxu0 %v2601
    %2632 = vmatpush.msra.mxu0 %v2599
    %2633 = vmatpush.msra.mxu0 %v2597
    %2634 = vmatpush.msra.mxu0 %v2595
    %2635 = vmatpush.msra.mxu0 %v2593
    %2636 = vmatpush.msra.mxu0 %v2591
    %2637 = vmatpush.msra.mxu0 %v2589
    %2638 = vmatpush.msra.mxu0 %v2587
    %2639 = vmatpush.msra.mxu0 %v2585
    %2640 = vmatpush.msra.mxu0 %v2583
    %2641 = vmatpush.msra.mxu0 %v2581
    %2642 = vmatpush.msra.mxu0 %v2579
    %2643 = vmatpush.msra.mxu0 %v2577
    %2644 = vmatmul.f32.gmra.mxu0 %v2574
    %v2645 = vpop.f32.mrf.mxu0
    %v2646 = vadd.f32 0.0, %v2645
    %2647 = vdwg.mxu0
    %v2648 = vadd.f32 %v2487, %v2626
    %v2649 = vadd.f32 %v2488, %v2646
    %s2650 = scalar_lea.vmem [#allocation4], 256
    %v2651 = vld [vmem:[%s2650] sm:$0xff]
    %v2652 = vld [vmem:[%s2650 + $0x8] sm:$0xff]
    %v2653 = vld [vmem:[%s2650 + $0x10] sm:$0xff]
    %v2654 = vld [vmem:[%s2650 + $0x18] sm:$0xff]
    %v2655 = vld [vmem:[%s2650 + $0x20] sm:$0xff]
    %v2656 = vld [vmem:[%s2650 + $0x28] sm:$0xff]
    %v2657 = vld [vmem:[%s2650 + $0x30] sm:$0xff]
    %v2658 = vld [vmem:[%s2650 + $0x38] sm:$0xff]
    %v2659 = vld [vmem:[%s2650 + $0x40] sm:$0xff]
    %v2660 = vld [vmem:[%s2650 + $0x48] sm:$0xff]
    %v2661 = vld [vmem:[%s2650 + $0x50] sm:$0xff]
    %v2662 = vld [vmem:[%s2650 + $0x58] sm:$0xff]
    %v2663 = vld [vmem:[%s2650 + $0x60] sm:$0xff]
    %v2664 = vld [vmem:[%s2650 + $0x68] sm:$0xff]
    %v2665 = vld [vmem:[%s2650 + $0x70] sm:$0xff]
    %v2666 = vld [vmem:[%s2650 + $0x78] sm:$0xff]
    %s2667 = scalar_lea.vmem %s14, 2
    %v2668 = vld [vmem:[%s2667] sm:$0x1]
    %v2670 = vperm.slane %v2668, 0
    %2672 = vmatpush.msra.mxu0 %v2666
    %2673 = vmatpush.msra.mxu0 %v2665
    %2674 = vmatpush.msra.mxu0 %v2664
    %2675 = vmatpush.msra.mxu0 %v2663
    %2676 = vmatpush.msra.mxu0 %v2662
    %2677 = vmatpush.msra.mxu0 %v2661
    %2678 = vmatpush.msra.mxu0 %v2660
    %2679 = vmatpush.msra.mxu0 %v2659
    %2680 = vmatpush.msra.mxu0 %v2658
    %2681 = vmatpush.msra.mxu0 %v2657
    %2682 = vmatpush.msra.mxu0 %v2656
    %2683 = vmatpush.msra.mxu0 %v2655
    %2684 = vmatpush.msra.mxu0 %v2654
    %2685 = vmatpush.msra.mxu0 %v2653
    %2686 = vmatpush.msra.mxu0 %v2652
    %2687 = vmatpush.msra.mxu0 %v2651
    %2688 = vmatmul.f32.gmra.mxu0 %v2324
    %v2689 = vpop.f32.mrf.mxu0
    %v2690 = vadd.f32 %v2670, %v2689
    %2691 = vdwg.mxu0
    %v2692 = vmax.f32 %v2690, 0.0
    %s2693 = scalar_lea.vmem [#allocation6], 256
    %v2694 = vld [vmem:[%s2693] sm:$0xff]
    %v2695 = vld [vmem:[%s2693 + $0x8] sm:$0xff]
    %v2696 = vld [vmem:[%s2693 + $0x10] sm:$0xff]
    %v2697 = vld [vmem:[%s2693 + $0x18] sm:$0xff]
    %v2698 = vld [vmem:[%s2693 + $0x20] sm:$0xff]
    %v2699 = vld [vmem:[%s2693 + $0x28] sm:$0xff]
    %v2700 = vld [vmem:[%s2693 + $0x30] sm:$0xff]
    %v2701 = vld [vmem:[%s2693 + $0x38] sm:$0xff]
    %v2702 = vld [vmem:[%s2693 + $0x40] sm:$0xff]
    %v2703 = vld [vmem:[%s2693 + $0x48] sm:$0xff]
    %v2704 = vld [vmem:[%s2693 + $0x50] sm:$0xff]
    %v2705 = vld [vmem:[%s2693 + $0x58] sm:$0xff]
    %v2706 = vld [vmem:[%s2693 + $0x60] sm:$0xff]
    %v2707 = vld [vmem:[%s2693 + $0x68] sm:$0xff]
    %v2708 = vld [vmem:[%s2693 + $0x70] sm:$0xff]
    %v2709 = vld [vmem:[%s2693 + $0x78] sm:$0xff]
    %s2710 = scalar_lea.vmem %s16, 2
    %v2711 = vld [vmem:[%s2710] sm:$0x1]
    %v2713 = vperm.slane %v2711, 0
    %2715 = vmatpush.msra.mxu0 %v2709
    %2716 = vmatpush.msra.mxu0 %v2708
    %2717 = vmatpush.msra.mxu0 %v2707
    %2718 = vmatpush.msra.mxu0 %v2706
    %2719 = vmatpush.msra.mxu0 %v2705
    %2720 = vmatpush.msra.mxu0 %v2704
    %2721 = vmatpush.msra.mxu0 %v2703
    %2722 = vmatpush.msra.mxu0 %v2702
    %2723 = vmatpush.msra.mxu0 %v2701
    %2724 = vmatpush.msra.mxu0 %v2700
    %2725 = vmatpush.msra.mxu0 %v2699
    %2726 = vmatpush.msra.mxu0 %v2698
    %2727 = vmatpush.msra.mxu0 %v2697
    %2728 = vmatpush.msra.mxu0 %v2696
    %2729 = vmatpush.msra.mxu0 %v2695
    %2730 = vmatpush.msra.mxu0 %v2694
    %2731 = vmatmul.f32.gmra.mxu0 %v2692
    %v2732 = vpop.f32.mrf.mxu0
    %v2733 = vadd.f32 %v2713, %v2732
    %2734 = vdwg.mxu0
    %v2735 = vmax.f32 %v2733, 0.0
    %s2736 = scalar_lea.vmem [#allocation7], 512
    %v2737 = vld [vmem:[%s2736] sm:$0xff]
    %v2738 = vld [vmem:[%s2736 + $0x8] sm:$0xff]
    %v2739 = vld [vmem:[%s2736 + $0x10] sm:$0xff]
    %v2740 = vld [vmem:[%s2736 + $0x18] sm:$0xff]
    %v2741 = vld [vmem:[%s2736 + $0x20] sm:$0xff]
    %v2742 = vld [vmem:[%s2736 + $0x28] sm:$0xff]
    %v2743 = vld [vmem:[%s2736 + $0x30] sm:$0xff]
    %v2744 = vld [vmem:[%s2736 + $0x38] sm:$0xff]
    %v2745 = vld [vmem:[%s2736 + $0x40] sm:$0xff]
    %v2746 = vld [vmem:[%s2736 + $0x48] sm:$0xff]
    %v2747 = vld [vmem:[%s2736 + $0x50] sm:$0xff]
    %v2748 = vld [vmem:[%s2736 + $0x58] sm:$0xff]
    %v2749 = vld [vmem:[%s2736 + $0x60] sm:$0xff]
    %v2750 = vld [vmem:[%s2736 + $0x68] sm:$0xff]
    %v2751 = vld [vmem:[%s2736 + $0x70] sm:$0xff]
    %v2752 = vld [vmem:[%s2736 + $0x78] sm:$0xff]
    %v2753 = vld [vmem:[%s2736 + $0x80] sm:$0xff]
    %v2754 = vld [vmem:[%s2736 + $0x88] sm:$0xff]
    %v2755 = vld [vmem:[%s2736 + $0x90] sm:$0xff]
    %v2756 = vld [vmem:[%s2736 + $0x98] sm:$0xff]
    %v2757 = vld [vmem:[%s2736 + $0xa0] sm:$0xff]
    %v2758 = vld [vmem:[%s2736 + $0xa8] sm:$0xff]
    %v2759 = vld [vmem:[%s2736 + $0xb0] sm:$0xff]
    %v2760 = vld [vmem:[%s2736 + $0xb8] sm:$0xff]
    %v2761 = vld [vmem:[%s2736 + $0xc0] sm:$0xff]
    %v2762 = vld [vmem:[%s2736 + $0xc8] sm:$0xff]
    %v2763 = vld [vmem:[%s2736 + $0xd0] sm:$0xff]
    %v2764 = vld [vmem:[%s2736 + $0xd8] sm:$0xff]
    %v2765 = vld [vmem:[%s2736 + $0xe0] sm:$0xff]
    %v2766 = vld [vmem:[%s2736 + $0xe8] sm:$0xff]
    %v2767 = vld [vmem:[%s2736 + $0xf0] sm:$0xff]
    %v2768 = vld [vmem:[%s2736 + $0xf8] sm:$0xff]
    %2769 = vmatpush.msra.mxu0 %v2767
    %2770 = vmatpush.msra.mxu0 %v2765
    %2771 = vmatpush.msra.mxu0 %v2763
    %2772 = vmatpush.msra.mxu0 %v2761
    %2773 = vmatpush.msra.mxu0 %v2759
    %2774 = vmatpush.msra.mxu0 %v2757
    %2775 = vmatpush.msra.mxu0 %v2755
    %2776 = vmatpush.msra.mxu0 %v2753
    %2777 = vmatpush.msra.mxu0 %v2751
    %2778 = vmatpush.msra.mxu0 %v2749
    %2779 = vmatpush.msra.mxu0 %v2747
    %2780 = vmatpush.msra.mxu0 %v2745
    %2781 = vmatpush.msra.mxu0 %v2743
    %2782 = vmatpush.msra.mxu0 %v2741
    %2783 = vmatpush.msra.mxu0 %v2739
    %2784 = vmatpush.msra.mxu0 %v2737
    %2785 = vmatmul.f32.gmra.mxu0 %v2735
    %v2786 = vpop.f32.mrf.mxu0
    %v2787 = vadd.f32 0.0, %v2786
    %2788 = vdwg.mxu0
    %2789 = vmatpush.msra.mxu0 %v2768
    %2790 = vmatpush.msra.mxu0 %v2766
    %2791 = vmatpush.msra.mxu0 %v2764
    %2792 = vmatpush.msra.mxu0 %v2762
    %2793 = vmatpush.msra.mxu0 %v2760
    %2794 = vmatpush.msra.mxu0 %v2758
    %2795 = vmatpush.msra.mxu0 %v2756
    %2796 = vmatpush.msra.mxu0 %v2754
    %2797 = vmatpush.msra.mxu0 %v2752
    %2798 = vmatpush.msra.mxu0 %v2750
    %2799 = vmatpush.msra.mxu0 %v2748
    %2800 = vmatpush.msra.mxu0 %v2746
    %2801 = vmatpush.msra.mxu0 %v2744
    %2802 = vmatpush.msra.mxu0 %v2742
    %2803 = vmatpush.msra.mxu0 %v2740
    %2804 = vmatpush.msra.mxu0 %v2738
    %2805 = vmatmul.f32.gmra.mxu0 %v2735
    %v2806 = vpop.f32.mrf.mxu0
    %v2807 = vadd.f32 0.0, %v2806
    %2808 = vdwg.mxu0
    %v2809 = vadd.f32 %v2648, %v2787
    %v2810 = vadd.f32 %v2649, %v2807
    %s2811 = scalar_lea.vmem [#allocation4], 384
    %v2812 = vld [vmem:[%s2811] sm:$0xff]
    %v2813 = vld [vmem:[%s2811 + $0x8] sm:$0xff]
    %v2814 = vld [vmem:[%s2811 + $0x10] sm:$0xff]
    %v2815 = vld [vmem:[%s2811 + $0x18] sm:$0xff]
    %v2816 = vld [vmem:[%s2811 + $0x20] sm:$0xff]
    %v2817 = vld [vmem:[%s2811 + $0x28] sm:$0xff]
    %v2818 = vld [vmem:[%s2811 + $0x30] sm:$0xff]
    %v2819 = vld [vmem:[%s2811 + $0x38] sm:$0xff]
    %v2820 = vld [vmem:[%s2811 + $0x40] sm:$0xff]
    %v2821 = vld [vmem:[%s2811 + $0x48] sm:$0xff]
    %v2822 = vld [vmem:[%s2811 + $0x50] sm:$0xff]
    %v2823 = vld [vmem:[%s2811 + $0x58] sm:$0xff]
    %v2824 = vld [vmem:[%s2811 + $0x60] sm:$0xff]
    %v2825 = vld [vmem:[%s2811 + $0x68] sm:$0xff]
    %v2826 = vld [vmem:[%s2811 + $0x70] sm:$0xff]
    %v2827 = vld [vmem:[%s2811 + $0x78] sm:$0xff]
    %s2828 = scalar_lea.vmem %s14, 3
    %v2829 = vld [vmem:[%s2828] sm:$0x1]
    %v2831 = vperm.slane %v2829, 0
    %2833 = vmatpush.msra.mxu0 %v2827
    %2834 = vmatpush.msra.mxu0 %v2826
    %2835 = vmatpush.msra.mxu0 %v2825
    %2836 = vmatpush.msra.mxu0 %v2824
    %2837 = vmatpush.msra.mxu0 %v2823
    %2838 = vmatpush.msra.mxu0 %v2822
    %2839 = vmatpush.msra.mxu0 %v2821
    %2840 = vmatpush.msra.mxu0 %v2820
    %2841 = vmatpush.msra.mxu0 %v2819
    %2842 = vmatpush.msra.mxu0 %v2818
    %2843 = vmatpush.msra.mxu0 %v2817
    %2844 = vmatpush.msra.mxu0 %v2816
    %2845 = vmatpush.msra.mxu0 %v2815
    %2846 = vmatpush.msra.mxu0 %v2814
    %2847 = vmatpush.msra.mxu0 %v2813
    %2848 = vmatpush.msra.mxu0 %v2812
    %2849 = vmatmul.f32.gmra.mxu0 %v2324
    %v2850 = vpop.f32.mrf.mxu0
    %v2851 = vadd.f32 %v2831, %v2850
    %2852 = vdwg.mxu0
    %v2853 = vmax.f32 %v2851, 0.0
    %s2854 = scalar_lea.vmem [#allocation6], 384
    %v2855 = vld [vmem:[%s2854] sm:$0xff]
    %v2856 = vld [vmem:[%s2854 + $0x8] sm:$0xff]
    %v2857 = vld [vmem:[%s2854 + $0x10] sm:$0xff]
    %v2858 = vld [vmem:[%s2854 + $0x18] sm:$0xff]
    %v2859 = vld [vmem:[%s2854 + $0x20] sm:$0xff]
    %v2860 = vld [vmem:[%s2854 + $0x28] sm:$0xff]
    %v2861 = vld [vmem:[%s2854 + $0x30] sm:$0xff]
    %v2862 = vld [vmem:[%s2854 + $0x38] sm:$0xff]
    %v2863 = vld [vmem:[%s2854 + $0x40] sm:$0xff]
    %v2864 = vld [vmem:[%s2854 + $0x48] sm:$0xff]
    %v2865 = vld [vmem:[%s2854 + $0x50] sm:$0xff]
    %v2866 = vld [vmem:[%s2854 + $0x58] sm:$0xff]
    %v2867 = vld [vmem:[%s2854 + $0x60] sm:$0xff]
    %v2868 = vld [vmem:[%s2854 + $0x68] sm:$0xff]
    %v2869 = vld [vmem:[%s2854 + $0x70] sm:$0xff]
    %v2870 = vld [vmem:[%s2854 + $0x78] sm:$0xff]
    %s2871 = scalar_lea.vmem %s16, 3
    %v2872 = vld [vmem:[%s2871] sm:$0x1]
    %v2874 = vperm.slane %v2872, 0
    %2876 = vmatpush.msra.mxu0 %v2870
    %2877 = vmatpush.msra.mxu0 %v2869
    %2878 = vmatpush.msra.mxu0 %v2868
    %2879 = vmatpush.msra.mxu0 %v2867
    %2880 = vmatpush.msra.mxu0 %v2866
    %2881 = vmatpush.msra.mxu0 %v2865
    %2882 = vmatpush.msra.mxu0 %v2864
    %2883 = vmatpush.msra.mxu0 %v2863
    %2884 = vmatpush.msra.mxu0 %v2862
    %2885 = vmatpush.msra.mxu0 %v2861
    %2886 = vmatpush.msra.mxu0 %v2860
    %2887 = vmatpush.msra.mxu0 %v2859
    %2888 = vmatpush.msra.mxu0 %v2858
    %2889 = vmatpush.msra.mxu0 %v2857
    %2890 = vmatpush.msra.mxu0 %v2856
    %2891 = vmatpush.msra.mxu0 %v2855
    %2892 = vmatmul.f32.gmra.mxu0 %v2853
    %v2893 = vpop.f32.mrf.mxu0
    %v2894 = vadd.f32 %v2874, %v2893
    %2895 = vdwg.mxu0
    %v2896 = vmax.f32 %v2894, 0.0
    %s2897 = scalar_lea.vmem [#allocation7], 768
    %v2898 = vld [vmem:[%s2897] sm:$0xff]
    %v2899 = vld [vmem:[%s2897 + $0x8] sm:$0xff]
    %v2900 = vld [vmem:[%s2897 + $0x10] sm:$0xff]
    %v2901 = vld [vmem:[%s2897 + $0x18] sm:$0xff]
    %v2902 = vld [vmem:[%s2897 + $0x20] sm:$0xff]
    %v2903 = vld [vmem:[%s2897 + $0x28] sm:$0xff]
    %v2904 = vld [vmem:[%s2897 + $0x30] sm:$0xff]
    %v2905 = vld [vmem:[%s2897 + $0x38] sm:$0xff]
    %v2906 = vld [vmem:[%s2897 + $0x40] sm:$0xff]
    %v2907 = vld [vmem:[%s2897 + $0x48] sm:$0xff]
    %v2908 = vld [vmem:[%s2897 + $0x50] sm:$0xff]
    %v2909 = vld [vmem:[%s2897 + $0x58] sm:$0xff]
    %v2910 = vld [vmem:[%s2897 + $0x60] sm:$0xff]
    %v2911 = vld [vmem:[%s2897 + $0x68] sm:$0xff]
    %v2912 = vld [vmem:[%s2897 + $0x70] sm:$0xff]
    %v2913 = vld [vmem:[%s2897 + $0x78] sm:$0xff]
    %v2914 = vld [vmem:[%s2897 + $0x80] sm:$0xff]
    %v2915 = vld [vmem:[%s2897 + $0x88] sm:$0xff]
    %v2916 = vld [vmem:[%s2897 + $0x90] sm:$0xff]
    %v2917 = vld [vmem:[%s2897 + $0x98] sm:$0xff]
    %v2918 = vld [vmem:[%s2897 + $0xa0] sm:$0xff]
    %v2919 = vld [vmem:[%s2897 + $0xa8] sm:$0xff]
    %v2920 = vld [vmem:[%s2897 + $0xb0] sm:$0xff]
    %v2921 = vld [vmem:[%s2897 + $0xb8] sm:$0xff]
    %v2922 = vld [vmem:[%s2897 + $0xc0] sm:$0xff]
    %v2923 = vld [vmem:[%s2897 + $0xc8] sm:$0xff]
    %v2924 = vld [vmem:[%s2897 + $0xd0] sm:$0xff]
    %v2925 = vld [vmem:[%s2897 + $0xd8] sm:$0xff]
    %v2926 = vld [vmem:[%s2897 + $0xe0] sm:$0xff]
    %v2927 = vld [vmem:[%s2897 + $0xe8] sm:$0xff]
    %v2928 = vld [vmem:[%s2897 + $0xf0] sm:$0xff]
    %v2929 = vld [vmem:[%s2897 + $0xf8] sm:$0xff]
    %2930 = vmatpush.msra.mxu0 %v2928
    %2931 = vmatpush.msra.mxu0 %v2926
    %2932 = vmatpush.msra.mxu0 %v2924
    %2933 = vmatpush.msra.mxu0 %v2922
    %2934 = vmatpush.msra.mxu0 %v2920
    %2935 = vmatpush.msra.mxu0 %v2918
    %2936 = vmatpush.msra.mxu0 %v2916
    %2937 = vmatpush.msra.mxu0 %v2914
    %2938 = vmatpush.msra.mxu0 %v2912
    %2939 = vmatpush.msra.mxu0 %v2910
    %2940 = vmatpush.msra.mxu0 %v2908
    %2941 = vmatpush.msra.mxu0 %v2906
    %2942 = vmatpush.msra.mxu0 %v2904
    %2943 = vmatpush.msra.mxu0 %v2902
    %2944 = vmatpush.msra.mxu0 %v2900
    %2945 = vmatpush.msra.mxu0 %v2898
    %2946 = vmatmul.f32.gmra.mxu0 %v2896
    %v2947 = vpop.f32.mrf.mxu0
    %v2948 = vadd.f32 0.0, %v2947
    %2949 = vdwg.mxu0
    %2950 = vmatpush.msra.mxu0 %v2929
    %2951 = vmatpush.msra.mxu0 %v2927
    %2952 = vmatpush.msra.mxu0 %v2925
    %2953 = vmatpush.msra.mxu0 %v2923
    %2954 = vmatpush.msra.mxu0 %v2921
    %2955 = vmatpush.msra.mxu0 %v2919
    %2956 = vmatpush.msra.mxu0 %v2917
    %2957 = vmatpush.msra.mxu0 %v2915
    %2958 = vmatpush.msra.mxu0 %v2913
    %2959 = vmatpush.msra.mxu0 %v2911
    %2960 = vmatpush.msra.mxu0 %v2909
    %2961 = vmatpush.msra.mxu0 %v2907
    %2962 = vmatpush.msra.mxu0 %v2905
    %2963 = vmatpush.msra.mxu0 %v2903
    %2964 = vmatpush.msra.mxu0 %v2901
    %2965 = vmatpush.msra.mxu0 %v2899
    %2966 = vmatmul.f32.gmra.mxu0 %v2896
    %v2967 = vpop.f32.mrf.mxu0
    %v2968 = vadd.f32 0.0, %v2967
    %2969 = vdwg.mxu0
    %v2970 = vadd.f32 %v2809, %v2948
    %v2971 = vadd.f32 %v2810, %v2968
    %s2972 = scalar_lea.vmem [#allocation4], 512
    %v2973 = vld [vmem:[%s2972] sm:$0xff]
    %v2974 = vld [vmem:[%s2972 + $0x8] sm:$0xff]
    %v2975 = vld [vmem:[%s2972 + $0x10] sm:$0xff]
    %v2976 = vld [vmem:[%s2972 + $0x18] sm:$0xff]
    %v2977 = vld [vmem:[%s2972 + $0x20] sm:$0xff]
    %v2978 = vld [vmem:[%s2972 + $0x28] sm:$0xff]
    %v2979 = vld [vmem:[%s2972 + $0x30] sm:$0xff]
    %v2980 = vld [vmem:[%s2972 + $0x38] sm:$0xff]
    %v2981 = vld [vmem:[%s2972 + $0x40] sm:$0xff]
    %v2982 = vld [vmem:[%s2972 + $0x48] sm:$0xff]
    %v2983 = vld [vmem:[%s2972 + $0x50] sm:$0xff]
    %v2984 = vld [vmem:[%s2972 + $0x58] sm:$0xff]
    %v2985 = vld [vmem:[%s2972 + $0x60] sm:$0xff]
    %v2986 = vld [vmem:[%s2972 + $0x68] sm:$0xff]
    %v2987 = vld [vmem:[%s2972 + $0x70] sm:$0xff]
    %v2988 = vld [vmem:[%s2972 + $0x78] sm:$0xff]
    %s2989 = scalar_lea.vmem %s14, 4
    %v2990 = vld [vmem:[%s2989] sm:$0x1]
    %v2992 = vperm.slane %v2990, 0
    %2994 = vmatpush.msra.mxu0 %v2988
    %2995 = vmatpush.msra.mxu0 %v2987
    %2996 = vmatpush.msra.mxu0 %v2986
    %2997 = vmatpush.msra.mxu0 %v2985
    %2998 = vmatpush.msra.mxu0 %v2984
    %2999 = vmatpush.msra.mxu0 %v2983
    %3000 = vmatpush.msra.mxu0 %v2982
    %3001 = vmatpush.msra.mxu0 %v2981
    %3002 = vmatpush.msra.mxu0 %v2980
    %3003 = vmatpush.msra.mxu0 %v2979
    %3004 = vmatpush.msra.mxu0 %v2978
    %3005 = vmatpush.msra.mxu0 %v2977
    %3006 = vmatpush.msra.mxu0 %v2976
    %3007 = vmatpush.msra.mxu0 %v2975
    %3008 = vmatpush.msra.mxu0 %v2974
    %3009 = vmatpush.msra.mxu0 %v2973
    %3010 = vmatmul.f32.gmra.mxu0 %v2324
    %v3011 = vpop.f32.mrf.mxu0
    %v3012 = vadd.f32 %v2992, %v3011
    %3013 = vdwg.mxu0
    %v3014 = vmax.f32 %v3012, 0.0
    %s3015 = scalar_lea.vmem [#allocation6], 512
    %v3016 = vld [vmem:[%s3015] sm:$0xff]
    %v3017 = vld [vmem:[%s3015 + $0x8] sm:$0xff]
    %v3018 = vld [vmem:[%s3015 + $0x10] sm:$0xff]
    %v3019 = vld [vmem:[%s3015 + $0x18] sm:$0xff]
    %v3020 = vld [vmem:[%s3015 + $0x20] sm:$0xff]
    %v3021 = vld [vmem:[%s3015 + $0x28] sm:$0xff]
    %v3022 = vld [vmem:[%s3015 + $0x30] sm:$0xff]
    %v3023 = vld [vmem:[%s3015 + $0x38] sm:$0xff]
    %v3024 = vld [vmem:[%s3015 + $0x40] sm:$0xff]
    %v3025 = vld [vmem:[%s3015 + $0x48] sm:$0xff]
    %v3026 = vld [vmem:[%s3015 + $0x50] sm:$0xff]
    %v3027 = vld [vmem:[%s3015 + $0x58] sm:$0xff]
    %v3028 = vld [vmem:[%s3015 + $0x60] sm:$0xff]
    %v3029 = vld [vmem:[%s3015 + $0x68] sm:$0xff]
    %v3030 = vld [vmem:[%s3015 + $0x70] sm:$0xff]
    %v3031 = vld [vmem:[%s3015 + $0x78] sm:$0xff]
    %s3032 = scalar_lea.vmem %s16, 4
    %v3033 = vld [vmem:[%s3032] sm:$0x1]
    %v3035 = vperm.slane %v3033, 0
    %3037 = vmatpush.msra.mxu0 %v3031
    %3038 = vmatpush.msra.mxu0 %v3030
    %3039 = vmatpush.msra.mxu0 %v3029
    %3040 = vmatpush.msra.mxu0 %v3028
    %3041 = vmatpush.msra.mxu0 %v3027
    %3042 = vmatpush.msra.mxu0 %v3026
    %3043 = vmatpush.msra.mxu0 %v3025
    %3044 = vmatpush.msra.mxu0 %v3024
    %3045 = vmatpush.msra.mxu0 %v3023
    %3046 = vmatpush.msra.mxu0 %v3022
    %3047 = vmatpush.msra.mxu0 %v3021
    %3048 = vmatpush.msra.mxu0 %v3020
    %3049 = vmatpush.msra.mxu0 %v3019
    %3050 = vmatpush.msra.mxu0 %v3018
    %3051 = vmatpush.msra.mxu0 %v3017
    %3052 = vmatpush.msra.mxu0 %v3016
    %3053 = vmatmul.f32.gmra.mxu0 %v3014
    %v3054 = vpop.f32.mrf.mxu0
    %v3055 = vadd.f32 %v3035, %v3054
    %3056 = vdwg.mxu0
    %v3057 = vmax.f32 %v3055, 0.0
    %s3058 = scalar_lea.vmem [#allocation7], 1024
    %v3059 = vld [vmem:[%s3058] sm:$0xff]
    %v3060 = vld [vmem:[%s3058 + $0x8] sm:$0xff]
    %v3061 = vld [vmem:[%s3058 + $0x10] sm:$0xff]
    %v3062 = vld [vmem:[%s3058 + $0x18] sm:$0xff]
    %v3063 = vld [vmem:[%s3058 + $0x20] sm:$0xff]
    %v3064 = vld [vmem:[%s3058 + $0x28] sm:$0xff]
    %v3065 = vld [vmem:[%s3058 + $0x30] sm:$0xff]
    %v3066 = vld [vmem:[%s3058 + $0x38] sm:$0xff]
    %v3067 = vld [vmem:[%s3058 + $0x40] sm:$0xff]
    %v3068 = vld [vmem:[%s3058 + $0x48] sm:$0xff]
    %v3069 = vld [vmem:[%s3058 + $0x50] sm:$0xff]
    %v3070 = vld [vmem:[%s3058 + $0x58] sm:$0xff]
    %v3071 = vld [vmem:[%s3058 + $0x60] sm:$0xff]
    %v3072 = vld [vmem:[%s3058 + $0x68] sm:$0xff]
    %v3073 = vld [vmem:[%s3058 + $0x70] sm:$0xff]
    %v3074 = vld [vmem:[%s3058 + $0x78] sm:$0xff]
    %v3075 = vld [vmem:[%s3058 + $0x80] sm:$0xff]
    %v3076 = vld [vmem:[%s3058 + $0x88] sm:$0xff]
    %v3077 = vld [vmem:[%s3058 + $0x90] sm:$0xff]
    %v3078 = vld [vmem:[%s3058 + $0x98] sm:$0xff]
    %v3079 = vld [vmem:[%s3058 + $0xa0] sm:$0xff]
    %v3080 = vld [vmem:[%s3058 + $0xa8] sm:$0xff]
    %v3081 = vld [vmem:[%s3058 + $0xb0] sm:$0xff]
    %v3082 = vld [vmem:[%s3058 + $0xb8] sm:$0xff]
    %v3083 = vld [vmem:[%s3058 + $0xc0] sm:$0xff]
    %v3084 = vld [vmem:[%s3058 + $0xc8] sm:$0xff]
    %v3085 = vld [vmem:[%s3058 + $0xd0] sm:$0xff]
    %v3086 = vld [vmem:[%s3058 + $0xd8] sm:$0xff]
    %v3087 = vld [vmem:[%s3058 + $0xe0] sm:$0xff]
    %v3088 = vld [vmem:[%s3058 + $0xe8] sm:$0xff]
    %v3089 = vld [vmem:[%s3058 + $0xf0] sm:$0xff]
    %v3090 = vld [vmem:[%s3058 + $0xf8] sm:$0xff]
    %3091 = vmatpush.msra.mxu0 %v3089
    %3092 = vmatpush.msra.mxu0 %v3087
    %3093 = vmatpush.msra.mxu0 %v3085
    %3094 = vmatpush.msra.mxu0 %v3083
    %3095 = vmatpush.msra.mxu0 %v3081
    %3096 = vmatpush.msra.mxu0 %v3079
    %3097 = vmatpush.msra.mxu0 %v3077
    %3098 = vmatpush.msra.mxu0 %v3075
    %3099 = vmatpush.msra.mxu0 %v3073
    %3100 = vmatpush.msra.mxu0 %v3071
    %3101 = vmatpush.msra.mxu0 %v3069
    %3102 = vmatpush.msra.mxu0 %v3067
    %3103 = vmatpush.msra.mxu0 %v3065
    %3104 = vmatpush.msra.mxu0 %v3063
    %3105 = vmatpush.msra.mxu0 %v3061
    %3106 = vmatpush.msra.mxu0 %v3059
    %3107 = vmatmul.f32.gmra.mxu0 %v3057
    %v3108 = vpop.f32.mrf.mxu0
    %v3109 = vadd.f32 0.0, %v3108
    %3110 = vdwg.mxu0
    %3111 = vmatpush.msra.mxu0 %v3090
    %3112 = vmatpush.msra.mxu0 %v3088
    %3113 = vmatpush.msra.mxu0 %v3086
    %3114 = vmatpush.msra.mxu0 %v3084
    %3115 = vmatpush.msra.mxu0 %v3082
    %3116 = vmatpush.msra.mxu0 %v3080
    %3117 = vmatpush.msra.mxu0 %v3078
    %3118 = vmatpush.msra.mxu0 %v3076
    %3119 = vmatpush.msra.mxu0 %v3074
    %3120 = vmatpush.msra.mxu0 %v3072
    %3121 = vmatpush.msra.mxu0 %v3070
    %3122 = vmatpush.msra.mxu0 %v3068
    %3123 = vmatpush.msra.mxu0 %v3066
    %3124 = vmatpush.msra.mxu0 %v3064
    %3125 = vmatpush.msra.mxu0 %v3062
    %3126 = vmatpush.msra.mxu0 %v3060
    %3127 = vmatmul.f32.gmra.mxu0 %v3057
    %v3128 = vpop.f32.mrf.mxu0
    %v3129 = vadd.f32 0.0, %v3128
    %3130 = vdwg.mxu0
    %v3131 = vadd.f32 %v2970, %v3109
    %v3132 = vadd.f32 %v2971, %v3129
    %s3133 = scalar_lea.vmem [#allocation4], 640
    %v3134 = vld [vmem:[%s3133] sm:$0xff]
    %v3135 = vld [vmem:[%s3133 + $0x8] sm:$0xff]
    %v3136 = vld [vmem:[%s3133 + $0x10] sm:$0xff]
    %v3137 = vld [vmem:[%s3133 + $0x18] sm:$0xff]
    %v3138 = vld [vmem:[%s3133 + $0x20] sm:$0xff]
    %v3139 = vld [vmem:[%s3133 + $0x28] sm:$0xff]
    %v3140 = vld [vmem:[%s3133 + $0x30] sm:$0xff]
    %v3141 = vld [vmem:[%s3133 + $0x38] sm:$0xff]
    %v3142 = vld [vmem:[%s3133 + $0x40] sm:$0xff]
    %v3143 = vld [vmem:[%s3133 + $0x48] sm:$0xff]
    %v3144 = vld [vmem:[%s3133 + $0x50] sm:$0xff]
    %v3145 = vld [vmem:[%s3133 + $0x58] sm:$0xff]
    %v3146 = vld [vmem:[%s3133 + $0x60] sm:$0xff]
    %v3147 = vld [vmem:[%s3133 + $0x68] sm:$0xff]
    %v3148 = vld [vmem:[%s3133 + $0x70] sm:$0xff]
    %v3149 = vld [vmem:[%s3133 + $0x78] sm:$0xff]
    %s3150 = scalar_lea.vmem %s14, 5
    %v3151 = vld [vmem:[%s3150] sm:$0x1]
    %v3153 = vperm.slane %v3151, 0
    %3155 = vmatpush.msra.mxu0 %v3149
    %3156 = vmatpush.msra.mxu0 %v3148
    %3157 = vmatpush.msra.mxu0 %v3147
    %3158 = vmatpush.msra.mxu0 %v3146
    %3159 = vmatpush.msra.mxu0 %v3145
    %3160 = vmatpush.msra.mxu0 %v3144
    %3161 = vmatpush.msra.mxu0 %v3143
    %3162 = vmatpush.msra.mxu0 %v3142
    %3163 = vmatpush.msra.mxu0 %v3141
    %3164 = vmatpush.msra.mxu0 %v3140
    %3165 = vmatpush.msra.mxu0 %v3139
    %3166 = vmatpush.msra.mxu0 %v3138
    %3167 = vmatpush.msra.mxu0 %v3137
    %3168 = vmatpush.msra.mxu0 %v3136
    %3169 = vmatpush.msra.mxu0 %v3135
    %3170 = vmatpush.msra.mxu0 %v3134
    %3171 = vmatmul.f32.gmra.mxu0 %v2324
    %v3172 = vpop.f32.mrf.mxu0
    %v3173 = vadd.f32 %v3153, %v3172
    %3174 = vdwg.mxu0
    %v3175 = vmax.f32 %v3173, 0.0
    %s3176 = scalar_lea.vmem [#allocation6], 640
    %v3177 = vld [vmem:[%s3176] sm:$0xff]
    %v3178 = vld [vmem:[%s3176 + $0x8] sm:$0xff]
    %v3179 = vld [vmem:[%s3176 + $0x10] sm:$0xff]
    %v3180 = vld [vmem:[%s3176 + $0x18] sm:$0xff]
    %v3181 = vld [vmem:[%s3176 + $0x20] sm:$0xff]
    %v3182 = vld [vmem:[%s3176 + $0x28] sm:$0xff]
    %v3183 = vld [vmem:[%s3176 + $0x30] sm:$0xff]
    %v3184 = vld [vmem:[%s3176 + $0x38] sm:$0xff]
    %v3185 = vld [vmem:[%s3176 + $0x40] sm:$0xff]
    %v3186 = vld [vmem:[%s3176 + $0x48] sm:$0xff]
    %v3187 = vld [vmem:[%s3176 + $0x50] sm:$0xff]
    %v3188 = vld [vmem:[%s3176 + $0x58] sm:$0xff]
    %v3189 = vld [vmem:[%s3176 + $0x60] sm:$0xff]
    %v3190 = vld [vmem:[%s3176 + $0x68] sm:$0xff]
    %v3191 = vld [vmem:[%s3176 + $0x70] sm:$0xff]
    %v3192 = vld [vmem:[%s3176 + $0x78] sm:$0xff]
    %s3193 = scalar_lea.vmem %s16, 5
    %v3194 = vld [vmem:[%s3193] sm:$0x1]
    %v3196 = vperm.slane %v3194, 0
    %3198 = vmatpush.msra.mxu0 %v3192
    %3199 = vmatpush.msra.mxu0 %v3191
    %3200 = vmatpush.msra.mxu0 %v3190
    %3201 = vmatpush.msra.mxu0 %v3189
    %3202 = vmatpush.msra.mxu0 %v3188
    %3203 = vmatpush.msra.mxu0 %v3187
    %3204 = vmatpush.msra.mxu0 %v3186
    %3205 = vmatpush.msra.mxu0 %v3185
    %3206 = vmatpush.msra.mxu0 %v3184
    %3207 = vmatpush.msra.mxu0 %v3183
    %3208 = vmatpush.msra.mxu0 %v3182
    %3209 = vmatpush.msra.mxu0 %v3181
    %3210 = vmatpush.msra.mxu0 %v3180
    %3211 = vmatpush.msra.mxu0 %v3179
    %3212 = vmatpush.msra.mxu0 %v3178
    %3213 = vmatpush.msra.mxu0 %v3177
    %3214 = vmatmul.f32.gmra.mxu0 %v3175
    %v3215 = vpop.f32.mrf.mxu0
    %v3216 = vadd.f32 %v3196, %v3215
    %3217 = vdwg.mxu0
    %v3218 = vmax.f32 %v3216, 0.0
    %s3219 = scalar_lea.vmem [#allocation7], 1280
    %v3220 = vld [vmem:[%s3219] sm:$0xff]
    %v3221 = vld [vmem:[%s3219 + $0x8] sm:$0xff]
    %v3222 = vld [vmem:[%s3219 + $0x10] sm:$0xff]
    %v3223 = vld [vmem:[%s3219 + $0x18] sm:$0xff]
    %v3224 = vld [vmem:[%s3219 + $0x20] sm:$0xff]
    %v3225 = vld [vmem:[%s3219 + $0x28] sm:$0xff]
    %v3226 = vld [vmem:[%s3219 + $0x30] sm:$0xff]
    %v3227 = vld [vmem:[%s3219 + $0x38] sm:$0xff]
    %v3228 = vld [vmem:[%s3219 + $0x40] sm:$0xff]
    %v3229 = vld [vmem:[%s3219 + $0x48] sm:$0xff]
    %v3230 = vld [vmem:[%s3219 + $0x50] sm:$0xff]
    %v3231 = vld [vmem:[%s3219 + $0x58] sm:$0xff]
    %v3232 = vld [vmem:[%s3219 + $0x60] sm:$0xff]
    %v3233 = vld [vmem:[%s3219 + $0x68] sm:$0xff]
    %v3234 = vld [vmem:[%s3219 + $0x70] sm:$0xff]
    %v3235 = vld [vmem:[%s3219 + $0x78] sm:$0xff]
    %v3236 = vld [vmem:[%s3219 + $0x80] sm:$0xff]
    %v3237 = vld [vmem:[%s3219 + $0x88] sm:$0xff]
    %v3238 = vld [vmem:[%s3219 + $0x90] sm:$0xff]
    %v3239 = vld [vmem:[%s3219 + $0x98] sm:$0xff]
    %v3240 = vld [vmem:[%s3219 + $0xa0] sm:$0xff]
    %v3241 = vld [vmem:[%s3219 + $0xa8] sm:$0xff]
    %v3242 = vld [vmem:[%s3219 + $0xb0] sm:$0xff]
    %v3243 = vld [vmem:[%s3219 + $0xb8] sm:$0xff]
    %v3244 = vld [vmem:[%s3219 + $0xc0] sm:$0xff]
    %v3245 = vld [vmem:[%s3219 + $0xc8] sm:$0xff]
    %v3246 = vld [vmem:[%s3219 + $0xd0] sm:$0xff]
    %v3247 = vld [vmem:[%s3219 + $0xd8] sm:$0xff]
    %v3248 = vld [vmem:[%s3219 + $0xe0] sm:$0xff]
    %v3249 = vld [vmem:[%s3219 + $0xe8] sm:$0xff]
    %v3250 = vld [vmem:[%s3219 + $0xf0] sm:$0xff]
    %v3251 = vld [vmem:[%s3219 + $0xf8] sm:$0xff]
    %3252 = vmatpush.msra.mxu0 %v3250
    %3253 = vmatpush.msra.mxu0 %v3248
    %3254 = vmatpush.msra.mxu0 %v3246
    %3255 = vmatpush.msra.mxu0 %v3244
    %3256 = vmatpush.msra.mxu0 %v3242
    %3257 = vmatpush.msra.mxu0 %v3240
    %3258 = vmatpush.msra.mxu0 %v3238
    %3259 = vmatpush.msra.mxu0 %v3236
    %3260 = vmatpush.msra.mxu0 %v3234
    %3261 = vmatpush.msra.mxu0 %v3232
    %3262 = vmatpush.msra.mxu0 %v3230
    %3263 = vmatpush.msra.mxu0 %v3228
    %3264 = vmatpush.msra.mxu0 %v3226
    %3265 = vmatpush.msra.mxu0 %v3224
    %3266 = vmatpush.msra.mxu0 %v3222
    %3267 = vmatpush.msra.mxu0 %v3220
    %3268 = vmatmul.f32.gmra.mxu0 %v3218
    %v3269 = vpop.f32.mrf.mxu0
    %v3270 = vadd.f32 0.0, %v3269
    %3271 = vdwg.mxu0
    %3272 = vmatpush.msra.mxu0 %v3251
    %3273 = vmatpush.msra.mxu0 %v3249
    %3274 = vmatpush.msra.mxu0 %v3247
    %3275 = vmatpush.msra.mxu0 %v3245
    %3276 = vmatpush.msra.mxu0 %v3243
    %3277 = vmatpush.msra.mxu0 %v3241
    %3278 = vmatpush.msra.mxu0 %v3239
    %3279 = vmatpush.msra.mxu0 %v3237
    %3280 = vmatpush.msra.mxu0 %v3235
    %3281 = vmatpush.msra.mxu0 %v3233
    %3282 = vmatpush.msra.mxu0 %v3231
    %3283 = vmatpush.msra.mxu0 %v3229
    %3284 = vmatpush.msra.mxu0 %v3227
    %3285 = vmatpush.msra.mxu0 %v3225
    %3286 = vmatpush.msra.mxu0 %v3223
    %3287 = vmatpush.msra.mxu0 %v3221
    %3288 = vmatmul.f32.gmra.mxu0 %v3218
    %v3289 = vpop.f32.mrf.mxu0
    %v3290 = vadd.f32 0.0, %v3289
    %3291 = vdwg.mxu0
    %v3292 = vadd.f32 %v3131, %v3270
    %v3293 = vadd.f32 %v3132, %v3290
    %s3294 = scalar_lea.vmem [#allocation4], 768
    %v3295 = vld [vmem:[%s3294] sm:$0xff]
    %v3296 = vld [vmem:[%s3294 + $0x8] sm:$0xff]
    %v3297 = vld [vmem:[%s3294 + $0x10] sm:$0xff]
    %v3298 = vld [vmem:[%s3294 + $0x18] sm:$0xff]
    %v3299 = vld [vmem:[%s3294 + $0x20] sm:$0xff]
    %v3300 = vld [vmem:[%s3294 + $0x28] sm:$0xff]
    %v3301 = vld [vmem:[%s3294 + $0x30] sm:$0xff]
    %v3302 = vld [vmem:[%s3294 + $0x38] sm:$0xff]
    %v3303 = vld [vmem:[%s3294 + $0x40] sm:$0xff]
    %v3304 = vld [vmem:[%s3294 + $0x48] sm:$0xff]
    %v3305 = vld [vmem:[%s3294 + $0x50] sm:$0xff]
    %v3306 = vld [vmem:[%s3294 + $0x58] sm:$0xff]
    %v3307 = vld [vmem:[%s3294 + $0x60] sm:$0xff]
    %v3308 = vld [vmem:[%s3294 + $0x68] sm:$0xff]
    %v3309 = vld [vmem:[%s3294 + $0x70] sm:$0xff]
    %v3310 = vld [vmem:[%s3294 + $0x78] sm:$0xff]
    %s3311 = scalar_lea.vmem %s14, 6
    %v3312 = vld [vmem:[%s3311] sm:$0x1]
    %v3314 = vperm.slane %v3312, 0
    %3316 = vmatpush.msra.mxu0 %v3310
    %3317 = vmatpush.msra.mxu0 %v3309
    %3318 = vmatpush.msra.mxu0 %v3308
    %3319 = vmatpush.msra.mxu0 %v3307
    %3320 = vmatpush.msra.mxu0 %v3306
    %3321 = vmatpush.msra.mxu0 %v3305
    %3322 = vmatpush.msra.mxu0 %v3304
    %3323 = vmatpush.msra.mxu0 %v3303
    %3324 = vmatpush.msra.mxu0 %v3302
    %3325 = vmatpush.msra.mxu0 %v3301
    %3326 = vmatpush.msra.mxu0 %v3300
    %3327 = vmatpush.msra.mxu0 %v3299
    %3328 = vmatpush.msra.mxu0 %v3298
    %3329 = vmatpush.msra.mxu0 %v3297
    %3330 = vmatpush.msra.mxu0 %v3296
    %3331 = vmatpush.msra.mxu0 %v3295
    %3332 = vmatmul.f32.gmra.mxu0 %v2324
    %v3333 = vpop.f32.mrf.mxu0
    %v3334 = vadd.f32 %v3314, %v3333
    %3335 = vdwg.mxu0
    %v3336 = vmax.f32 %v3334, 0.0
    %s3337 = scalar_lea.vmem [#allocation6], 768
    %v3338 = vld [vmem:[%s3337] sm:$0xff]
    %v3339 = vld [vmem:[%s3337 + $0x8] sm:$0xff]
    %v3340 = vld [vmem:[%s3337 + $0x10] sm:$0xff]
    %v3341 = vld [vmem:[%s3337 + $0x18] sm:$0xff]
    %v3342 = vld [vmem:[%s3337 + $0x20] sm:$0xff]
    %v3343 = vld [vmem:[%s3337 + $0x28] sm:$0xff]
    %v3344 = vld [vmem:[%s3337 + $0x30] sm:$0xff]
    %v3345 = vld [vmem:[%s3337 + $0x38] sm:$0xff]
    %v3346 = vld [vmem:[%s3337 + $0x40] sm:$0xff]
    %v3347 = vld [vmem:[%s3337 + $0x48] sm:$0xff]
    %v3348 = vld [vmem:[%s3337 + $0x50] sm:$0xff]
    %v3349 = vld [vmem:[%s3337 + $0x58] sm:$0xff]
    %v3350 = vld [vmem:[%s3337 + $0x60] sm:$0xff]
    %v3351 = vld [vmem:[%s3337 + $0x68] sm:$0xff]
    %v3352 = vld [vmem:[%s3337 + $0x70] sm:$0xff]
    %v3353 = vld [vmem:[%s3337 + $0x78] sm:$0xff]
    %s3354 = scalar_lea.vmem %s16, 6
    %v3355 = vld [vmem:[%s3354] sm:$0x1]
    %v3357 = vperm.slane %v3355, 0
    %3359 = vmatpush.msra.mxu0 %v3353
    %3360 = vmatpush.msra.mxu0 %v3352
    %3361 = vmatpush.msra.mxu0 %v3351
    %3362 = vmatpush.msra.mxu0 %v3350
    %3363 = vmatpush.msra.mxu0 %v3349
    %3364 = vmatpush.msra.mxu0 %v3348
    %3365 = vmatpush.msra.mxu0 %v3347
    %3366 = vmatpush.msra.mxu0 %v3346
    %3367 = vmatpush.msra.mxu0 %v3345
    %3368 = vmatpush.msra.mxu0 %v3344
    %3369 = vmatpush.msra.mxu0 %v3343
    %3370 = vmatpush.msra.mxu0 %v3342
    %3371 = vmatpush.msra.mxu0 %v3341
    %3372 = vmatpush.msra.mxu0 %v3340
    %3373 = vmatpush.msra.mxu0 %v3339
    %3374 = vmatpush.msra.mxu0 %v3338
    %3375 = vmatmul.f32.gmra.mxu0 %v3336
    %v3376 = vpop.f32.mrf.mxu0
    %v3377 = vadd.f32 %v3357, %v3376
    %3378 = vdwg.mxu0
    %v3379 = vmax.f32 %v3377, 0.0
    %s3380 = scalar_lea.vmem [#allocation7], 1536
    %v3381 = vld [vmem:[%s3380] sm:$0xff]
    %v3382 = vld [vmem:[%s3380 + $0x8] sm:$0xff]
    %v3383 = vld [vmem:[%s3380 + $0x10] sm:$0xff]
    %v3384 = vld [vmem:[%s3380 + $0x18] sm:$0xff]
    %v3385 = vld [vmem:[%s3380 + $0x20] sm:$0xff]
    %v3386 = vld [vmem:[%s3380 + $0x28] sm:$0xff]
    %v3387 = vld [vmem:[%s3380 + $0x30] sm:$0xff]
    %v3388 = vld [vmem:[%s3380 + $0x38] sm:$0xff]
    %v3389 = vld [vmem:[%s3380 + $0x40] sm:$0xff]
    %v3390 = vld [vmem:[%s3380 + $0x48] sm:$0xff]
    %v3391 = vld [vmem:[%s3380 + $0x50] sm:$0xff]
    %v3392 = vld [vmem:[%s3380 + $0x58] sm:$0xff]
    %v3393 = vld [vmem:[%s3380 + $0x60] sm:$0xff]
    %v3394 = vld [vmem:[%s3380 + $0x68] sm:$0xff]
    %v3395 = vld [vmem:[%s3380 + $0x70] sm:$0xff]
    %v3396 = vld [vmem:[%s3380 + $0x78] sm:$0xff]
    %v3397 = vld [vmem:[%s3380 + $0x80] sm:$0xff]
    %v3398 = vld [vmem:[%s3380 + $0x88] sm:$0xff]
    %v3399 = vld [vmem:[%s3380 + $0x90] sm:$0xff]
    %v3400 = vld [vmem:[%s3380 + $0x98] sm:$0xff]
    %v3401 = vld [vmem:[%s3380 + $0xa0] sm:$0xff]
    %v3402 = vld [vmem:[%s3380 + $0xa8] sm:$0xff]
    %v3403 = vld [vmem:[%s3380 + $0xb0] sm:$0xff]
    %v3404 = vld [vmem:[%s3380 + $0xb8] sm:$0xff]
    %v3405 = vld [vmem:[%s3380 + $0xc0] sm:$0xff]
    %v3406 = vld [vmem:[%s3380 + $0xc8] sm:$0xff]
    %v3407 = vld [vmem:[%s3380 + $0xd0] sm:$0xff]
    %v3408 = vld [vmem:[%s3380 + $0xd8] sm:$0xff]
    %v3409 = vld [vmem:[%s3380 + $0xe0] sm:$0xff]
    %v3410 = vld [vmem:[%s3380 + $0xe8] sm:$0xff]
    %v3411 = vld [vmem:[%s3380 + $0xf0] sm:$0xff]
    %v3412 = vld [vmem:[%s3380 + $0xf8] sm:$0xff]
    %3413 = vmatpush.msra.mxu0 %v3411
    %3414 = vmatpush.msra.mxu0 %v3409
    %3415 = vmatpush.msra.mxu0 %v3407
    %3416 = vmatpush.msra.mxu0 %v3405
    %3417 = vmatpush.msra.mxu0 %v3403
    %3418 = vmatpush.msra.mxu0 %v3401
    %3419 = vmatpush.msra.mxu0 %v3399
    %3420 = vmatpush.msra.mxu0 %v3397
    %3421 = vmatpush.msra.mxu0 %v3395
    %3422 = vmatpush.msra.mxu0 %v3393
    %3423 = vmatpush.msra.mxu0 %v3391
    %3424 = vmatpush.msra.mxu0 %v3389
    %3425 = vmatpush.msra.mxu0 %v3387
    %3426 = vmatpush.msra.mxu0 %v3385
    %3427 = vmatpush.msra.mxu0 %v3383
    %3428 = vmatpush.msra.mxu0 %v3381
    %3429 = vmatmul.f32.gmra.mxu0 %v3379
    %v3430 = vpop.f32.mrf.mxu0
    %v3431 = vadd.f32 0.0, %v3430
    %3432 = vdwg.mxu0
    %3433 = vmatpush.msra.mxu0 %v3412
    %3434 = vmatpush.msra.mxu0 %v3410
    %3435 = vmatpush.msra.mxu0 %v3408
    %3436 = vmatpush.msra.mxu0 %v3406
    %3437 = vmatpush.msra.mxu0 %v3404
    %3438 = vmatpush.msra.mxu0 %v3402
    %3439 = vmatpush.msra.mxu0 %v3400
    %3440 = vmatpush.msra.mxu0 %v3398
    %3441 = vmatpush.msra.mxu0 %v3396
    %3442 = vmatpush.msra.mxu0 %v3394
    %3443 = vmatpush.msra.mxu0 %v3392
    %3444 = vmatpush.msra.mxu0 %v3390
    %3445 = vmatpush.msra.mxu0 %v3388
    %3446 = vmatpush.msra.mxu0 %v3386
    %3447 = vmatpush.msra.mxu0 %v3384
    %3448 = vmatpush.msra.mxu0 %v3382
    %3449 = vmatmul.f32.gmra.mxu0 %v3379
    %v3450 = vpop.f32.mrf.mxu0
    %v3451 = vadd.f32 0.0, %v3450
    %3452 = vdwg.mxu0
    %v3453 = vadd.f32 %v3292, %v3431
    %v3454 = vadd.f32 %v3293, %v3451
    %s3455 = scalar_lea.vmem [#allocation4], 896
    %v3456 = vld [vmem:[%s3455] sm:$0xff]
    %v3457 = vld [vmem:[%s3455 + $0x8] sm:$0xff]
    %v3458 = vld [vmem:[%s3455 + $0x10] sm:$0xff]
    %v3459 = vld [vmem:[%s3455 + $0x18] sm:$0xff]
    %v3460 = vld [vmem:[%s3455 + $0x20] sm:$0xff]
    %v3461 = vld [vmem:[%s3455 + $0x28] sm:$0xff]
    %v3462 = vld [vmem:[%s3455 + $0x30] sm:$0xff]
    %v3463 = vld [vmem:[%s3455 + $0x38] sm:$0xff]
    %v3464 = vld [vmem:[%s3455 + $0x40] sm:$0xff]
    %v3465 = vld [vmem:[%s3455 + $0x48] sm:$0xff]
    %v3466 = vld [vmem:[%s3455 + $0x50] sm:$0xff]
    %v3467 = vld [vmem:[%s3455 + $0x58] sm:$0xff]
    %v3468 = vld [vmem:[%s3455 + $0x60] sm:$0xff]
    %v3469 = vld [vmem:[%s3455 + $0x68] sm:$0xff]
    %v3470 = vld [vmem:[%s3455 + $0x70] sm:$0xff]
    %v3471 = vld [vmem:[%s3455 + $0x78] sm:$0xff]
    %s3472 = scalar_lea.vmem %s14, 7
    %v3473 = vld [vmem:[%s3472] sm:$0x1]
    %v3475 = vperm.slane %v3473, 0
    %3477 = vmatpush.msra.mxu0 %v3471
    %3478 = vmatpush.msra.mxu0 %v3470
    %3479 = vmatpush.msra.mxu0 %v3469
    %3480 = vmatpush.msra.mxu0 %v3468
    %3481 = vmatpush.msra.mxu0 %v3467
    %3482 = vmatpush.msra.mxu0 %v3466
    %3483 = vmatpush.msra.mxu0 %v3465
    %3484 = vmatpush.msra.mxu0 %v3464
    %3485 = vmatpush.msra.mxu0 %v3463
    %3486 = vmatpush.msra.mxu0 %v3462
    %3487 = vmatpush.msra.mxu0 %v3461
    %3488 = vmatpush.msra.mxu0 %v3460
    %3489 = vmatpush.msra.mxu0 %v3459
    %3490 = vmatpush.msra.mxu0 %v3458
    %3491 = vmatpush.msra.mxu0 %v3457
    %3492 = vmatpush.msra.mxu0 %v3456
    %3493 = vmatmul.f32.gmra.mxu0 %v2324
    %v3494 = vpop.f32.mrf.mxu0
    %v3495 = vadd.f32 %v3475, %v3494
    %3496 = vdwg.mxu0
    %v3497 = vmax.f32 %v3495, 0.0
    %s3498 = scalar_lea.vmem [#allocation6], 896
    %v3499 = vld [vmem:[%s3498] sm:$0xff]
    %v3500 = vld [vmem:[%s3498 + $0x8] sm:$0xff]
    %v3501 = vld [vmem:[%s3498 + $0x10] sm:$0xff]
    %v3502 = vld [vmem:[%s3498 + $0x18] sm:$0xff]
    %v3503 = vld [vmem:[%s3498 + $0x20] sm:$0xff]
    %v3504 = vld [vmem:[%s3498 + $0x28] sm:$0xff]
    %v3505 = vld [vmem:[%s3498 + $0x30] sm:$0xff]
    %v3506 = vld [vmem:[%s3498 + $0x38] sm:$0xff]
    %v3507 = vld [vmem:[%s3498 + $0x40] sm:$0xff]
    %v3508 = vld [vmem:[%s3498 + $0x48] sm:$0xff]
    %v3509 = vld [vmem:[%s3498 + $0x50] sm:$0xff]
    %v3510 = vld [vmem:[%s3498 + $0x58] sm:$0xff]
    %v3511 = vld [vmem:[%s3498 + $0x60] sm:$0xff]
    %v3512 = vld [vmem:[%s3498 + $0x68] sm:$0xff]
    %v3513 = vld [vmem:[%s3498 + $0x70] sm:$0xff]
    %v3514 = vld [vmem:[%s3498 + $0x78] sm:$0xff]
    %s3515 = scalar_lea.vmem %s16, 7
    %v3516 = vld [vmem:[%s3515] sm:$0x1]
    %v3518 = vperm.slane %v3516, 0
    %3520 = vmatpush.msra.mxu0 %v3514
    %3521 = vmatpush.msra.mxu0 %v3513
    %3522 = vmatpush.msra.mxu0 %v3512
    %3523 = vmatpush.msra.mxu0 %v3511
    %3524 = vmatpush.msra.mxu0 %v3510
    %3525 = vmatpush.msra.mxu0 %v3509
    %3526 = vmatpush.msra.mxu0 %v3508
    %3527 = vmatpush.msra.mxu0 %v3507
    %3528 = vmatpush.msra.mxu0 %v3506
    %3529 = vmatpush.msra.mxu0 %v3505
    %3530 = vmatpush.msra.mxu0 %v3504
    %3531 = vmatpush.msra.mxu0 %v3503
    %3532 = vmatpush.msra.mxu0 %v3502
    %3533 = vmatpush.msra.mxu0 %v3501
    %3534 = vmatpush.msra.mxu0 %v3500
    %3535 = vmatpush.msra.mxu0 %v3499
    %3536 = vmatmul.f32.gmra.mxu0 %v3497
    %v3537 = vpop.f32.mrf.mxu0
    %v3538 = vadd.f32 %v3518, %v3537
    %3539 = vdwg.mxu0
    %v3540 = vmax.f32 %v3538, 0.0
    %s3541 = scalar_lea.vmem [#allocation7], 1792
    %v3542 = vld [vmem:[%s3541] sm:$0xff]
    %v3543 = vld [vmem:[%s3541 + $0x8] sm:$0xff]
    %v3544 = vld [vmem:[%s3541 + $0x10] sm:$0xff]
    %v3545 = vld [vmem:[%s3541 + $0x18] sm:$0xff]
    %v3546 = vld [vmem:[%s3541 + $0x20] sm:$0xff]
    %v3547 = vld [vmem:[%s3541 + $0x28] sm:$0xff]
    %v3548 = vld [vmem:[%s3541 + $0x30] sm:$0xff]
    %v3549 = vld [vmem:[%s3541 + $0x38] sm:$0xff]
    %v3550 = vld [vmem:[%s3541 + $0x40] sm:$0xff]
    %v3551 = vld [vmem:[%s3541 + $0x48] sm:$0xff]
    %v3552 = vld [vmem:[%s3541 + $0x50] sm:$0xff]
    %v3553 = vld [vmem:[%s3541 + $0x58] sm:$0xff]
    %v3554 = vld [vmem:[%s3541 + $0x60] sm:$0xff]
    %v3555 = vld [vmem:[%s3541 + $0x68] sm:$0xff]
    %v3556 = vld [vmem:[%s3541 + $0x70] sm:$0xff]
    %v3557 = vld [vmem:[%s3541 + $0x78] sm:$0xff]
    %v3558 = vld [vmem:[%s3541 + $0x80] sm:$0xff]
    %v3559 = vld [vmem:[%s3541 + $0x88] sm:$0xff]
    %v3560 = vld [vmem:[%s3541 + $0x90] sm:$0xff]
    %v3561 = vld [vmem:[%s3541 + $0x98] sm:$0xff]
    %v3562 = vld [vmem:[%s3541 + $0xa0] sm:$0xff]
    %v3563 = vld [vmem:[%s3541 + $0xa8] sm:$0xff]
    %v3564 = vld [vmem:[%s3541 + $0xb0] sm:$0xff]
    %v3565 = vld [vmem:[%s3541 + $0xb8] sm:$0xff]
    %v3566 = vld [vmem:[%s3541 + $0xc0] sm:$0xff]
    %v3567 = vld [vmem:[%s3541 + $0xc8] sm:$0xff]
    %v3568 = vld [vmem:[%s3541 + $0xd0] sm:$0xff]
    %v3569 = vld [vmem:[%s3541 + $0xd8] sm:$0xff]
    %v3570 = vld [vmem:[%s3541 + $0xe0] sm:$0xff]
    %v3571 = vld [vmem:[%s3541 + $0xe8] sm:$0xff]
    %v3572 = vld [vmem:[%s3541 + $0xf0] sm:$0xff]
    %v3573 = vld [vmem:[%s3541 + $0xf8] sm:$0xff]
    %3574 = vmatpush.msra.mxu0 %v3572
    %3575 = vmatpush.msra.mxu0 %v3570
    %3576 = vmatpush.msra.mxu0 %v3568
    %3577 = vmatpush.msra.mxu0 %v3566
    %3578 = vmatpush.msra.mxu0 %v3564
    %3579 = vmatpush.msra.mxu0 %v3562
    %3580 = vmatpush.msra.mxu0 %v3560
    %3581 = vmatpush.msra.mxu0 %v3558
    %3582 = vmatpush.msra.mxu0 %v3556
    %3583 = vmatpush.msra.mxu0 %v3554
    %3584 = vmatpush.msra.mxu0 %v3552
    %3585 = vmatpush.msra.mxu0 %v3550
    %3586 = vmatpush.msra.mxu0 %v3548
    %3587 = vmatpush.msra.mxu0 %v3546
    %3588 = vmatpush.msra.mxu0 %v3544
    %3589 = vmatpush.msra.mxu0 %v3542
    %3590 = vmatmul.f32.gmra.mxu0 %v3540
    %v3591 = vpop.f32.mrf.mxu0
    %v3592 = vadd.f32 0.0, %v3591
    %3593 = vdwg.mxu0
    %3594 = vmatpush.msra.mxu0 %v3573
    %3595 = vmatpush.msra.mxu0 %v3571
    %3596 = vmatpush.msra.mxu0 %v3569
    %3597 = vmatpush.msra.mxu0 %v3567
    %3598 = vmatpush.msra.mxu0 %v3565
    %3599 = vmatpush.msra.mxu0 %v3563
    %3600 = vmatpush.msra.mxu0 %v3561
    %3601 = vmatpush.msra.mxu0 %v3559
    %3602 = vmatpush.msra.mxu0 %v3557
    %3603 = vmatpush.msra.mxu0 %v3555
    %3604 = vmatpush.msra.mxu0 %v3553
    %3605 = vmatpush.msra.mxu0 %v3551
    %3606 = vmatpush.msra.mxu0 %v3549
    %3607 = vmatpush.msra.mxu0 %v3547
    %3608 = vmatpush.msra.mxu0 %v3545
    %3609 = vmatpush.msra.mxu0 %v3543
    %3610 = vmatmul.f32.gmra.mxu0 %v3540
    %v3611 = vpop.f32.mrf.mxu0
    %v3612 = vadd.f32 0.0, %v3611
    %3613 = vdwg.mxu0
    %v3614 = vadd.f32 %v3453, %v3592
    %v3615 = vadd.f32 %v3454, %v3612
    %v3618 = vrot.slane %v3615, 6
    %v3619 = vsel %vm214, %v3614, %v3618
    %3621 = vst [vmem:[%s19] sm:$0xf] %v3619
    // Predicated region
    $region94: #{forward.1} parent=1 // pred_check
      _
    $region95: #{forward.1} parent=1 // pred_check_branch
      %3623 = sbr.rel (0) target = $region97
    $region96: #{forward.1} parent=1 // pred_region
      _
    $region97: #{forward.1} parent=1 // pred_fallthru
      _
    // Predicated region
    $region98: #{forward.1} parent=1 // pred_check
      _
    $region99: #{forward.1} parent=1 // pred_check_branch
      %3625 = sbr.rel (0) target = $region101
    $region100: #{forward.1} parent=1 // pred_region
      _
    $region101: #{forward.1} parent=1 // pred_fallthru
      _
    %3626 = vsyncpa [#allocation3], 1
    %3627 = vsyncpa [#allocation5], 1
    %3628 = vsyncpa [#allocation8], 1

</llo_original>
